<compile_context>
chip_gen: v6e
topology: v6e:2x2x1
jax: 0.10.0
libtpu: 0.0.40
codegen_flags: <defaults>
</compile_context>

<pallas_src>
import functools

import jax
import jax.numpy as jnp
from jax import lax
from jax.experimental import pallas as pl
from jax.experimental.pallas import tpu as pltpu

_VMEM_LIMIT = 48 * 1024 * 1024  # <= v7x's 64 MiB physical VMEM; safe on v5e/v6e too.


# ---------------------------------------------------------------------------
# Pallas kernels
# ---------------------------------------------------------------------------
def _conv_mm_kernel(a_ref, w_ref, b_ref, o_ref):
    """One image: o = relu(a @ w + b). a:(P,K) bf16, w:(K,C) bf16, b:(1,C) f32."""
    s = jnp.dot(a_ref[...], w_ref[...], preferred_element_type=jnp.float32)
    o_ref[...] = jnp.maximum(s + b_ref[...], 0.0).astype(o_ref.dtype)


def _conv_mm_pool_kernel(a_ref, w_ref, b_ref, o_ref):
    """One image: fused conv-matmul + bias + ReLU + 2x2 max-pool.

    a_ref: (4, P, K) bf16 -- the 4 slabs are the four corners of each 2x2
    pooling window (same spatial order inside each slab), so max-pooling is an
    elementwise max across the leading axis.  Using max(conv) + bias then ReLU
    equals pool(relu(conv + bias)) since ReLU is monotone and bias per-channel.
    """
    w = w_ref[...]
    s = jnp.dot(a_ref[0], w, preferred_element_type=jnp.float32)
    s = jnp.maximum(s, jnp.dot(a_ref[1], w, preferred_element_type=jnp.float32))
    s = jnp.maximum(s, jnp.dot(a_ref[2], w, preferred_element_type=jnp.float32))
    s = jnp.maximum(s, jnp.dot(a_ref[3], w, preferred_element_type=jnp.float32))
    o_ref[...] = jnp.maximum(s + b_ref[...], 0.0).astype(o_ref.dtype)


def _fc_acc_kernel(a_ref, w_ref, b_ref, o_ref, *, nsteps, relu):
    """K-tiled matmul accumulating directly into the f32 output block (no scratch)."""
    k = pl.program_id(0)
    prod = jnp.dot(a_ref[...], w_ref[...], preferred_element_type=jnp.float32)

    if nsteps == 1:
        out = prod + b_ref[...]
        o_ref[...] = jnp.maximum(out, 0.0) if relu else out
    else:
        @pl.when(k == 0)
        def _():
            o_ref[...] = jnp.zeros_like(o_ref)

        o_ref[...] += prod

        @pl.when(k == nsteps - 1)
        def _():
            out = o_ref[...] + b_ref[...]
            if relu:
                out = jnp.maximum(out, 0.0)
            o_ref[...] = out


# ---------------------------------------------------------------------------
# Pallas wrappers
# ---------------------------------------------------------------------------
def conv1_relu(patches, w, b):
    """patches:(N,P,K) bf16, w:(K,C) bf16, b:(1,C) f32 -> (N,P,C) bf16."""
    N, P, K = patches.shape
    C = w.shape[1]
    return pl.pallas_call(
        _conv_mm_kernel,
        out_shape=jax.ShapeDtypeStruct((N, P, C), jnp.bfloat16),
        grid_spec=pltpu.PrefetchScalarGridSpec(
            num_scalar_prefetch=0,
            grid=(N,),
            in_specs=[
                pl.BlockSpec((None, P, K), lambda n: (n, 0, 0)),
                pl.BlockSpec((K, C), lambda n: (0, 0)),
                pl.BlockSpec((1, C), lambda n: (0, 0)),
            ],
            out_specs=pl.BlockSpec((None, P, C), lambda n: (n, 0, 0)),
        ),
        compiler_params=pltpu.CompilerParams(
            dimension_semantics=("parallel",),
            vmem_limit_bytes=_VMEM_LIMIT,
        ),
    )(patches, w, b)


def conv2_relu_pool(patches, w, b):
    """patches:(N,4,P,K) bf16 (pool-corner grouped) -> pooled (N,P,C) bf16."""
    N, four, P, K = patches.shape
    assert four == 4
    C = w.shape[1]
    return pl.pallas_call(
        _conv_mm_pool_kernel,
        out_shape=jax.ShapeDtypeStruct((N, P, C), jnp.bfloat16),
        grid_spec=pltpu.PrefetchScalarGridSpec(
            num_scalar_prefetch=0,
            grid=(N,),
            in_specs=[
                pl.BlockSpec((None, 4, P, K), lambda n: (n, 0, 0, 0)),
                pl.BlockSpec((K, C), lambda n: (0, 0)),
                pl.BlockSpec((1, C), lambda n: (0, 0)),
            ],
            out_specs=pl.BlockSpec((None, P, C), lambda n: (n, 0, 0)),
        ),
        compiler_params=pltpu.CompilerParams(
            dimension_semantics=("parallel",),
            vmem_limit_bytes=_VMEM_LIMIT,
        ),
    )(patches, w, b)


def fc_layer(a, w, b, *, relu, tk=None):
    """act(a @ w + b); K-streamed, accumulating into the f32 output block."""
    M, K = a.shape
    Kb, Nout = w.shape
    assert K == Kb
    if tk is None or tk >= K:
        tk = K
    assert K % tk == 0
    kt = K // tk
    kernel = functools.partial(_fc_acc_kernel, nsteps=kt, relu=relu)
    return pl.pallas_call(
        kernel,
        out_shape=jax.ShapeDtypeStruct((M, Nout), jnp.float32),
        grid_spec=pltpu.PrefetchScalarGridSpec(
            num_scalar_prefetch=0,
            grid=(kt,),
            in_specs=[
                pl.BlockSpec((M, tk), lambda k: (0, k)),
                pl.BlockSpec((tk, Nout), lambda k: (k, 0)),
                pl.BlockSpec((1, Nout), lambda k: (0, 0)),
            ],
            out_specs=pl.BlockSpec((M, Nout), lambda k: (0, 0)),
        ),
        compiler_params=pltpu.CompilerParams(
            dimension_semantics=("arbitrary",),
            vmem_limit_bytes=_VMEM_LIMIT,
        ),
    )(a, w, b)


# ---------------------------------------------------------------------------
# Glue: im2col patch extraction (pads / slices / reshapes only)
# ---------------------------------------------------------------------------
def _im2col_3x3_same(x_nhwc):
    """(N,H,W,C) -> (N,H,W,9*C); feature order is (kh, kw, cin)."""
    N, H, W, C = x_nhwc.shape
    xp = jnp.pad(x_nhwc, ((0, 0), (1, 1), (1, 1), (0, 0)))
    cols = [xp[:, dh:dh + H, dw:dw + W, :] for dh in range(3) for dw in range(3)]
    return jnp.concatenate(cols, axis=-1)


def _conv2_patches_pool_grouped(h1_nhwc):
    """(N,28,28,32) -> (N, 4, 196, 288): 3x3 patches grouped by 2x2 pool corner."""
    N, H, W, C = h1_nhwc.shape
    K = 9 * C
    p = _im2col_3x3_same(h1_nhwc)                      # (N, 28, 28, 288)
    p = p.reshape(N, H // 2, 2, W // 2, 2, K)          # (N, ho, ph, wo, pw, K)
    p = p.transpose(0, 2, 4, 1, 3, 5)                  # (N, ph, pw, ho, wo, K)
    return p.reshape(N, 4, (H // 2) * (W // 2), K)


# ---------------------------------------------------------------------------
# Parameters & forward pass
# ---------------------------------------------------------------------------
def init_params(key):
    ks = jax.random.split(key, 8)
    scale = 0.05
    f32, bf16 = jnp.float32, jnp.bfloat16

    # Conv weights stored as (kh*kw*Cin, Cout) with rows in (kh, kw, cin) order
    # (== torch_weight.permute(2, 3, 1, 0).reshape(-1, Cout)).
    w1 = (jax.random.normal(ks[0], (9 * 1, 32), f32) * scale).astype(bf16)
    b1 = jax.random.normal(ks[1], (1, 32), f32) * scale
    w2 = (jax.random.normal(ks[2], (9 * 32, 64), f32) * scale).astype(bf16)
    b2 = jax.random.normal(ks[3], (1, 64), f32) * scale

    # fc1: draw the weight in PyTorch NCHW-flatten row order (c*196 + h*14 + w),
    # then permute rows ONCE to NHWC flatten order ((h*14 + w)*64 + c) so the
    # forward pass needs no activation transpose before fc1.
    wf1_nchw = jax.random.normal(ks[4], (64 * 14 * 14, 128), f32) * scale
    hw = jnp.arange(14 * 14)
    c = jnp.arange(64)
    nhwc_to_nchw = (c[None, :] * (14 * 14) + hw[:, None]).reshape(-1)
    wf1 = wf1_nchw[nhwc_to_nchw].astype(bf16)
    bf1 = jax.random.normal(ks[5], (1, 128), f32) * scale

    wf2 = jax.random.normal(ks[6], (128, 10), f32) * scale  # fc2 kept f32 (tiny)
    bf2 = jax.random.normal(ks[7], (1, 10), f32) * scale

    return {
        "w1": w1, "b1": b1, "w2": w2, "b2": b2,
        "wf1": wf1, "bf1": bf1, "wf2": wf2, "bf2": bf2,
        "_wf1_nchw_ref": wf1_nchw,   # only used by the pure-JAX reference check
    }


@jax.jit
def simple_cnn_forward(x_nchw, params):
    N = x_nchw.shape[0]
    x = jnp.transpose(x_nchw, (0, 2, 3, 1)).astype(jnp.bfloat16)   # NHWC bf16

    # conv1 (1->32, 3x3, pad 1) + ReLU
    p1 = _im2col_3x3_same(x).reshape(N, 28 * 28, 9)                # (N, 784, 9)
    h1 = conv1_relu(p1, params["w1"], params["b1"])                # (N, 784, 32) bf16
    h1 = h1.reshape(N, 28, 28, 32)

    # conv2 (32->64, 3x3, pad 1) + ReLU + 2x2 max-pool, fused in one kernel.
    # TODO(synk): build the 9 shifted views inside the kernel from a raw
    # (30,30,32) halo block instead of materializing the 9x patch matrix in HBM.
    p2 = _conv2_patches_pool_grouped(h1)                           # (N, 4, 196, 288)
    hp = conv2_relu_pool(p2, params["w2"], params["b2"])           # (N, 196, 64) bf16

    # Flatten in NHWC (h, w, c) order; wf1 rows were permuted at init to match,
    # so no activation transpose is needed here.
    flat = hp.reshape(N, 14 * 14 * 64)

    f1 = fc_layer(flat, params["wf1"], params["bf1"], relu=True, tk=1792)  # (N,128) f32
    logits = fc_layer(f1, params["wf2"], params["bf2"], relu=False)        # (N, 10) f32
    return logits


# ---------------------------------------------------------------------------
# Pure-JAX reference (mirrors the kernel's bf16 storage; PyTorch flatten order)
# ---------------------------------------------------------------------------
def reference_forward(x_nchw, params):
    f32 = jnp.float32
    hi = lax.Precision.HIGHEST
    N = x_nchw.shape[0]
    x = jnp.transpose(x_nchw, (0, 2, 3, 1)).astype(jnp.bfloat16).astype(f32)

    w1 = params["w1"].astype(f32).reshape(3, 3, 1, 32)
    h1 = lax.conv_general_dilated(x, w1, (1, 1), "SAME",
                                  dimension_numbers=("NHWC", "HWIO", "NHWC"),
                                  precision=hi)
    h1 = jnp.maximum(h1 + params["b1"].reshape(1, 1, 1, 32), 0.0)
    h1 = h1.astype(jnp.bfloat16).astype(f32)

    w2 = params["w2"].astype(f32).reshape(3, 3, 32, 64)
    h2 = lax.conv_general_dilated(h1, w2, (1, 1), "SAME",
                                  dimension_numbers=("NHWC", "HWIO", "NHWC"),
                                  precision=hi)
    h2 = jnp.maximum(h2 + params["b2"].reshape(1, 1, 1, 64), 0.0)

    hp = jnp.max(h2.reshape(N, 14, 2, 14, 2, 64), axis=(2, 4))
    hp = hp.astype(jnp.bfloat16).astype(f32)

    # PyTorch-style flatten (NCHW order) with the un-permuted fc1 weight:
    flat = jnp.transpose(hp, (0, 3, 1, 2)).reshape(N, 64 * 14 * 14)
    wf1 = params["_wf1_nchw_ref"].astype(jnp.bfloat16).astype(f32)
    f1 = jnp.maximum(jnp.dot(flat, wf1, precision=hi) + params["bf1"], 0.0)
    return jnp.dot(f1, params["wf2"], precision=hi) + params["bf2"]


if __name__ == "__main__":
    key = jax.random.PRNGKey(0)
    kx, kp = jax.random.split(key)

    # MNIST-shaped input: fc1 hard-codes 64*14*14, so input must be (N, 1, 28, 28).
    x = jax.random.normal(kx, (2, 1, 28, 28), jnp.float32)
    params = init_params(kp)

    out = jax.block_until_ready(simple_cnn_forward(x, params))
    assert out.shape == (2, 10), out.shape
    assert bool(jnp.all(jnp.isfinite(out))), "non-finite output"

    ref = jax.block_until_ready(jax.jit(reference_forward)(x, params))
    max_diff = float(jnp.max(jnp.abs(out - ref)))
    assert max_diff < 1e-2, f"mismatch vs reference: max|diff|={max_diff}"

    print("KERNEL_OK")
</pallas_src>

<mosaic_0001>
module attributes {stable_mosaic.version = 11 : i64} {
  func.func @_conv_mm_kernel(%arg0: i32, %arg1: memref<1x784x9xbf16, #tpu.memory_space<vmem>>, %arg2: memref<9x32xbf16, #tpu.memory_space<vmem>>, %arg3: memref<1x32xf32, #tpu.memory_space<vmem>>, %arg4: memref<1x784x32xbf16, #tpu.memory_space<vmem>>) attributes {dimension_semantics = [#tpu.dimension_semantics<parallel>], iteration_bounds = array<i64: 2>, scalar_prefetch = 0 : i64, scratch_operands = 0 : i64, tpu.core_type = #tpu.core_type<tc>, window_params = [{transform_indices = @transform_0, window_bounds = array<i64: 1, 784, 9>}, {pipeline_mode = #tpu.pipeline_mode<synchronous>, transform_indices = @transform_1, window_bounds = array<i64: 9, 32>}, {pipeline_mode = #tpu.pipeline_mode<synchronous>, transform_indices = @transform_2, window_bounds = array<i64: 1, 32>}, {transform_indices = @transform_3, window_bounds = array<i64: 1, 784, 32>}]} {
    %c0 = arith.constant 0 : index
    %c0_0 = arith.constant 0 : index
    %c0_1 = arith.constant 0 : index
    %0 = vector.load %arg1[%c0, %c0_0, %c0_1] : memref<1x784x9xbf16, #tpu.memory_space<vmem>>, vector<1x784x9xbf16>
    %1 = vector.shape_cast %0 : vector<1x784x9xbf16> to vector<784x9xbf16>
    %c0_2 = arith.constant 0 : index
    %c0_3 = arith.constant 0 : index
    %2 = vector.load %arg2[%c0_2, %c0_3] : memref<9x32xbf16, #tpu.memory_space<vmem>>, vector<9x32xbf16>
    %cst = arith.constant dense<0.000000e+00> : vector<784x32xf32>
    %3 = tpu.matmul %1, %2, %cst {dimension_numbers = #tpu.dot_dimension_numbers<[1], [0], [0], [1], [0, 0, 1, 1], [], []>} : vector<784x9xbf16>, vector<9x32xbf16>, vector<784x32xf32> -> vector<784x32xf32>
    %c0_4 = arith.constant 0 : index
    %c0_5 = arith.constant 0 : index
    %4 = vector.load %arg3[%c0_4, %c0_5] : memref<1x32xf32, #tpu.memory_space<vmem>>, vector<1x32xf32>
    %5 = vector.broadcast %4 : vector<1x32xf32> to vector<784x32xf32>
    %6 = arith.addf %3, %5 : vector<784x32xf32>
    %cst_6 = arith.constant 0.000000e+00 : f32
    %7 = vector.broadcast %cst_6 : f32 to vector<784x32xf32>
    %8 = arith.maximumf %6, %7 : vector<784x32xf32>
    %9 = arith.truncf %8 : vector<784x32xf32> to vector<784x32xbf16>
    %c0_7 = arith.constant 0 : index
    %c0_8 = arith.constant 0 : index
    %c0_9 = arith.constant 0 : index
    %10 = vector.load %arg4[%c0_7, %c0_8, %c0_9] : memref<1x784x32xbf16, #tpu.memory_space<vmem>>, vector<1x784x32xbf16>
    %11 = vector.shape_cast %10 : vector<1x784x32xbf16> to vector<784x32xbf16>
    %12 = vector.shape_cast %9 : vector<784x32xbf16> to vector<1x784x32xbf16>
    tpu.vector_store %arg4[%c0_7, %c0_8, %c0_9], %12 {strides = array<i32>} : memref<1x784x32xbf16, #tpu.memory_space<vmem>>, vector<1x784x32xbf16>,
    return
  }
  func.func @transform_0(%arg0: i32) -> (i32, i32, i32) {
    %c0_i32 = arith.constant 0 : i32
    %c0_i32_0 = arith.constant 0 : i32
    %c0_i32_1 = arith.constant 0 : i32
    return %arg0, %c0_i32, %c0_i32_0 : i32, i32, i32
  }
  func.func @transform_1(%arg0: i32) -> (i32, i32) {
    %c0_i32 = arith.constant 0 : i32
    %c0_i32_0 = arith.constant 0 : i32
    %c0_i32_1 = arith.constant 0 : i32
    return %c0_i32, %c0_i32_0 : i32, i32
  }
  func.func @transform_2(%arg0: i32) -> (i32, i32) {
    %c0_i32 = arith.constant 0 : i32
    %c0_i32_0 = arith.constant 0 : i32
    %c0_i32_1 = arith.constant 0 : i32
    return %c0_i32, %c0_i32_0 : i32, i32
  }
  func.func @transform_3(%arg0: i32) -> (i32, i32, i32) {
    %c0_i32 = arith.constant 0 : i32
    %c0_i32_0 = arith.constant 0 : i32
    %c0_i32_1 = arith.constant 0 : i32
    return %arg0, %c0_i32, %c0_i32_0 : i32, i32, i32
  }
}

module attributes {stable_mosaic.version = 11 : i64} {
  func.func @_conv_mm_pool_kernel(%arg0: i32, %arg1: memref<1x4x196x288xbf16, #tpu.memory_space<vmem>>, %arg2: memref<288x64xbf16, #tpu.memory_space<vmem>>, %arg3: memref<1x64xf32, #tpu.memory_space<vmem>>, %arg4: memref<1x196x64xbf16, #tpu.memory_space<vmem>>) attributes {dimension_semantics = [#tpu.dimension_semantics<parallel>], iteration_bounds = array<i64: 2>, scalar_prefetch = 0 : i64, scratch_operands = 0 : i64, tpu.core_type = #tpu.core_type<tc>, window_params = [{transform_indices = @transform_0, window_bounds = array<i64: 1, 4, 196, 288>}, {pipeline_mode = #tpu.pipeline_mode<synchronous>, transform_indices = @transform_1, window_bounds = array<i64: 288, 64>}, {pipeline_mode = #tpu.pipeline_mode<synchronous>, transform_indices = @transform_2, window_bounds = array<i64: 1, 64>}, {transform_indices = @transform_3, window_bounds = array<i64: 1, 196, 64>}]} {
    %c0 = arith.constant 0 : index
    %c0_0 = arith.constant 0 : index
    %0 = vector.load %arg2[%c0, %c0_0] : memref<288x64xbf16, #tpu.memory_space<vmem>>, vector<288x64xbf16>
    %c0_1 = arith.constant 0 : index
    %c0_2 = arith.constant 0 : index
    %c0_3 = arith.constant 0 : index
    %c0_4 = arith.constant 0 : index
    %1 = vector.load %arg1[%c0_1, %c0_2, %c0_3, %c0_4] : memref<1x4x196x288xbf16, #tpu.memory_space<vmem>>, vector<1x1x196x288xbf16>
    %2 = vector.shape_cast %1 : vector<1x1x196x288xbf16> to vector<196x288xbf16>
    %cst = arith.constant dense<0.000000e+00> : vector<196x64xf32>
    %3 = tpu.matmul %2, %0, %cst {dimension_numbers = #tpu.dot_dimension_numbers<[1], [0], [0], [1], [0, 0, 1, 1], [], []>} : vector<196x288xbf16>, vector<288x64xbf16>, vector<196x64xf32> -> vector<196x64xf32>
    %c0_5 = arith.constant 0 : index
    %c1 = arith.constant 1 : index
    %c0_6 = arith.constant 0 : index
    %c0_7 = arith.constant 0 : index
    %4 = vector.load %arg1[%c0_5, %c1, %c0_6, %c0_7] : memref<1x4x196x288xbf16, #tpu.memory_space<vmem>>, vector<1x1x196x288xbf16>
    %5 = vector.shape_cast %4 : vector<1x1x196x288xbf16> to vector<196x288xbf16>
    %cst_8 = arith.constant dense<0.000000e+00> : vector<196x64xf32>
    %6 = tpu.matmul %5, %0, %cst_8 {dimension_numbers = #tpu.dot_dimension_numbers<[1], [0], [0], [1], [0, 0, 1, 1], [], []>} : vector<196x288xbf16>, vector<288x64xbf16>, vector<196x64xf32> -> vector<196x64xf32>
    %7 = arith.maximumf %3, %6 : vector<196x64xf32>
    %c0_9 = arith.constant 0 : index
    %c2 = arith.constant 2 : index
    %c0_10 = arith.constant 0 : index
    %c0_11 = arith.constant 0 : index
    %8 = vector.load %arg1[%c0_9, %c2, %c0_10, %c0_11] : memref<1x4x196x288xbf16, #tpu.memory_space<vmem>>, vector<1x1x196x288xbf16>
    %9 = vector.shape_cast %8 : vector<1x1x196x288xbf16> to vector<196x288xbf16>
    %cst_12 = arith.constant dense<0.000000e+00> : vector<196x64xf32>
    %10 = tpu.matmul %9, %0, %cst_12 {dimension_numbers = #tpu.dot_dimension_numbers<[1], [0], [0], [1], [0, 0, 1, 1], [], []>} : vector<196x288xbf16>, vector<288x64xbf16>, vector<196x64xf32> -> vector<196x64xf32>
    %11 = arith.maximumf %7, %10 : vector<196x64xf32>
    %c0_13 = arith.constant 0 : index
    %c3 = arith.constant 3 : index
    %c0_14 = arith.constant 0 : index
    %c0_15 = arith.constant 0 : index
    %12 = vector.load %arg1[%c0_13, %c3, %c0_14, %c0_15] : memref<1x4x196x288xbf16, #tpu.memory_space<vmem>>, vector<1x1x196x288xbf16>
    %13 = vector.shape_cast %12 : vector<1x1x196x288xbf16> to vector<196x288xbf16>
    %cst_16 = arith.constant dense<0.000000e+00> : vector<196x64xf32>
    %14 = tpu.matmul %13, %0, %cst_16 {dimension_numbers = #tpu.dot_dimension_numbers<[1], [0], [0], [1], [0, 0, 1, 1], [], []>} : vector<196x288xbf16>, vector<288x64xbf16>, vector<196x64xf32> -> vector<196x64xf32>
    %15 = arith.maximumf %11, %14 : vector<196x64xf32>
    %c0_17 = arith.constant 0 : index
    %c0_18 = arith.constant 0 : index
    %16 = vector.load %arg3[%c0_17, %c0_18] : memref<1x64xf32, #tpu.memory_space<vmem>>, vector<1x64xf32>
    %17 = vector.broadcast %16 : vector<1x64xf32> to vector<196x64xf32>
    %18 = arith.addf %15, %17 : vector<196x64xf32>
    %cst_19 = arith.constant 0.000000e+00 : f32
    %19 = vector.broadcast %cst_19 : f32 to vector<196x64xf32>
    %20 = arith.maximumf %18, %19 : vector<196x64xf32>
    %21 = arith.truncf %20 : vector<196x64xf32> to vector<196x64xbf16>
    %c0_20 = arith.constant 0 : index
    %c0_21 = arith.constant 0 : index
    %c0_22 = arith.constant 0 : index
    %22 = vector.load %arg4[%c0_20, %c0_21, %c0_22] : memref<1x196x64xbf16, #tpu.memory_space<vmem>>, vector<1x196x64xbf16>
    %23 = vector.shape_cast %22 : vector<1x196x64xbf16> to vector<196x64xbf16>
    %24 = vector.shape_cast %21 : vector<196x64xbf16> to vector<1x196x64xbf16>
    tpu.vector_store %arg4[%c0_20, %c0_21, %c0_22], %24 {strides = array<i32>} : memref<1x196x64xbf16, #tpu.memory_space<vmem>>, vector<1x196x64xbf16>,
    return
  }
  func.func @transform_0(%arg0: i32) -> (i32, i32, i32, i32) {
    %c0_i32 = arith.constant 0 : i32
    %c0_i32_0 = arith.constant 0 : i32
    %c0_i32_1 = arith.constant 0 : i32
    %c0_i32_2 = arith.constant 0 : i32
    return %arg0, %c0_i32, %c0_i32_0, %c0_i32_1 : i32, i32, i32, i32
  }
  func.func @transform_1(%arg0: i32) -> (i32, i32) {
    %c0_i32 = arith.constant 0 : i32
    %c0_i32_0 = arith.constant 0 : i32
    %c0_i32_1 = arith.constant 0 : i32
    return %c0_i32, %c0_i32_0 : i32, i32
  }
  func.func @transform_2(%arg0: i32) -> (i32, i32) {
    %c0_i32 = arith.constant 0 : i32
    %c0_i32_0 = arith.constant 0 : i32
    %c0_i32_1 = arith.constant 0 : i32
    return %c0_i32, %c0_i32_0 : i32, i32
  }
  func.func @transform_3(%arg0: i32) -> (i32, i32, i32) {
    %c0_i32 = arith.constant 0 : i32
    %c0_i32_0 = arith.constant 0 : i32
    %c0_i32_1 = arith.constant 0 : i32
    return %arg0, %c0_i32, %c0_i32_0 : i32, i32, i32
  }
}

module attributes {stable_mosaic.version = 11 : i64} {
  func.func @_fc_acc_kernel(%arg0: i32, %arg1: memref<2x1792xbf16, #tpu.memory_space<vmem>>, %arg2: memref<1792x128xbf16, #tpu.memory_space<vmem>>, %arg3: memref<1x128xf32, #tpu.memory_space<vmem>>, %arg4: memref<2x128xf32, #tpu.memory_space<vmem>>) attributes {dimension_semantics = [#tpu.dimension_semantics<arbitrary>], iteration_bounds = array<i64: 7>, scalar_prefetch = 0 : i64, scratch_operands = 0 : i64, tpu.core_type = #tpu.core_type<tc>, window_params = [{transform_indices = @transform_0, window_bounds = array<i64: 2, 1792>}, {transform_indices = @transform_1, window_bounds = array<i64: 1792, 128>}, {pipeline_mode = #tpu.pipeline_mode<synchronous>, transform_indices = @transform_2, window_bounds = array<i64: 1, 128>}, {pipeline_mode = #tpu.pipeline_mode<synchronous>, transform_indices = @transform_3, window_bounds = array<i64: 2, 128>}]} {
    %c0 = arith.constant 0 : index
    %c0_0 = arith.constant 0 : index
    %0 = vector.load %arg1[%c0, %c0_0] : memref<2x1792xbf16, #tpu.memory_space<vmem>>, vector<2x1792xbf16>
    %c0_1 = arith.constant 0 : index
    %c0_2 = arith.constant 0 : index
    %1 = vector.load %arg2[%c0_1, %c0_2] : memref<1792x128xbf16, #tpu.memory_space<vmem>>, vector<1792x128xbf16>
    %cst = arith.constant dense<0.000000e+00> : vector<2x128xf32>
    %2 = tpu.matmul %0, %1, %cst {dimension_numbers = #tpu.dot_dimension_numbers<[1], [0], [0], [1], [0, 0, 1, 1], [], []>} : vector<2x1792xbf16>, vector<1792x128xbf16>, vector<2x128xf32> -> vector<2x128xf32>
    %c0_i32 = arith.constant 0 : i32
    %3 = arith.cmpi eq, %arg0, %c0_i32 : i32
    %4 = arith.extui %3 : i1 to i32
    %c0_i32_3 = arith.constant 0 : i32
    %5 = arith.cmpi ne, %4, %c0_i32_3 : i32
    scf.if %5 {
      %cst_9 = arith.constant 0.000000e+00 : f32
      %12 = vector.broadcast %cst_9 : f32 to vector<2x128xf32>
      %c0_10 = arith.constant 0 : index
      %c0_11 = arith.constant 0 : index
      %13 = vector.load %arg4[%c0_10, %c0_11] : memref<2x128xf32, #tpu.memory_space<vmem>>, vector<2x128xf32>
      tpu.vector_store %arg4[%c0_10, %c0_11], %12 {strides = array<i32>} : memref<2x128xf32, #tpu.memory_space<vmem>>, vector<2x128xf32>,
    } else {
    }
    %c0_4 = arith.constant 0 : index
    %c0_5 = arith.constant 0 : index
    %6 = vector.load %arg4[%c0_4, %c0_5] : memref<2x128xf32, #tpu.memory_space<vmem>>, vector<2x128xf32>
    %7 = arith.addf %6, %2 : vector<2x128xf32>
    %c0_6 = arith.constant 0 : index
    %c0_7 = arith.constant 0 : index
    %8 = vector.load %arg4[%c0_6, %c0_7] : memref<2x128xf32, #tpu.memory_space<vmem>>, vector<2x128xf32>
    tpu.vector_store %arg4[%c0_6, %c0_7], %7 {strides = array<i32>} : memref<2x128xf32, #tpu.memory_space<vmem>>, vector<2x128xf32>,
    %c6_i32 = arith.constant 6 : i32
    %9 = arith.cmpi eq, %arg0, %c6_i32 : i32
    %10 = arith.extui %9 : i1 to i32
    %c0_i32_8 = arith.constant 0 : i32
    %11 = arith.cmpi ne, %10, %c0_i32_8 : i32
    scf.if %11 {
      %c0_9 = arith.constant 0 : index
      %c0_10 = arith.constant 0 : index
      %12 = vector.load %arg4[%c0_9, %c0_10] : memref<2x128xf32, #tpu.memory_space<vmem>>, vector<2x128xf32>
      %c0_11 = arith.constant 0 : index
      %c0_12 = arith.constant 0 : index
      %13 = vector.load %arg3[%c0_11, %c0_12] : memref<1x128xf32, #tpu.memory_space<vmem>>, vector<1x128xf32>
      %14 = vector.broadcast %13 : vector<1x128xf32> to vector<2x128xf32>
      %15 = arith.addf %12, %14 : vector<2x128xf32>
      %cst_13 = arith.constant 0.000000e+00 : f32
      %16 = vector.broadcast %cst_13 : f32 to vector<2x128xf32>
      %17 = arith.maximumf %15, %16 : vector<2x128xf32>
      %c0_14 = arith.constant 0 : index
      %c0_15 = arith.constant 0 : index
      %18 = vector.load %arg4[%c0_14, %c0_15] : memref<2x128xf32, #tpu.memory_space<vmem>>, vector<2x128xf32>
      tpu.vector_store %arg4[%c0_14, %c0_15], %17 {strides = array<i32>} : memref<2x128xf32, #tpu.memory_space<vmem>>, vector<2x128xf32>,
    } else {
    }
    return
  }
  func.func @transform_0(%arg0: i32) -> (i32, i32) {
    %c0_i32 = arith.constant 0 : i32
    %c0_i32_0 = arith.constant 0 : i32
    return %c0_i32, %arg0 : i32, i32
  }
  func.func @transform_1(%arg0: i32) -> (i32, i32) {
    %c0_i32 = arith.constant 0 : i32
    %c0_i32_0 = arith.constant 0 : i32
    return %arg0, %c0_i32 : i32, i32
  }
  func.func @transform_2(%arg0: i32) -> (i32, i32) {
    %c0_i32 = arith.constant 0 : i32
    %c0_i32_0 = arith.constant 0 : i32
    %c0_i32_1 = arith.constant 0 : i32
    return %c0_i32, %c0_i32_0 : i32, i32
  }
  func.func @transform_3(%arg0: i32) -> (i32, i32) {
    %c0_i32 = arith.constant 0 : i32
    %c0_i32_0 = arith.constant 0 : i32
    %c0_i32_1 = arith.constant 0 : i32
    return %c0_i32, %c0_i32_0 : i32, i32
  }
}

module attributes {stable_mosaic.version = 11 : i64} {
  func.func @_fc_acc_kernel(%arg0: i32, %arg1: memref<2x128xf32, #tpu.memory_space<vmem>>, %arg2: memref<128x10xf32, #tpu.memory_space<vmem>>, %arg3: memref<1x10xf32, #tpu.memory_space<vmem>>, %arg4: memref<2x10xf32, #tpu.memory_space<vmem>>) attributes {dimension_semantics = [#tpu.dimension_semantics<arbitrary>], iteration_bounds = array<i64: 1>, scalar_prefetch = 0 : i64, scratch_operands = 0 : i64, tpu.core_type = #tpu.core_type<tc>, window_params = [{transform_indices = @transform_0, window_bounds = array<i64: 2, 128>}, {transform_indices = @transform_1, window_bounds = array<i64: 128, 10>}, {pipeline_mode = #tpu.pipeline_mode<synchronous>, transform_indices = @transform_2, window_bounds = array<i64: 1, 10>}, {pipeline_mode = #tpu.pipeline_mode<synchronous>, transform_indices = @transform_3, window_bounds = array<i64: 2, 10>}]} {
    %c0 = arith.constant 0 : index
    %c0_0 = arith.constant 0 : index
    %0 = vector.load %arg1[%c0, %c0_0] : memref<2x128xf32, #tpu.memory_space<vmem>>, vector<2x128xf32>
    %c0_1 = arith.constant 0 : index
    %c0_2 = arith.constant 0 : index
    %1 = vector.load %arg2[%c0_1, %c0_2] : memref<128x10xf32, #tpu.memory_space<vmem>>, vector<128x10xf32>
    %cst = arith.constant dense<0.000000e+00> : vector<2x10xf32>
    %2 = tpu.matmul %0, %1, %cst {dimension_numbers = #tpu.dot_dimension_numbers<[1], [0], [0], [1], [0, 0, 1, 1], [], []>} : vector<2x128xf32>, vector<128x10xf32>, vector<2x10xf32> -> vector<2x10xf32>
    %c0_3 = arith.constant 0 : index
    %c0_4 = arith.constant 0 : index
    %3 = vector.load %arg3[%c0_3, %c0_4] : memref<1x10xf32, #tpu.memory_space<vmem>>, vector<1x10xf32>
    %4 = vector.broadcast %3 : vector<1x10xf32> to vector<2x10xf32>
    %5 = arith.addf %2, %4 : vector<2x10xf32>
    %c0_5 = arith.constant 0 : index
    %c0_6 = arith.constant 0 : index
    %6 = vector.load %arg4[%c0_5, %c0_6] : memref<2x10xf32, #tpu.memory_space<vmem>>, vector<2x10xf32>
    tpu.vector_store %arg4[%c0_5, %c0_6], %5 {strides = array<i32>} : memref<2x10xf32, #tpu.memory_space<vmem>>, vector<2x10xf32>,
    return
  }
  func.func @transform_0(%arg0: i32) -> (i32, i32) {
    %c0_i32 = arith.constant 0 : i32
    %c0_i32_0 = arith.constant 0 : i32
    return %c0_i32, %arg0 : i32, i32
  }
  func.func @transform_1(%arg0: i32) -> (i32, i32) {
    %c0_i32 = arith.constant 0 : i32
    %c0_i32_0 = arith.constant 0 : i32
    return %arg0, %c0_i32 : i32, i32
  }
  func.func @transform_2(%arg0: i32) -> (i32, i32) {
    %c0_i32 = arith.constant 0 : i32
    %c0_i32_0 = arith.constant 0 : i32
    %c0_i32_1 = arith.constant 0 : i32
    return %c0_i32, %c0_i32_0 : i32, i32
  }
  func.func @transform_3(%arg0: i32) -> (i32, i32) {
    %c0_i32 = arith.constant 0 : i32
    %c0_i32_0 = arith.constant 0 : i32
    %c0_i32_1 = arith.constant 0 : i32
    return %c0_i32, %c0_i32_0 : i32, i32
  }
}

</mosaic_0001>

<llo_original>
// kernel: simple_cnn_forward.4
$region0: #{simple_cnn_forward.4}
  #allocation0 [shape = 'u32[]', space=smem, size = 0x4, offset = 0x4, fixed_abs, tag = 'smem constant byte address 0x4 - core index']
  #allocation1 [shape = 'u32[144,128]{1,0:T(1,128)}', space=vmem, size = 0x12000, scoped, tag = 'internal scratch']
  %s0 = inlined_call_operand.vmem [shape: bf16[2,784,9], index: 0, kind: input, shape index: {}]
  %s1 = inlined_call_operand.hbm [shape: bf16[9,32], index: 1, kind: input, shape index: {}]
  %s2 = inlined_call_operand.hbm [shape: f32[1,32], index: 2, kind: input, shape index: {}]
  %s3 = inlined_call_operand.vmem [shape: bf16[2,784,32], index: 3, kind: output, shape index: {}]
  %s4 = sld [smem:[#allocation0]]
  $region53: #{simple_cnn_forward.4} parent=0
    _
  %s6 = ssub.s32 1, %s4
  %s7 = scalar_select 0, %s6, %s4
  $region1: #{simple_cnn_forward.4} parent=0
    #allocation2 [shape = 'u8[4096]{0}', space=vmem, size = 0x1000, scoped, tag = 'input window, operand 1, single buffered']
    #allocation3 [shape = 's32[2]{0}', space=sflag, size = 0x8, scoped, tag = 'scoped memory for simple_cnn_forward.4']
    #allocation4 [shape = 'u8[512]{0}', space=vmem, size = 0x400, scoped, tag = 'input window, operand 2, single buffered']
    #allocation5 [shape = 's32[1]{0}', space=sflag, size = 0x4, scoped, tag = 'scoped memory for simple_cnn_forward.4']
    %8 = vsyncpa [#allocation3], 0
    %9 = vsyncpa [#allocation5], 0
    loop: start=0, step=1, limit=4
    $region2: #{simple_cnn_forward.4} parent=1 // loop_pre_header
      _
    $region3: #{simple_cnn_forward.4} parent=1 // loop_header
      %s11 = sphi 0, %s15
      %p12 = scmp.ge.s32.totalorder %s11, 4
      %s21 = sphi 0, %s23
      %s24 = sphi 0, %s21
      %s25 = sphi 0, %s24
      %s41 = sphi 0, %s25
      %s45 = sphi 0, %s45
      %s47 = sphi 0, %s45
      %s48 = sphi 0, %s47
      %s62 = sphi 0, %s48
      %s66 = sphi 0, %s66
      %s68 = sphi 0, %s66
      %s69 = sphi 0, %s68
      %s83 = sphi 0, %s69
      %s89 = sphi 0, %s91
      %s92 = sphi 0, %s89
      %s93 = sphi 0, %s92
      %s109 = sphi 0, %s93
    $region4: #{simple_cnn_forward.4} parent=1 // loop_header_branch
      %14 = sbr.rel (%p12) target = $region8
    $region5: #{simple_cnn_forward.4} parent=1 // loop_body
      %s16 = ssub.s32 %s11, 1
      %s17 = ssub.s32 %s11, 2
      %s18 = sadd.s32 %s11, 1
      %s19 = ssub.s32 %s11, %s18
      %p20 = scmp.eq.s32.totalorder %s19, 0
      %s22 = sadd.s32 %s21, 1
      %s23 = scalar_select %p20, %s21, %s22
      %p26 = pneg %p20
      %p27 = scmp.eq.s32.totalorder %s11, 1
      %p28 = por %p26, %p27
      %p29 = scmp.ne.s32.totalorder %s21, %s24
      %p30 = scmp.eq.s32.totalorder %s11, 0
      %p31 = por %p29, %p30
      %p32 = scmp.ne.s32.totalorder %s21, %s24
      %p33 = scmp.eq.s32.totalorder %s16, 1
      %p34 = por %p32, %p33
      %p35 = scmp.ne.s32.totalorder %s24, %s25
      %p36 = scmp.eq.s32.totalorder %s16, 0
      %p37 = por %p35, %p36
      %p38 = scmp.ne.s32.totalorder %s24, %s25
      %p39 = scmp.eq.s32.totalorder %s17, 1
      %p40 = por %p38, %p39
      %p42 = scmp.ne.s32.totalorder %s25, %s41
      %p43 = scmp.eq.s32.totalorder %s17, 0
      %p44 = por %p42, %p43
      %s46 = sadd.s32 %s45, 1
      %p49 = scmp.eq.s32.totalorder %s11, 1
      %p50 = scmp.ne.s32.totalorder %s45, %s47
      %p51 = scmp.eq.s32.totalorder %s11, 0
      %p52 = por %p50, %p51
      %p53 = scmp.ne.s32.totalorder %s45, %s47
      %p54 = scmp.eq.s32.totalorder %s16, 1
      %p55 = por %p53, %p54
      %p56 = scmp.ne.s32.totalorder %s47, %s48
      %p57 = scmp.eq.s32.totalorder %s16, 0
      %p58 = por %p56, %p57
      %p59 = scmp.ne.s32.totalorder %s47, %s48
      %p60 = scmp.eq.s32.totalorder %s17, 1
      %p61 = por %p59, %p60
      %p63 = scmp.ne.s32.totalorder %s48, %s62
      %p64 = scmp.eq.s32.totalorder %s17, 0
      %p65 = por %p63, %p64
      %s67 = sadd.s32 %s66, 1
      %p70 = scmp.eq.s32.totalorder %s11, 1
      %p71 = scmp.ne.s32.totalorder %s66, %s68
      %p72 = scmp.eq.s32.totalorder %s11, 0
      %p73 = por %p71, %p72
      %p74 = scmp.ne.s32.totalorder %s66, %s68
      %p75 = scmp.eq.s32.totalorder %s16, 1
      %p76 = por %p74, %p75
      %p77 = scmp.ne.s32.totalorder %s68, %s69
      %p78 = scmp.eq.s32.totalorder %s16, 0
      %p79 = por %p77, %p78
      %p80 = scmp.ne.s32.totalorder %s68, %s69
      %p81 = scmp.eq.s32.totalorder %s17, 1
      %p82 = por %p80, %p81
      %p84 = scmp.ne.s32.totalorder %s69, %s83
      %p85 = scmp.eq.s32.totalorder %s17, 0
      %p86 = por %p84, %p85
      %s87 = ssub.s32 %s11, %s18
      %p88 = scmp.eq.s32.totalorder %s87, 0
      %s90 = sadd.s32 %s89, 1
      %s91 = scalar_select %p88, %s89, %s90
      %p94 = pneg %p88
      %p95 = scmp.eq.s32.totalorder %s11, 1
      %p96 = por %p94, %p95
      %p97 = scmp.ne.s32.totalorder %s89, %s92
      %p98 = scmp.eq.s32.totalorder %s11, 0
      %p99 = por %p97, %p98
      %p100 = scmp.ne.s32.totalorder %s89, %s92
      %p101 = scmp.eq.s32.totalorder %s16, 1
      %p102 = por %p100, %p101
      %p103 = scmp.ne.s32.totalorder %s92, %s93
      %p104 = scmp.eq.s32.totalorder %s16, 0
      %p105 = por %p103, %p104
      %p106 = scmp.ne.s32.totalorder %s92, %s93
      %p107 = scmp.eq.s32.totalorder %s17, 1
      %p108 = por %p106, %p107
      %p110 = scmp.ne.s32.totalorder %s93, %s109
      %p111 = scmp.eq.s32.totalorder %s17, 0
      %p112 = por %p110, %p111
      %p113 = scmp.le.s32.totalorder 1, %s11
      %p114 = scmp.lt.s32.totalorder %s11, 3
      %p115 = pnand %p113, %p114
      %p116 = pneg %p115
      // Predicated region
      $region9: #{simple_cnn_forward.4} parent=5 // pred_check
        _
      $region10: #{simple_cnn_forward.4} parent=5 // pred_check_branch
        %118 = sbr.rel (%p115) target = $region12
      $region11: #{simple_cnn_forward.4} parent=5 // pred_region
        %s119 = ssub.s32 %s11, 1
        // Predicated region
        $region13: #{simple_cnn_forward.4} parent=11 // pred_check
          %p120 = pneg %p58
        $region14: #{simple_cnn_forward.4} parent=11 // pred_check_branch
          %122 = sbr.rel (%p120) target = $region16
        $region15: #{simple_cnn_forward.4} parent=11 // pred_region
          %s124 = ssub.s32 128, 128
          %125 = vsyncadd [#allocation3], %s124
          %s126 = sshll.u32 [#allocation2], 4
          %s127 = int_to_ptr.vmem [resolvable:$true] %s126
          %132 = dma.hbm_to_vmem [thread:$0]  %s1, 128, %s127, [#allocation3], 64, 64, 4
        $region16: #{simple_cnn_forward.4} parent=11 // pred_fallthru
          _
        // Predicated region
        $region17: #{simple_cnn_forward.4} parent=11 // pred_check
          %p133 = pneg %p79
        $region18: #{simple_cnn_forward.4} parent=11 // pred_check_branch
          %135 = sbr.rel (%p133) target = $region20
        $region19: #{simple_cnn_forward.4} parent=11 // pred_region
          %s137 = ssub.s32 16, 16
          %138 = vsyncadd [#allocation5], %s137
          %s140 = sshll.u32 [#allocation4], 4
          %s141 = int_to_ptr.vmem [resolvable:$true] %s140
          %143 = dma.hbm_to_vmem [thread:$0]  %s2, 16, %s141, [#allocation5]
        $region20: #{simple_cnn_forward.4} parent=11 // pred_fallthru
          _
      $region12: #{simple_cnn_forward.4} parent=5 // pred_fallthru
        _
      %p144 = scmp.lt.s32.totalorder %s11, 2
      // Predicated region
      $region21: #{simple_cnn_forward.4} parent=5 // pred_check
        %p145 = pneg %p144
      $region22: #{simple_cnn_forward.4} parent=5 // pred_check_branch
        %147 = sbr.rel (%p145) target = $region24
      $region23: #{simple_cnn_forward.4} parent=5 // pred_region
        // Predicated region
        $region25: #{simple_cnn_forward.4} parent=23 // pred_check
          %p148 = pneg %p31
        $region26: #{simple_cnn_forward.4} parent=23 // pred_check_branch
          %150 = sbr.rel (%p148) target = $region28
        $region27: #{simple_cnn_forward.4} parent=23 // pred_region
          %p151 = scmp.lt.s32.totalorder %s11, 1
          %s152 = scalar_select %p151, %s11, 1
          %s153 = smul.addr %s152, 98
          %s154 = smul.addr %s153, 4
          %s155 = scalar_lea.vmem %s0, %s154
        $region28: #{simple_cnn_forward.4} parent=23 // pred_fallthru
          _
      $region24: #{simple_cnn_forward.4} parent=5 // pred_fallthru
        _
      %p156 = scmp.le.s32.totalorder 1, %s11
      %p157 = scmp.lt.s32.totalorder %s11, 3
      %p158 = pnand %p156, %p157
      %p159 = pneg %p158
      // Predicated region
      $region29: #{simple_cnn_forward.4} parent=5 // pred_check
        _
      $region30: #{simple_cnn_forward.4} parent=5 // pred_check_branch
        %161 = sbr.rel (%p158) target = $region32
      $region31: #{simple_cnn_forward.4} parent=5 // pred_region
        %s162 = ssub.s32 %s11, 1
        // Predicated region
        $region33: #{simple_cnn_forward.4} parent=31 // pred_check
          %p163 = pneg %p58
        $region34: #{simple_cnn_forward.4} parent=31 // pred_check_branch
          %165 = sbr.rel (%p163) target = $region36
        $region35: #{simple_cnn_forward.4} parent=31 // pred_region
          %166 = dma.done [#allocation3], 128
        $region36: #{simple_cnn_forward.4} parent=31 // pred_fallthru
          _
        // Predicated region
        $region37: #{simple_cnn_forward.4} parent=31 // pred_check
          %p167 = pneg %p79
        $region38: #{simple_cnn_forward.4} parent=31 // pred_check_branch
          %169 = sbr.rel (%p167) target = $region40
        $region39: #{simple_cnn_forward.4} parent=31 // pred_region
          %170 = dma.done [#allocation5], 16
        $region40: #{simple_cnn_forward.4} parent=31 // pred_fallthru
          _
        %p171 = scmp.lt.s32.totalorder %s16, 1
        %s172 = scalar_select %p171, %s16, 1
        %s173 = smul.addr %s172, 98
        %s174 = smul.addr %s173, 4
        %s175 = scalar_lea.vmem %s0, %s174
        %p176 = pneg %p37
        %p177 = pneg %p34
        %p178 = pneg %p58
        %p179 = pneg %p55
        %p180 = pneg %p79
        %p181 = pneg %p76
        %p182 = pneg %p105
        %p183 = pneg %p102
        %p184 = scmp.lt.s32.totalorder %s16, 1
        %s185 = scalar_select %p184, %s16, 1
        %s186 = smul.addr %s185, 98
        %s187 = smul.addr %s186, 4
        %s188 = scalar_lea.vmem %s3, %s187
        %p189 = scmp.lt.s32.totalorder %s16, 1
        %s190 = scalar_select %p189, %s16, 1
        %s191 = smul.addr %s190, 98
        %s192 = smul.addr %s191, 4
        %s193 = scalar_lea.vmem %s0, %s192
        %p194 = scmp.lt.s32.totalorder %s16, 1
        %s195 = scalar_select %p194, %s16, 1
        %s196 = smul.addr %s195, 98
        %s197 = smul.addr %s196, 4
        %s198 = scalar_lea.vmem %s3, %s197
        %v200 = vld [vmem:[%s193] sm:$0xf]
        %v201 = vld [vmem:[%s193 + $0x4] sm:$0xf]
        %v202 = vld [vmem:[%s193 + $0x8] sm:$0xf]
        %v203 = vld [vmem:[%s193 + $0xc] sm:$0xf]
        %v204 = vld [vmem:[%s193 + $0x10] sm:$0xf]
        %v205 = vld [vmem:[%s193 + $0x14] sm:$0xf]
        %v206 = vld [vmem:[%s193 + $0x18] sm:$0xf]
        %v207 = vld [vmem:[%s193 + $0x1c] sm:$0xf]
        %v208 = vld [vmem:[%s193 + $0x20] sm:$0xf]
        %v209 = vld [vmem:[%s193 + $0x24] sm:$0xf]
        %v210 = vld [vmem:[%s193 + $0x28] sm:$0xf]
        %v211 = vld [vmem:[%s193 + $0x2c] sm:$0xf]
        %v212 = vld [vmem:[%s193 + $0x30] sm:$0xf]
        %v213 = vld [vmem:[%s193 + $0x34] sm:$0xf]
        %v214 = vld [vmem:[%s193 + $0x38] sm:$0xf]
        %v215 = vld [vmem:[%s193 + $0x3c] sm:$0xf]
        %v216 = vld [vmem:[%s193 + $0x40] sm:$0xf]
        %v217 = vld [vmem:[%s193 + $0x44] sm:$0xf]
        %v218 = vld [vmem:[%s193 + $0x48] sm:$0xf]
        %v219 = vld [vmem:[%s193 + $0x4c] sm:$0xf]
        %v220 = vld [vmem:[%s193 + $0x50] sm:$0xf]
        %v221 = vld [vmem:[%s193 + $0x54] sm:$0xf]
        %v222 = vld [vmem:[%s193 + $0x58] sm:$0xf]
        %v223 = vld [vmem:[%s193 + $0x5c] sm:$0xf]
        %v224 = vld [vmem:[%s193 + $0x60] sm:$0xf]
        %v225 = vld [vmem:[%s193 + $0x64] sm:$0xf]
        %v226 = vld [vmem:[%s193 + $0x68] sm:$0xf]
        %v227 = vld [vmem:[%s193 + $0x6c] sm:$0xf]
        %v228 = vld [vmem:[%s193 + $0x70] sm:$0xf]
        %v229 = vld [vmem:[%s193 + $0x74] sm:$0xf]
        %v230 = vld [vmem:[%s193 + $0x78] sm:$0xf]
        %v231 = vld [vmem:[%s193 + $0x7c] sm:$0xf]
        %v232 = vld [vmem:[%s193 + $0x80] sm:$0xf]
        %v233 = vld [vmem:[%s193 + $0x84] sm:$0xf]
        %v234 = vld [vmem:[%s193 + $0x88] sm:$0xf]
        %v235 = vld [vmem:[%s193 + $0x8c] sm:$0xf]
        %v236 = vld [vmem:[%s193 + $0x90] sm:$0xf]
        %v237 = vld [vmem:[%s193 + $0x94] sm:$0xf]
        %v238 = vld [vmem:[%s193 + $0x98] sm:$0xf]
        %v239 = vld [vmem:[%s193 + $0x9c] sm:$0xf]
        %v240 = vld [vmem:[%s193 + $0xa0] sm:$0xf]
        %v241 = vld [vmem:[%s193 + $0xa4] sm:$0xf]
        %v242 = vld [vmem:[%s193 + $0xa8] sm:$0xf]
        %v243 = vld [vmem:[%s193 + $0xac] sm:$0xf]
        %v244 = vld [vmem:[%s193 + $0xb0] sm:$0xf]
        %v245 = vld [vmem:[%s193 + $0xb4] sm:$0xf]
        %v246 = vld [vmem:[%s193 + $0xb8] sm:$0xf]
        %v247 = vld [vmem:[%s193 + $0xbc] sm:$0xf]
        %v248 = vld [vmem:[%s193 + $0xc0] sm:$0xf]
        %v249 = vld [vmem:[%s193 + $0xc4] sm:$0xf]
        %v250 = vld [vmem:[%s193 + $0xc8] sm:$0xf]
        %v251 = vld [vmem:[%s193 + $0xcc] sm:$0xf]
        %v252 = vld [vmem:[%s193 + $0xd0] sm:$0xf]
        %v253 = vld [vmem:[%s193 + $0xd4] sm:$0xf]
        %v254 = vld [vmem:[%s193 + $0xd8] sm:$0xf]
        %v255 = vld [vmem:[%s193 + $0xdc] sm:$0xf]
        %v256 = vld [vmem:[%s193 + $0xe0] sm:$0xf]
        %v257 = vld [vmem:[%s193 + $0xe4] sm:$0xf]
        %v258 = vld [vmem:[%s193 + $0xe8] sm:$0xf]
        %v259 = vld [vmem:[%s193 + $0xec] sm:$0xf]
        %v260 = vld [vmem:[%s193 + $0xf0] sm:$0xf]
        %v261 = vld [vmem:[%s193 + $0xf4] sm:$0xf]
        %v262 = vld [vmem:[%s193 + $0xf8] sm:$0xf]
        %v263 = vld [vmem:[%s193 + $0xfc] sm:$0xf]
        %v264 = vld [vmem:[%s193 + $0x100] sm:$0xf]
        %v265 = vld [vmem:[%s193 + $0x104] sm:$0xf]
        %v266 = vld [vmem:[%s193 + $0x108] sm:$0xf]
        %v267 = vld [vmem:[%s193 + $0x10c] sm:$0xf]
        %v268 = vld [vmem:[%s193 + $0x110] sm:$0xf]
        %v269 = vld [vmem:[%s193 + $0x114] sm:$0xf]
        %v270 = vld [vmem:[%s193 + $0x118] sm:$0xf]
        %v271 = vld [vmem:[%s193 + $0x11c] sm:$0xf]
        %v272 = vld [vmem:[%s193 + $0x120] sm:$0xf]
        %v273 = vld [vmem:[%s193 + $0x124] sm:$0xf]
        %v274 = vld [vmem:[%s193 + $0x128] sm:$0xf]
        %v275 = vld [vmem:[%s193 + $0x12c] sm:$0xf]
        %v276 = vld [vmem:[%s193 + $0x130] sm:$0xf]
        %v277 = vld [vmem:[%s193 + $0x134] sm:$0xf]
        %v278 = vld [vmem:[%s193 + $0x138] sm:$0xf]
        %v279 = vld [vmem:[%s193 + $0x13c] sm:$0xf]
        %v280 = vld [vmem:[%s193 + $0x140] sm:$0xf]
        %v281 = vld [vmem:[%s193 + $0x144] sm:$0xf]
        %v282 = vld [vmem:[%s193 + $0x148] sm:$0xf]
        %v283 = vld [vmem:[%s193 + $0x14c] sm:$0xf]
        %v284 = vld [vmem:[%s193 + $0x150] sm:$0xf]
        %v285 = vld [vmem:[%s193 + $0x154] sm:$0xf]
        %v286 = vld [vmem:[%s193 + $0x158] sm:$0xf]
        %v287 = vld [vmem:[%s193 + $0x15c] sm:$0xf]
        %v288 = vld [vmem:[%s193 + $0x160] sm:$0xf]
        %v289 = vld [vmem:[%s193 + $0x164] sm:$0xf]
        %v290 = vld [vmem:[%s193 + $0x168] sm:$0xf]
        %v291 = vld [vmem:[%s193 + $0x16c] sm:$0xf]
        %v292 = vld [vmem:[%s193 + $0x170] sm:$0xf]
        %v293 = vld [vmem:[%s193 + $0x174] sm:$0xf]
        %v294 = vld [vmem:[%s193 + $0x178] sm:$0xf]
        %v295 = vld [vmem:[%s193 + $0x17c] sm:$0xf]
        %v296 = vld [vmem:[%s193 + $0x180] sm:$0xf]
        %v297 = vld [vmem:[%s193 + $0x184] sm:$0xf]
        %v298 = vld [vmem:[#allocation2] sm:$0xf]
        %v299 = vld [vmem:[#allocation2 + $0x4] sm:$0x1]
        %v300 = vld [vmem:[#allocation4] sm:$0x1]
        %v302 = vlaneseq
        %v303 = vshrl.u32 %v302, 7
        %v304 = vsub.s32 0, %v303
        %v305 = vrot.slane %v300, %v304
        %v405 = vunpack.c.l.b16 %v200
        %v406 = vunpack.c.l.b16 %v201
        %v407 = vunpack.c.l.b16 %v202
        %v408 = vunpack.c.l.b16 %v203
        %v409 = vunpack.c.l.b16 %v204
        %v410 = vunpack.c.l.b16 %v205
        %v411 = vunpack.c.l.b16 %v206
        %v412 = vunpack.c.l.b16 %v207
        %v413 = vunpack.c.l.b16 %v208
        %v414 = vunpack.c.l.b16 %v209
        %v415 = vunpack.c.l.b16 %v210
        %v416 = vunpack.c.l.b16 %v211
        %v417 = vunpack.c.l.b16 %v212
        %v418 = vunpack.c.l.b16 %v213
        %v419 = vunpack.c.l.b16 %v214
        %v420 = vunpack.c.l.b16 %v215
        %v421 = vunpack.c.l.b16 %v216
        %v422 = vunpack.c.l.b16 %v217
        %v423 = vunpack.c.l.b16 %v218
        %v424 = vunpack.c.l.b16 %v219
        %v425 = vunpack.c.l.b16 %v220
        %v426 = vunpack.c.l.b16 %v221
        %v427 = vunpack.c.l.b16 %v222
        %v428 = vunpack.c.l.b16 %v223
        %v429 = vunpack.c.l.b16 %v224
        %v430 = vunpack.c.l.b16 %v225
        %v431 = vunpack.c.l.b16 %v226
        %v432 = vunpack.c.l.b16 %v227
        %v433 = vunpack.c.l.b16 %v228
        %v434 = vunpack.c.l.b16 %v229
        %v435 = vunpack.c.l.b16 %v230
        %v436 = vunpack.c.l.b16 %v231
        %v437 = vunpack.c.l.b16 %v232
        %v438 = vunpack.c.l.b16 %v233
        %v439 = vunpack.c.l.b16 %v234
        %v440 = vunpack.c.l.b16 %v235
        %v441 = vunpack.c.l.b16 %v236
        %v442 = vunpack.c.l.b16 %v237
        %v443 = vunpack.c.l.b16 %v238
        %v444 = vunpack.c.l.b16 %v239
        %v445 = vunpack.c.l.b16 %v240
        %v446 = vunpack.c.l.b16 %v241
        %v447 = vunpack.c.l.b16 %v242
        %v448 = vunpack.c.l.b16 %v243
        %v449 = vunpack.c.l.b16 %v244
        %v450 = vunpack.c.l.b16 %v245
        %v451 = vunpack.c.l.b16 %v246
        %v452 = vunpack.c.l.b16 %v247
        %v453 = vunpack.c.l.b16 %v248
        %v454 = vunpack.c.l.b16 %v249
        %v455 = vunpack.c.l.b16 %v250
        %v456 = vunpack.c.l.b16 %v251
        %v457 = vunpack.c.l.b16 %v252
        %v458 = vunpack.c.l.b16 %v253
        %v459 = vunpack.c.l.b16 %v254
        %v460 = vunpack.c.l.b16 %v255
        %v461 = vunpack.c.l.b16 %v256
        %v462 = vunpack.c.l.b16 %v257
        %v463 = vunpack.c.l.b16 %v258
        %v464 = vunpack.c.l.b16 %v259
        %v465 = vunpack.c.l.b16 %v260
        %v466 = vunpack.c.l.b16 %v261
        %v467 = vunpack.c.l.b16 %v262
        %v468 = vunpack.c.l.b16 %v263
        %v469 = vunpack.c.l.b16 %v264
        %v470 = vunpack.c.l.b16 %v265
        %v471 = vunpack.c.l.b16 %v266
        %v472 = vunpack.c.l.b16 %v267
        %v473 = vunpack.c.l.b16 %v268
        %v474 = vunpack.c.l.b16 %v269
        %v475 = vunpack.c.l.b16 %v270
        %v476 = vunpack.c.l.b16 %v271
        %v477 = vunpack.c.l.b16 %v272
        %v478 = vunpack.c.l.b16 %v273
        %v479 = vunpack.c.l.b16 %v274
        %v480 = vunpack.c.l.b16 %v275
        %v481 = vunpack.c.l.b16 %v276
        %v482 = vunpack.c.l.b16 %v277
        %v483 = vunpack.c.l.b16 %v278
        %v484 = vunpack.c.l.b16 %v279
        %v485 = vunpack.c.l.b16 %v280
        %v486 = vunpack.c.l.b16 %v281
        %v487 = vunpack.c.l.b16 %v282
        %v488 = vunpack.c.l.b16 %v283
        %v489 = vunpack.c.l.b16 %v284
        %v490 = vunpack.c.l.b16 %v285
        %v491 = vunpack.c.l.b16 %v286
        %v492 = vunpack.c.l.b16 %v287
        %v493 = vunpack.c.l.b16 %v288
        %v494 = vunpack.c.l.b16 %v289
        %v495 = vunpack.c.l.b16 %v290
        %v496 = vunpack.c.l.b16 %v291
        %v497 = vunpack.c.l.b16 %v292
        %v498 = vunpack.c.l.b16 %v293
        %v499 = vunpack.c.l.b16 %v294
        %v500 = vunpack.c.l.b16 %v295
        %v501 = vunpack.c.l.b16 %v296
        %v502 = vunpack.c.l.b16 %v297
        %v503 = vpack.c.b16 %v406, %v405
        %v504 = vpack.c.b16 %v408, %v407
        %v505 = vpack.c.b16 %v410, %v409
        %v506 = vpack.c.b16 %v412, %v411
        %v507 = vpack.c.b16 %v414, %v413
        %v508 = vpack.c.b16 %v416, %v415
        %v509 = vpack.c.b16 %v418, %v417
        %v510 = vpack.c.b16 %v420, %v419
        %v511 = vpack.c.b16 %v422, %v421
        %v512 = vpack.c.b16 %v424, %v423
        %v513 = vpack.c.b16 %v426, %v425
        %v514 = vpack.c.b16 %v428, %v427
        %v515 = vpack.c.b16 %v430, %v429
        %v516 = vpack.c.b16 %v432, %v431
        %v517 = vpack.c.b16 %v434, %v433
        %v518 = vpack.c.b16 %v436, %v435
        %v519 = vpack.c.b16 %v438, %v437
        %v520 = vpack.c.b16 %v440, %v439
        %v521 = vpack.c.b16 %v442, %v441
        %v522 = vpack.c.b16 %v444, %v443
        %v523 = vpack.c.b16 %v446, %v445
        %v524 = vpack.c.b16 %v448, %v447
        %v525 = vpack.c.b16 %v450, %v449
        %v526 = vpack.c.b16 %v452, %v451
        %v527 = vpack.c.b16 %v454, %v453
        %v528 = vpack.c.b16 %v456, %v455
        %v529 = vpack.c.b16 %v458, %v457
        %v530 = vpack.c.b16 %v460, %v459
        %v531 = vpack.c.b16 %v462, %v461
        %v532 = vpack.c.b16 %v464, %v463
        %v533 = vpack.c.b16 %v466, %v465
        %v534 = vpack.c.b16 %v468, %v467
        %v535 = vpack.c.b16 %v470, %v469
        %v536 = vpack.c.b16 %v472, %v471
        %v537 = vpack.c.b16 %v474, %v473
        %v538 = vpack.c.b16 %v476, %v475
        %v539 = vpack.c.b16 %v478, %v477
        %v540 = vpack.c.b16 %v480, %v479
        %v541 = vpack.c.b16 %v482, %v481
        %v542 = vpack.c.b16 %v484, %v483
        %v543 = vpack.c.b16 %v486, %v485
        %v544 = vpack.c.b16 %v488, %v487
        %v545 = vpack.c.b16 %v490, %v489
        %v546 = vpack.c.b16 %v492, %v491
        %v547 = vpack.c.b16 %v494, %v493
        %v548 = vpack.c.b16 %v496, %v495
        %v549 = vpack.c.b16 %v498, %v497
        %v550 = vpack.c.b16 %v500, %v499
        %v551 = vpack.c.b16 %v502, %v501
        %v554 = vunpack.c.l.b16 %v298
        %v555 = vunpack.c.l.b16 %v299
        %v556 = vpack.c.b16 %v555, %v554
        %vm557 = vcmask 72704
        %v559 = vsel %vm557, %v503, 0
        %v562 = vsel %vm557, %v504, 0
        %v565 = vsel %vm557, %v505, 0
        %v568 = vsel %vm557, %v506, 0
        %v571 = vsel %vm557, %v507, 0
        %v574 = vsel %vm557, %v508, 0
        %v577 = vsel %vm557, %v509, 0
        %v580 = vsel %vm557, %v510, 0
        %v583 = vsel %vm557, %v511, 0
        %v586 = vsel %vm557, %v512, 0
        %v589 = vsel %vm557, %v513, 0
        %v592 = vsel %vm557, %v514, 0
        %v595 = vsel %vm557, %v515, 0
        %v598 = vsel %vm557, %v516, 0
        %v601 = vsel %vm557, %v517, 0
        %v604 = vsel %vm557, %v518, 0
        %v607 = vsel %vm557, %v519, 0
        %v610 = vsel %vm557, %v520, 0
        %v613 = vsel %vm557, %v521, 0
        %v616 = vsel %vm557, %v522, 0
        %v619 = vsel %vm557, %v523, 0
        %v622 = vsel %vm557, %v524, 0
        %v625 = vsel %vm557, %v525, 0
        %v628 = vsel %vm557, %v526, 0
        %v631 = vsel %vm557, %v527, 0
        %v634 = vsel %vm557, %v528, 0
        %v637 = vsel %vm557, %v529, 0
        %v640 = vsel %vm557, %v530, 0
        %v643 = vsel %vm557, %v531, 0
        %v646 = vsel %vm557, %v532, 0
        %v649 = vsel %vm557, %v533, 0
        %v652 = vsel %vm557, %v534, 0
        %v655 = vsel %vm557, %v535, 0
        %v658 = vsel %vm557, %v536, 0
        %v661 = vsel %vm557, %v537, 0
        %v664 = vsel %vm557, %v538, 0
        %v667 = vsel %vm557, %v539, 0
        %v670 = vsel %vm557, %v540, 0
        %v673 = vsel %vm557, %v541, 0
        %v676 = vsel %vm557, %v542, 0
        %v679 = vsel %vm557, %v543, 0
        %v682 = vsel %vm557, %v544, 0
        %v685 = vsel %vm557, %v545, 0
        %v688 = vsel %vm557, %v546, 0
        %v691 = vsel %vm557, %v547, 0
        %v694 = vsel %vm557, %v548, 0
        %v697 = vsel %vm557, %v549, 0
        %v700 = vsel %vm557, %v550, 0
        %v703 = vsel %vm557, %v551, 0
        %vm705 = vcmask 1043456
        %vm706 = vcmask 1044480
        %v707 = vsel %vm705, 4294967295, 65535
        %v708 = vsel %vm706, %v707, 0
        %v710 = vand.u32 %v556, %v708
        %712 = vmatprep.subr.bf16.mxu0 0
        %713 = vmatpush1.bf16.msra.mxu0 0
        %714 = vmatprep.subr.bf16.mxu0 0
        %715 = vmatpush1.bf16.msra.mxu0 0
        %716 = vmatprep.subr.bf16.mxu0 0
        %717 = vmatpush1.bf16.msra.mxu0 0
        %718 = vmatprep.subr.bf16.mxu0 0
        %719 = vmatpush1.bf16.msra.mxu0 0
        %720 = vmatprep.subr.bf16.mxu0 0
        %721 = vmatpush1.bf16.msra.mxu0 0
        %722 = vmatprep.subr.bf16.mxu0 0
        %723 = vmatpush1.bf16.msra.mxu0 0
        %724 = vmatprep.subr.bf16.mxu0 0
        %725 = vmatpush1.bf16.msra.mxu0 0
        %726 = vmatprep.subr.bf16.mxu0 0
        %727 = vmatpush1.bf16.msra.mxu0 %v710
        %728 = vmatprep.subr.bf16.mxu0 0
        %729 = vmatpush2.bf16.msra.mxu0 0
        %730 = vmatprep.subr.bf16.mxu0 0
        %731 = vmatpush2.bf16.msra.mxu0 0
        %732 = vmatprep.subr.bf16.mxu0 0
        %733 = vmatpush2.bf16.msra.mxu0 0
        %734 = vmatprep.subr.bf16.mxu0 0
        %735 = vmatpush2.bf16.msra.mxu0 0
        %736 = vmatprep.subr.bf16.mxu0 0
        %737 = vmatpush2.bf16.msra.mxu0 0
        %738 = vmatprep.subr.bf16.mxu0 0
        %739 = vmatpush2.bf16.msra.mxu0 0
        %740 = vmatprep.subr.bf16.mxu0 0
        %741 = vmatpush2.bf16.msra.mxu0 0
        %742 = vmatprep.subr.bf16.mxu0 0
        %743 = vmatpush2.bf16.msra.mxu0 0
        %744 = vmatprep.mubr.bf16.mxu0 0
        %745 = vmatmul.mubr.bf16.gmra.mxu0 %v559
        %v746 = vpop.f32.mrf.mxu0
        %v747 = vadd.f32 %v305, %v746
        %v748 = vpop.f32.mrf.mxu0
        %v749 = vpop.f32.mrf.mxu0
        %v750 = vadd.f32 %v305, %v749
        %v751 = vpop.f32.mrf.mxu0
        %752 = vmatprep.mubr.bf16.mxu0 0
        %753 = vmatmul.mubr.bf16.gmra.mxu0 %v562
        %v754 = vpop.f32.mrf.mxu0
        %v755 = vadd.f32 %v305, %v754
        %v756 = vpop.f32.mrf.mxu0
        %v757 = vpop.f32.mrf.mxu0
        %v758 = vadd.f32 %v305, %v757
        %v759 = vpop.f32.mrf.mxu0
        %760 = vmatprep.mubr.bf16.mxu0 0
        %761 = vmatmul.mubr.bf16.gmra.mxu0 %v565
        %v762 = vpop.f32.mrf.mxu0
        %v763 = vadd.f32 %v305, %v762
        %v764 = vpop.f32.mrf.mxu0
        %v765 = vpop.f32.mrf.mxu0
        %v766 = vadd.f32 %v305, %v765
        %v767 = vpop.f32.mrf.mxu0
        %768 = vmatprep.mubr.bf16.mxu0 0
        %769 = vmatmul.mubr.bf16.gmra.mxu0 %v568
        %v770 = vpop.f32.mrf.mxu0
        %v771 = vadd.f32 %v305, %v770
        %v772 = vpop.f32.mrf.mxu0
        %v773 = vpop.f32.mrf.mxu0
        %v774 = vadd.f32 %v305, %v773
        %v775 = vpop.f32.mrf.mxu0
        %776 = vmatprep.mubr.bf16.mxu0 0
        %777 = vmatmul.mubr.bf16.gmra.mxu0 %v571
        %v778 = vpop.f32.mrf.mxu0
        %v779 = vadd.f32 %v305, %v778
        %v780 = vpop.f32.mrf.mxu0
        %v781 = vpop.f32.mrf.mxu0
        %v782 = vadd.f32 %v305, %v781
        %v783 = vpop.f32.mrf.mxu0
        %784 = vmatprep.mubr.bf16.mxu0 0
        %785 = vmatmul.mubr.bf16.gmra.mxu0 %v574
        %v786 = vpop.f32.mrf.mxu0
        %v787 = vadd.f32 %v305, %v786
        %v788 = vpop.f32.mrf.mxu0
        %v789 = vpop.f32.mrf.mxu0
        %v790 = vadd.f32 %v305, %v789
        %v791 = vpop.f32.mrf.mxu0
        %792 = vmatprep.mubr.bf16.mxu0 0
        %793 = vmatmul.mubr.bf16.gmra.mxu0 %v577
        %v794 = vpop.f32.mrf.mxu0
        %v795 = vadd.f32 %v305, %v794
        %v796 = vpop.f32.mrf.mxu0
        %v797 = vpop.f32.mrf.mxu0
        %v798 = vadd.f32 %v305, %v797
        %v799 = vpop.f32.mrf.mxu0
        %800 = vmatprep.mubr.bf16.mxu0 0
        %801 = vmatmul.mubr.bf16.gmra.mxu0 %v580
        %v802 = vpop.f32.mrf.mxu0
        %v803 = vadd.f32 %v305, %v802
        %v804 = vpop.f32.mrf.mxu0
        %v805 = vpop.f32.mrf.mxu0
        %v806 = vadd.f32 %v305, %v805
        %v807 = vpop.f32.mrf.mxu0
        %808 = vmatprep.mubr.bf16.mxu0 0
        %809 = vmatmul.mubr.bf16.gmra.mxu0 %v583
        %v810 = vpop.f32.mrf.mxu0
        %v811 = vadd.f32 %v305, %v810
        %v812 = vpop.f32.mrf.mxu0
        %v813 = vpop.f32.mrf.mxu0
        %v814 = vadd.f32 %v305, %v813
        %v815 = vpop.f32.mrf.mxu0
        %816 = vmatprep.mubr.bf16.mxu0 0
        %817 = vmatmul.mubr.bf16.gmra.mxu0 %v586
        %v818 = vpop.f32.mrf.mxu0
        %v819 = vadd.f32 %v305, %v818
        %v820 = vpop.f32.mrf.mxu0
        %v821 = vpop.f32.mrf.mxu0
        %v822 = vadd.f32 %v305, %v821
        %v823 = vpop.f32.mrf.mxu0
        %824 = vmatprep.mubr.bf16.mxu0 0
        %825 = vmatmul.mubr.bf16.gmra.mxu0 %v589
        %v826 = vpop.f32.mrf.mxu0
        %v827 = vadd.f32 %v305, %v826
        %v828 = vpop.f32.mrf.mxu0
        %v829 = vpop.f32.mrf.mxu0
        %v830 = vadd.f32 %v305, %v829
        %v831 = vpop.f32.mrf.mxu0
        %832 = vmatprep.mubr.bf16.mxu0 0
        %833 = vmatmul.mubr.bf16.gmra.mxu0 %v592
        %v834 = vpop.f32.mrf.mxu0
        %v835 = vadd.f32 %v305, %v834
        %v836 = vpop.f32.mrf.mxu0
        %v837 = vpop.f32.mrf.mxu0
        %v838 = vadd.f32 %v305, %v837
        %v839 = vpop.f32.mrf.mxu0
        %840 = vmatprep.mubr.bf16.mxu0 0
        %841 = vmatmul.mubr.bf16.gmra.mxu0 %v595
        %v842 = vpop.f32.mrf.mxu0
        %v843 = vadd.f32 %v305, %v842
        %v844 = vpop.f32.mrf.mxu0
        %v845 = vpop.f32.mrf.mxu0
        %v846 = vadd.f32 %v305, %v845
        %v847 = vpop.f32.mrf.mxu0
        %848 = vmatprep.mubr.bf16.mxu0 0
        %849 = vmatmul.mubr.bf16.gmra.mxu0 %v598
        %v850 = vpop.f32.mrf.mxu0
        %v851 = vadd.f32 %v305, %v850
        %v852 = vpop.f32.mrf.mxu0
        %v853 = vpop.f32.mrf.mxu0
        %v854 = vadd.f32 %v305, %v853
        %v855 = vpop.f32.mrf.mxu0
        %856 = vmatprep.mubr.bf16.mxu0 0
        %857 = vmatmul.mubr.bf16.gmra.mxu0 %v601
        %v858 = vpop.f32.mrf.mxu0
        %v859 = vadd.f32 %v305, %v858
        %v860 = vpop.f32.mrf.mxu0
        %v861 = vpop.f32.mrf.mxu0
        %v862 = vadd.f32 %v305, %v861
        %v863 = vpop.f32.mrf.mxu0
        %864 = vmatprep.mubr.bf16.mxu0 0
        %865 = vmatmul.mubr.bf16.gmra.mxu0 %v604
        %v866 = vpop.f32.mrf.mxu0
        %v867 = vadd.f32 %v305, %v866
        %v868 = vpop.f32.mrf.mxu0
        %v869 = vpop.f32.mrf.mxu0
        %v870 = vadd.f32 %v305, %v869
        %v871 = vpop.f32.mrf.mxu0
        %872 = vmatprep.mubr.bf16.mxu0 0
        %873 = vmatmul.mubr.bf16.gmra.mxu0 %v607
        %v874 = vpop.f32.mrf.mxu0
        %v875 = vadd.f32 %v305, %v874
        %v876 = vpop.f32.mrf.mxu0
        %v877 = vpop.f32.mrf.mxu0
        %v878 = vadd.f32 %v305, %v877
        %v879 = vpop.f32.mrf.mxu0
        %880 = vmatprep.mubr.bf16.mxu0 0
        %881 = vmatmul.mubr.bf16.gmra.mxu0 %v610
        %v882 = vpop.f32.mrf.mxu0
        %v883 = vadd.f32 %v305, %v882
        %v884 = vpop.f32.mrf.mxu0
        %v885 = vpop.f32.mrf.mxu0
        %v886 = vadd.f32 %v305, %v885
        %v887 = vpop.f32.mrf.mxu0
        %888 = vmatprep.mubr.bf16.mxu0 0
        %889 = vmatmul.mubr.bf16.gmra.mxu0 %v613
        %v890 = vpop.f32.mrf.mxu0
        %v891 = vadd.f32 %v305, %v890
        %v892 = vpop.f32.mrf.mxu0
        %v893 = vpop.f32.mrf.mxu0
        %v894 = vadd.f32 %v305, %v893
        %v895 = vpop.f32.mrf.mxu0
        %896 = vmatprep.mubr.bf16.mxu0 0
        %897 = vmatmul.mubr.bf16.gmra.mxu0 %v616
        %v898 = vpop.f32.mrf.mxu0
        %v899 = vadd.f32 %v305, %v898
        %v900 = vpop.f32.mrf.mxu0
        %v901 = vpop.f32.mrf.mxu0
        %v902 = vadd.f32 %v305, %v901
        %v903 = vpop.f32.mrf.mxu0
        %904 = vmatprep.mubr.bf16.mxu0 0
        %905 = vmatmul.mubr.bf16.gmra.mxu0 %v619
        %v906 = vpop.f32.mrf.mxu0
        %v907 = vadd.f32 %v305, %v906
        %v908 = vpop.f32.mrf.mxu0
        %v909 = vpop.f32.mrf.mxu0
        %v910 = vadd.f32 %v305, %v909
        %v911 = vpop.f32.mrf.mxu0
        %912 = vmatprep.mubr.bf16.mxu0 0
        %913 = vmatmul.mubr.bf16.gmra.mxu0 %v622
        %v914 = vpop.f32.mrf.mxu0
        %v915 = vadd.f32 %v305, %v914
        %v916 = vpop.f32.mrf.mxu0
        %v917 = vpop.f32.mrf.mxu0
        %v918 = vadd.f32 %v305, %v917
        %v919 = vpop.f32.mrf.mxu0
        %920 = vmatprep.mubr.bf16.mxu0 0
        %921 = vmatmul.mubr.bf16.gmra.mxu0 %v625
        %v922 = vpop.f32.mrf.mxu0
        %v923 = vadd.f32 %v305, %v922
        %v924 = vpop.f32.mrf.mxu0
        %v925 = vpop.f32.mrf.mxu0
        %v926 = vadd.f32 %v305, %v925
        %v927 = vpop.f32.mrf.mxu0
        %928 = vmatprep.mubr.bf16.mxu0 0
        %929 = vmatmul.mubr.bf16.gmra.mxu0 %v628
        %v930 = vpop.f32.mrf.mxu0
        %v931 = vadd.f32 %v305, %v930
        %v932 = vpop.f32.mrf.mxu0
        %v933 = vpop.f32.mrf.mxu0
        %v934 = vadd.f32 %v305, %v933
        %v935 = vpop.f32.mrf.mxu0
        %936 = vmatprep.mubr.bf16.mxu0 0
        %937 = vmatmul.mubr.bf16.gmra.mxu0 %v631
        %v938 = vpop.f32.mrf.mxu0
        %v939 = vadd.f32 %v305, %v938
        %v940 = vpop.f32.mrf.mxu0
        %v941 = vpop.f32.mrf.mxu0
        %v942 = vadd.f32 %v305, %v941
        %v943 = vpop.f32.mrf.mxu0
        %944 = vmatprep.mubr.bf16.mxu0 0
        %945 = vmatmul.mubr.bf16.gmra.mxu0 %v634
        %v946 = vpop.f32.mrf.mxu0
        %v947 = vadd.f32 %v305, %v946
        %v948 = vpop.f32.mrf.mxu0
        %v949 = vpop.f32.mrf.mxu0
        %v950 = vadd.f32 %v305, %v949
        %v951 = vpop.f32.mrf.mxu0
        %952 = vmatprep.mubr.bf16.mxu0 0
        %953 = vmatmul.mubr.bf16.gmra.mxu0 %v637
        %v954 = vpop.f32.mrf.mxu0
        %v955 = vadd.f32 %v305, %v954
        %v956 = vpop.f32.mrf.mxu0
        %v957 = vpop.f32.mrf.mxu0
        %v958 = vadd.f32 %v305, %v957
        %v959 = vpop.f32.mrf.mxu0
        %960 = vmatprep.mubr.bf16.mxu0 0
        %961 = vmatmul.mubr.bf16.gmra.mxu0 %v640
        %v962 = vpop.f32.mrf.mxu0
        %v963 = vadd.f32 %v305, %v962
        %v964 = vpop.f32.mrf.mxu0
        %v965 = vpop.f32.mrf.mxu0
        %v966 = vadd.f32 %v305, %v965
        %v967 = vpop.f32.mrf.mxu0
        %968 = vmatprep.mubr.bf16.mxu0 0
        %969 = vmatmul.mubr.bf16.gmra.mxu0 %v643
        %v970 = vpop.f32.mrf.mxu0
        %v971 = vadd.f32 %v305, %v970
        %v972 = vpop.f32.mrf.mxu0
        %v973 = vpop.f32.mrf.mxu0
        %v974 = vadd.f32 %v305, %v973
        %v975 = vpop.f32.mrf.mxu0
        %976 = vmatprep.mubr.bf16.mxu0 0
        %977 = vmatmul.mubr.bf16.gmra.mxu0 %v646
        %v978 = vpop.f32.mrf.mxu0
        %v979 = vadd.f32 %v305, %v978
        %v980 = vpop.f32.mrf.mxu0
        %v981 = vpop.f32.mrf.mxu0
        %v982 = vadd.f32 %v305, %v981
        %v983 = vpop.f32.mrf.mxu0
        %984 = vmatprep.mubr.bf16.mxu0 0
        %985 = vmatmul.mubr.bf16.gmra.mxu0 %v649
        %v986 = vpop.f32.mrf.mxu0
        %v987 = vadd.f32 %v305, %v986
        %v988 = vpop.f32.mrf.mxu0
        %v989 = vpop.f32.mrf.mxu0
        %v990 = vadd.f32 %v305, %v989
        %v991 = vpop.f32.mrf.mxu0
        %992 = vmatprep.mubr.bf16.mxu0 0
        %993 = vmatmul.mubr.bf16.gmra.mxu0 %v652
        %v994 = vpop.f32.mrf.mxu0
        %v995 = vadd.f32 %v305, %v994
        %v996 = vpop.f32.mrf.mxu0
        %v997 = vpop.f32.mrf.mxu0
        %v998 = vadd.f32 %v305, %v997
        %v999 = vpop.f32.mrf.mxu0
        %1000 = vmatprep.mubr.bf16.mxu0 0
        %1001 = vmatmul.mubr.bf16.gmra.mxu0 %v655
        %v1002 = vpop.f32.mrf.mxu0
        %v1003 = vadd.f32 %v305, %v1002
        %v1004 = vpop.f32.mrf.mxu0
        %v1005 = vpop.f32.mrf.mxu0
        %v1006 = vadd.f32 %v305, %v1005
        %v1007 = vpop.f32.mrf.mxu0
        %1008 = vmatprep.mubr.bf16.mxu0 0
        %1009 = vmatmul.mubr.bf16.gmra.mxu0 %v658
        %v1010 = vpop.f32.mrf.mxu0
        %v1011 = vadd.f32 %v305, %v1010
        %v1012 = vpop.f32.mrf.mxu0
        %v1013 = vpop.f32.mrf.mxu0
        %v1014 = vadd.f32 %v305, %v1013
        %v1015 = vpop.f32.mrf.mxu0
        %1016 = vmatprep.mubr.bf16.mxu0 0
        %1017 = vmatmul.mubr.bf16.gmra.mxu0 %v661
        %v1018 = vpop.f32.mrf.mxu0
        %v1019 = vadd.f32 %v305, %v1018
        %v1020 = vpop.f32.mrf.mxu0
        %v1021 = vpop.f32.mrf.mxu0
        %v1022 = vadd.f32 %v305, %v1021
        %v1023 = vpop.f32.mrf.mxu0
        %1024 = vmatprep.mubr.bf16.mxu0 0
        %1025 = vmatmul.mubr.bf16.gmra.mxu0 %v664
        %v1026 = vpop.f32.mrf.mxu0
        %v1027 = vadd.f32 %v305, %v1026
        %v1028 = vpop.f32.mrf.mxu0
        %v1029 = vpop.f32.mrf.mxu0
        %v1030 = vadd.f32 %v305, %v1029
        %v1031 = vpop.f32.mrf.mxu0
        %1032 = vmatprep.mubr.bf16.mxu0 0
        %1033 = vmatmul.mubr.bf16.gmra.mxu0 %v667
        %v1034 = vpop.f32.mrf.mxu0
        %v1035 = vadd.f32 %v305, %v1034
        %v1036 = vpop.f32.mrf.mxu0
        %v1037 = vpop.f32.mrf.mxu0
        %v1038 = vadd.f32 %v305, %v1037
        %v1039 = vpop.f32.mrf.mxu0
        %1040 = vmatprep.mubr.bf16.mxu0 0
        %1041 = vmatmul.mubr.bf16.gmra.mxu0 %v670
        %v1042 = vpop.f32.mrf.mxu0
        %v1043 = vadd.f32 %v305, %v1042
        %v1044 = vpop.f32.mrf.mxu0
        %v1045 = vpop.f32.mrf.mxu0
        %v1046 = vadd.f32 %v305, %v1045
        %v1047 = vpop.f32.mrf.mxu0
        %1048 = vmatprep.mubr.bf16.mxu0 0
        %1049 = vmatmul.mubr.bf16.gmra.mxu0 %v673
        %v1050 = vpop.f32.mrf.mxu0
        %v1051 = vadd.f32 %v305, %v1050
        %v1052 = vpop.f32.mrf.mxu0
        %v1053 = vpop.f32.mrf.mxu0
        %v1054 = vadd.f32 %v305, %v1053
        %v1055 = vpop.f32.mrf.mxu0
        %1056 = vmatprep.mubr.bf16.mxu0 0
        %1057 = vmatmul.mubr.bf16.gmra.mxu0 %v676
        %v1058 = vpop.f32.mrf.mxu0
        %v1059 = vadd.f32 %v305, %v1058
        %v1060 = vpop.f32.mrf.mxu0
        %v1061 = vpop.f32.mrf.mxu0
        %v1062 = vadd.f32 %v305, %v1061
        %v1063 = vpop.f32.mrf.mxu0
        %1064 = vmatprep.mubr.bf16.mxu0 0
        %1065 = vmatmul.mubr.bf16.gmra.mxu0 %v679
        %v1066 = vpop.f32.mrf.mxu0
        %v1067 = vadd.f32 %v305, %v1066
        %v1068 = vpop.f32.mrf.mxu0
        %v1069 = vpop.f32.mrf.mxu0
        %v1070 = vadd.f32 %v305, %v1069
        %v1071 = vpop.f32.mrf.mxu0
        %1072 = vmatprep.mubr.bf16.mxu0 0
        %1073 = vmatmul.mubr.bf16.gmra.mxu0 %v682
        %v1074 = vpop.f32.mrf.mxu0
        %v1075 = vadd.f32 %v305, %v1074
        %v1076 = vpop.f32.mrf.mxu0
        %v1077 = vpop.f32.mrf.mxu0
        %v1078 = vadd.f32 %v305, %v1077
        %v1079 = vpop.f32.mrf.mxu0
        %1080 = vmatprep.mubr.bf16.mxu0 0
        %1081 = vmatmul.mubr.bf16.gmra.mxu0 %v685
        %v1082 = vpop.f32.mrf.mxu0
        %v1083 = vadd.f32 %v305, %v1082
        %v1084 = vpop.f32.mrf.mxu0
        %v1085 = vpop.f32.mrf.mxu0
        %v1086 = vadd.f32 %v305, %v1085
        %v1087 = vpop.f32.mrf.mxu0
        %1088 = vmatprep.mubr.bf16.mxu0 0
        %1089 = vmatmul.mubr.bf16.gmra.mxu0 %v688
        %v1090 = vpop.f32.mrf.mxu0
        %v1091 = vadd.f32 %v305, %v1090
        %v1092 = vpop.f32.mrf.mxu0
        %v1093 = vpop.f32.mrf.mxu0
        %v1094 = vadd.f32 %v305, %v1093
        %v1095 = vpop.f32.mrf.mxu0
        %1096 = vmatprep.mubr.bf16.mxu0 0
        %1097 = vmatmul.mubr.bf16.gmra.mxu0 %v691
        %v1098 = vpop.f32.mrf.mxu0
        %v1099 = vadd.f32 %v305, %v1098
        %v1100 = vpop.f32.mrf.mxu0
        %v1101 = vpop.f32.mrf.mxu0
        %v1102 = vadd.f32 %v305, %v1101
        %v1103 = vpop.f32.mrf.mxu0
        %1104 = vmatprep.mubr.bf16.mxu0 0
        %1105 = vmatmul.mubr.bf16.gmra.mxu0 %v694
        %v1106 = vpop.f32.mrf.mxu0
        %v1107 = vadd.f32 %v305, %v1106
        %v1108 = vpop.f32.mrf.mxu0
        %v1109 = vpop.f32.mrf.mxu0
        %v1110 = vadd.f32 %v305, %v1109
        %v1111 = vpop.f32.mrf.mxu0
        %1112 = vmatprep.mubr.bf16.mxu0 0
        %1113 = vmatmul.mubr.bf16.gmra.mxu0 %v697
        %v1114 = vpop.f32.mrf.mxu0
        %v1115 = vadd.f32 %v305, %v1114
        %v1116 = vpop.f32.mrf.mxu0
        %v1117 = vpop.f32.mrf.mxu0
        %v1118 = vadd.f32 %v305, %v1117
        %v1119 = vpop.f32.mrf.mxu0
        %1120 = vmatprep.mubr.bf16.mxu0 0
        %1121 = vmatmul.mubr.bf16.gmra.mxu0 %v700
        %v1122 = vpop.f32.mrf.mxu0
        %v1123 = vadd.f32 %v305, %v1122
        %v1124 = vpop.f32.mrf.mxu0
        %v1125 = vpop.f32.mrf.mxu0
        %v1126 = vadd.f32 %v305, %v1125
        %v1127 = vpop.f32.mrf.mxu0
        %1128 = vmatprep.mubr.bf16.mxu0 0
        %1129 = vmatmul.mubr.bf16.gmra.mxu0 %v703
        %v1130 = vpop.f32.mrf.mxu0
        %v1131 = vadd.f32 %v305, %v1130
        %v1132 = vpop.f32.mrf.mxu0
        %v1133 = vpop.f32.mrf.mxu0
        %v1134 = vadd.f32 %v305, %v1133
        %v1135 = vpop.f32.mrf.mxu0
        %1136 = vdwg.mxu0
        %v1137 = vmax.f32 %v747, 0.0
        %v1138 = vmax.f32 %v750, 0.0
        %v1139 = vmax.f32 %v755, 0.0
        %v1140 = vmax.f32 %v758, 0.0
        %v1141 = vmax.f32 %v763, 0.0
        %v1142 = vmax.f32 %v766, 0.0
        %v1143 = vmax.f32 %v771, 0.0
        %v1144 = vmax.f32 %v774, 0.0
        %v1145 = vmax.f32 %v779, 0.0
        %v1146 = vmax.f32 %v782, 0.0
        %v1147 = vmax.f32 %v787, 0.0
        %v1148 = vmax.f32 %v790, 0.0
        %v1149 = vmax.f32 %v795, 0.0
        %v1150 = vmax.f32 %v798, 0.0
        %v1151 = vmax.f32 %v803, 0.0
        %v1152 = vmax.f32 %v806, 0.0
        %v1153 = vmax.f32 %v811, 0.0
        %v1154 = vmax.f32 %v814, 0.0
        %v1155 = vmax.f32 %v819, 0.0
        %v1156 = vmax.f32 %v822, 0.0
        %v1157 = vmax.f32 %v827, 0.0
        %v1158 = vmax.f32 %v830, 0.0
        %v1159 = vmax.f32 %v835, 0.0
        %v1160 = vmax.f32 %v838, 0.0
        %v1161 = vmax.f32 %v843, 0.0
        %v1162 = vmax.f32 %v846, 0.0
        %v1163 = vmax.f32 %v851, 0.0
        %v1164 = vmax.f32 %v854, 0.0
        %v1165 = vmax.f32 %v859, 0.0
        %v1166 = vmax.f32 %v862, 0.0
        %v1167 = vmax.f32 %v867, 0.0
        %v1168 = vmax.f32 %v870, 0.0
        %v1169 = vmax.f32 %v875, 0.0
        %v1170 = vmax.f32 %v878, 0.0
        %v1171 = vmax.f32 %v883, 0.0
        %v1172 = vmax.f32 %v886, 0.0
        %v1173 = vmax.f32 %v891, 0.0
        %v1174 = vmax.f32 %v894, 0.0
        %v1175 = vmax.f32 %v899, 0.0
        %v1176 = vmax.f32 %v902, 0.0
        %v1177 = vmax.f32 %v907, 0.0
        %v1178 = vmax.f32 %v910, 0.0
        %v1179 = vmax.f32 %v915, 0.0
        %v1180 = vmax.f32 %v918, 0.0
        %v1181 = vmax.f32 %v923, 0.0
        %v1182 = vmax.f32 %v926, 0.0
        %v1183 = vmax.f32 %v931, 0.0
        %v1184 = vmax.f32 %v934, 0.0
        %v1185 = vmax.f32 %v939, 0.0
        %v1186 = vmax.f32 %v942, 0.0
        %v1187 = vmax.f32 %v947, 0.0
        %v1188 = vmax.f32 %v950, 0.0
        %v1189 = vmax.f32 %v955, 0.0
        %v1190 = vmax.f32 %v958, 0.0
        %v1191 = vmax.f32 %v963, 0.0
        %v1192 = vmax.f32 %v966, 0.0
        %v1193 = vmax.f32 %v971, 0.0
        %v1194 = vmax.f32 %v974, 0.0
        %v1195 = vmax.f32 %v979, 0.0
        %v1196 = vmax.f32 %v982, 0.0
        %v1197 = vmax.f32 %v987, 0.0
        %v1198 = vmax.f32 %v990, 0.0
        %v1199 = vmax.f32 %v995, 0.0
        %v1200 = vmax.f32 %v998, 0.0
        %v1201 = vmax.f32 %v1003, 0.0
        %v1202 = vmax.f32 %v1006, 0.0
        %v1203 = vmax.f32 %v1011, 0.0
        %v1204 = vmax.f32 %v1014, 0.0
        %v1205 = vmax.f32 %v1019, 0.0
        %v1206 = vmax.f32 %v1022, 0.0
        %v1207 = vmax.f32 %v1027, 0.0
        %v1208 = vmax.f32 %v1030, 0.0
        %v1209 = vmax.f32 %v1035, 0.0
        %v1210 = vmax.f32 %v1038, 0.0
        %v1211 = vmax.f32 %v1043, 0.0
        %v1212 = vmax.f32 %v1046, 0.0
        %v1213 = vmax.f32 %v1051, 0.0
        %v1214 = vmax.f32 %v1054, 0.0
        %v1215 = vmax.f32 %v1059, 0.0
        %v1216 = vmax.f32 %v1062, 0.0
        %v1217 = vmax.f32 %v1067, 0.0
        %v1218 = vmax.f32 %v1070, 0.0
        %v1219 = vmax.f32 %v1075, 0.0
        %v1220 = vmax.f32 %v1078, 0.0
        %v1221 = vmax.f32 %v1083, 0.0
        %v1222 = vmax.f32 %v1086, 0.0
        %v1223 = vmax.f32 %v1091, 0.0
        %v1224 = vmax.f32 %v1094, 0.0
        %v1225 = vmax.f32 %v1099, 0.0
        %v1226 = vmax.f32 %v1102, 0.0
        %v1227 = vmax.f32 %v1107, 0.0
        %v1228 = vmax.f32 %v1110, 0.0
        %v1229 = vmax.f32 %v1115, 0.0
        %v1230 = vmax.f32 %v1118, 0.0
        %v1231 = vmax.f32 %v1123, 0.0
        %v1232 = vmax.f32 %v1126, 0.0
        %v1233 = vmax.f32 %v1131, 0.0
        %v1234 = vmax.f32 %v1134, 0.0
        %v1235 = vpack.c.bf16 %v1138, %v1137
        %v1236 = vpack.c.bf16 %v1140, %v1139
        %v1237 = vpack.c.bf16 %v1142, %v1141
        %v1238 = vpack.c.bf16 %v1144, %v1143
        %v1239 = vpack.c.bf16 %v1146, %v1145
        %v1240 = vpack.c.bf16 %v1148, %v1147
        %v1241 = vpack.c.bf16 %v1150, %v1149
        %v1242 = vpack.c.bf16 %v1152, %v1151
        %v1243 = vpack.c.bf16 %v1154, %v1153
        %v1244 = vpack.c.bf16 %v1156, %v1155
        %v1245 = vpack.c.bf16 %v1158, %v1157
        %v1246 = vpack.c.bf16 %v1160, %v1159
        %v1247 = vpack.c.bf16 %v1162, %v1161
        %v1248 = vpack.c.bf16 %v1164, %v1163
        %v1249 = vpack.c.bf16 %v1166, %v1165
        %v1250 = vpack.c.bf16 %v1168, %v1167
        %v1251 = vpack.c.bf16 %v1170, %v1169
        %v1252 = vpack.c.bf16 %v1172, %v1171
        %v1253 = vpack.c.bf16 %v1174, %v1173
        %v1254 = vpack.c.bf16 %v1176, %v1175
        %v1255 = vpack.c.bf16 %v1178, %v1177
        %v1256 = vpack.c.bf16 %v1180, %v1179
        %v1257 = vpack.c.bf16 %v1182, %v1181
        %v1258 = vpack.c.bf16 %v1184, %v1183
        %v1259 = vpack.c.bf16 %v1186, %v1185
        %v1260 = vpack.c.bf16 %v1188, %v1187
        %v1261 = vpack.c.bf16 %v1190, %v1189
        %v1262 = vpack.c.bf16 %v1192, %v1191
        %v1263 = vpack.c.bf16 %v1194, %v1193
        %v1264 = vpack.c.bf16 %v1196, %v1195
        %v1265 = vpack.c.bf16 %v1198, %v1197
        %v1266 = vpack.c.bf16 %v1200, %v1199
        %v1267 = vpack.c.bf16 %v1202, %v1201
        %v1268 = vpack.c.bf16 %v1204, %v1203
        %v1269 = vpack.c.bf16 %v1206, %v1205
        %v1270 = vpack.c.bf16 %v1208, %v1207
        %v1271 = vpack.c.bf16 %v1210, %v1209
        %v1272 = vpack.c.bf16 %v1212, %v1211
        %v1273 = vpack.c.bf16 %v1214, %v1213
        %v1274 = vpack.c.bf16 %v1216, %v1215
        %v1275 = vpack.c.bf16 %v1218, %v1217
        %v1276 = vpack.c.bf16 %v1220, %v1219
        %v1277 = vpack.c.bf16 %v1222, %v1221
        %v1278 = vpack.c.bf16 %v1224, %v1223
        %v1279 = vpack.c.bf16 %v1226, %v1225
        %v1280 = vpack.c.bf16 %v1228, %v1227
        %v1281 = vpack.c.bf16 %v1230, %v1229
        %v1282 = vpack.c.bf16 %v1232, %v1231
        %v1283 = vpack.c.bf16 %v1234, %v1233
        %v1333 = vunpack.c.l.b16 %v1235
        %v1334 = vunpack.c.h.b16 %v1235
        %v1335 = vunpack.c.l.b16 %v1236
        %v1336 = vunpack.c.h.b16 %v1236
        %v1337 = vunpack.c.l.b16 %v1237
        %v1338 = vunpack.c.h.b16 %v1237
        %v1339 = vunpack.c.l.b16 %v1238
        %v1340 = vunpack.c.h.b16 %v1238
        %v1341 = vunpack.c.l.b16 %v1239
        %v1342 = vunpack.c.h.b16 %v1239
        %v1343 = vunpack.c.l.b16 %v1240
        %v1344 = vunpack.c.h.b16 %v1240
        %v1345 = vunpack.c.l.b16 %v1241
        %v1346 = vunpack.c.h.b16 %v1241
        %v1347 = vunpack.c.l.b16 %v1242
        %v1348 = vunpack.c.h.b16 %v1242
        %v1349 = vunpack.c.l.b16 %v1243
        %v1350 = vunpack.c.h.b16 %v1243
        %v1351 = vunpack.c.l.b16 %v1244
        %v1352 = vunpack.c.h.b16 %v1244
        %v1353 = vunpack.c.l.b16 %v1245
        %v1354 = vunpack.c.h.b16 %v1245
        %v1355 = vunpack.c.l.b16 %v1246
        %v1356 = vunpack.c.h.b16 %v1246
        %v1357 = vunpack.c.l.b16 %v1247
        %v1358 = vunpack.c.h.b16 %v1247
        %v1359 = vunpack.c.l.b16 %v1248
        %v1360 = vunpack.c.h.b16 %v1248
        %v1361 = vunpack.c.l.b16 %v1249
        %v1362 = vunpack.c.h.b16 %v1249
        %v1363 = vunpack.c.l.b16 %v1250
        %v1364 = vunpack.c.h.b16 %v1250
        %v1365 = vunpack.c.l.b16 %v1251
        %v1366 = vunpack.c.h.b16 %v1251
        %v1367 = vunpack.c.l.b16 %v1252
        %v1368 = vunpack.c.h.b16 %v1252
        %v1369 = vunpack.c.l.b16 %v1253
        %v1370 = vunpack.c.h.b16 %v1253
        %v1371 = vunpack.c.l.b16 %v1254
        %v1372 = vunpack.c.h.b16 %v1254
        %v1373 = vunpack.c.l.b16 %v1255
        %v1374 = vunpack.c.h.b16 %v1255
        %v1375 = vunpack.c.l.b16 %v1256
        %v1376 = vunpack.c.h.b16 %v1256
        %v1377 = vunpack.c.l.b16 %v1257
        %v1378 = vunpack.c.h.b16 %v1257
        %v1379 = vunpack.c.l.b16 %v1258
        %v1380 = vunpack.c.h.b16 %v1258
        %v1381 = vunpack.c.l.b16 %v1259
        %v1382 = vunpack.c.h.b16 %v1259
        %v1383 = vunpack.c.l.b16 %v1260
        %v1384 = vunpack.c.h.b16 %v1260
        %v1385 = vunpack.c.l.b16 %v1261
        %v1386 = vunpack.c.h.b16 %v1261
        %v1387 = vunpack.c.l.b16 %v1262
        %v1388 = vunpack.c.h.b16 %v1262
        %v1389 = vunpack.c.l.b16 %v1263
        %v1390 = vunpack.c.h.b16 %v1263
        %v1391 = vunpack.c.l.b16 %v1264
        %v1392 = vunpack.c.h.b16 %v1264
        %v1393 = vunpack.c.l.b16 %v1265
        %v1394 = vunpack.c.h.b16 %v1265
        %v1395 = vunpack.c.l.b16 %v1266
        %v1396 = vunpack.c.h.b16 %v1266
        %v1397 = vunpack.c.l.b16 %v1267
        %v1398 = vunpack.c.h.b16 %v1267
        %v1399 = vunpack.c.l.b16 %v1268
        %v1400 = vunpack.c.h.b16 %v1268
        %v1401 = vunpack.c.l.b16 %v1269
        %v1402 = vunpack.c.h.b16 %v1269
        %v1403 = vunpack.c.l.b16 %v1270
        %v1404 = vunpack.c.h.b16 %v1270
        %v1405 = vunpack.c.l.b16 %v1271
        %v1406 = vunpack.c.h.b16 %v1271
        %v1407 = vunpack.c.l.b16 %v1272
        %v1408 = vunpack.c.h.b16 %v1272
        %v1409 = vunpack.c.l.b16 %v1273
        %v1410 = vunpack.c.h.b16 %v1273
        %v1411 = vunpack.c.l.b16 %v1274
        %v1412 = vunpack.c.h.b16 %v1274
        %v1413 = vunpack.c.l.b16 %v1275
        %v1414 = vunpack.c.h.b16 %v1275
        %v1415 = vunpack.c.l.b16 %v1276
        %v1416 = vunpack.c.h.b16 %v1276
        %v1417 = vunpack.c.l.b16 %v1277
        %v1418 = vunpack.c.h.b16 %v1277
        %v1419 = vunpack.c.l.b16 %v1278
        %v1420 = vunpack.c.h.b16 %v1278
        %v1421 = vunpack.c.l.b16 %v1279
        %v1422 = vunpack.c.h.b16 %v1279
        %v1423 = vunpack.c.l.b16 %v1280
        %v1424 = vunpack.c.h.b16 %v1280
        %v1425 = vunpack.c.l.b16 %v1281
        %v1426 = vunpack.c.h.b16 %v1281
        %v1427 = vunpack.c.l.b16 %v1282
        %v1428 = vunpack.c.h.b16 %v1282
        %v1429 = vunpack.c.l.b16 %v1283
        %v1430 = vunpack.c.h.b16 %v1283
        %v1431 = vpack.c.b16 %v1333, %v1333
        %v1432 = vpack.c.b16 %v1334, %v1334
        %v1433 = vpack.c.b16 %v1335, %v1335
        %v1434 = vpack.c.b16 %v1336, %v1336
        %v1435 = vpack.c.b16 %v1337, %v1337
        %v1436 = vpack.c.b16 %v1338, %v1338
        %v1437 = vpack.c.b16 %v1339, %v1339
        %v1438 = vpack.c.b16 %v1340, %v1340
        %v1439 = vpack.c.b16 %v1341, %v1341
        %v1440 = vpack.c.b16 %v1342, %v1342
        %v1441 = vpack.c.b16 %v1343, %v1343
        %v1442 = vpack.c.b16 %v1344, %v1344
        %v1443 = vpack.c.b16 %v1345, %v1345
        %v1444 = vpack.c.b16 %v1346, %v1346
        %v1445 = vpack.c.b16 %v1347, %v1347
        %v1446 = vpack.c.b16 %v1348, %v1348
        %v1447 = vpack.c.b16 %v1349, %v1349
        %v1448 = vpack.c.b16 %v1350, %v1350
        %v1449 = vpack.c.b16 %v1351, %v1351
        %v1450 = vpack.c.b16 %v1352, %v1352
        %v1451 = vpack.c.b16 %v1353, %v1353
        %v1452 = vpack.c.b16 %v1354, %v1354
        %v1453 = vpack.c.b16 %v1355, %v1355
        %v1454 = vpack.c.b16 %v1356, %v1356
        %v1455 = vpack.c.b16 %v1357, %v1357
        %v1456 = vpack.c.b16 %v1358, %v1358
        %v1457 = vpack.c.b16 %v1359, %v1359
        %v1458 = vpack.c.b16 %v1360, %v1360
        %v1459 = vpack.c.b16 %v1361, %v1361
        %v1460 = vpack.c.b16 %v1362, %v1362
        %v1461 = vpack.c.b16 %v1363, %v1363
        %v1462 = vpack.c.b16 %v1364, %v1364
        %v1463 = vpack.c.b16 %v1365, %v1365
        %v1464 = vpack.c.b16 %v1366, %v1366
        %v1465 = vpack.c.b16 %v1367, %v1367
        %v1466 = vpack.c.b16 %v1368, %v1368
        %v1467 = vpack.c.b16 %v1369, %v1369
        %v1468 = vpack.c.b16 %v1370, %v1370
        %v1469 = vpack.c.b16 %v1371, %v1371
        %v1470 = vpack.c.b16 %v1372, %v1372
        %v1471 = vpack.c.b16 %v1373, %v1373
        %v1472 = vpack.c.b16 %v1374, %v1374
        %v1473 = vpack.c.b16 %v1375, %v1375
        %v1474 = vpack.c.b16 %v1376, %v1376
        %v1475 = vpack.c.b16 %v1377, %v1377
        %v1476 = vpack.c.b16 %v1378, %v1378
        %v1477 = vpack.c.b16 %v1379, %v1379
        %v1478 = vpack.c.b16 %v1380, %v1380
        %v1479 = vpack.c.b16 %v1381, %v1381
        %v1480 = vpack.c.b16 %v1382, %v1382
        %v1481 = vpack.c.b16 %v1383, %v1383
        %v1482 = vpack.c.b16 %v1384, %v1384
        %v1483 = vpack.c.b16 %v1385, %v1385
        %v1484 = vpack.c.b16 %v1386, %v1386
        %v1485 = vpack.c.b16 %v1387, %v1387
        %v1486 = vpack.c.b16 %v1388, %v1388
        %v1487 = vpack.c.b16 %v1389, %v1389
        %v1488 = vpack.c.b16 %v1390, %v1390
        %v1489 = vpack.c.b16 %v1391, %v1391
        %v1490 = vpack.c.b16 %v1392, %v1392
        %v1491 = vpack.c.b16 %v1393, %v1393
        %v1492 = vpack.c.b16 %v1394, %v1394
        %v1493 = vpack.c.b16 %v1395, %v1395
        %v1494 = vpack.c.b16 %v1396, %v1396
        %v1495 = vpack.c.b16 %v1397, %v1397
        %v1496 = vpack.c.b16 %v1398, %v1398
        %v1497 = vpack.c.b16 %v1399, %v1399
        %v1498 = vpack.c.b16 %v1400, %v1400
        %v1499 = vpack.c.b16 %v1401, %v1401
        %v1500 = vpack.c.b16 %v1402, %v1402
        %v1501 = vpack.c.b16 %v1403, %v1403
        %v1502 = vpack.c.b16 %v1404, %v1404
        %v1503 = vpack.c.b16 %v1405, %v1405
        %v1504 = vpack.c.b16 %v1406, %v1406
        %v1505 = vpack.c.b16 %v1407, %v1407
        %v1506 = vpack.c.b16 %v1408, %v1408
        %v1507 = vpack.c.b16 %v1409, %v1409
        %v1508 = vpack.c.b16 %v1410, %v1410
        %v1509 = vpack.c.b16 %v1411, %v1411
        %v1510 = vpack.c.b16 %v1412, %v1412
        %v1511 = vpack.c.b16 %v1413, %v1413
        %v1512 = vpack.c.b16 %v1414, %v1414
        %v1513 = vpack.c.b16 %v1415, %v1415
        %v1514 = vpack.c.b16 %v1416, %v1416
        %v1515 = vpack.c.b16 %v1417, %v1417
        %v1516 = vpack.c.b16 %v1418, %v1418
        %v1517 = vpack.c.b16 %v1419, %v1419
        %v1518 = vpack.c.b16 %v1420, %v1420
        %v1519 = vpack.c.b16 %v1421, %v1421
        %v1520 = vpack.c.b16 %v1422, %v1422
        %v1521 = vpack.c.b16 %v1423, %v1423
        %v1522 = vpack.c.b16 %v1424, %v1424
        %v1523 = vpack.c.b16 %v1425, %v1425
        %v1524 = vpack.c.b16 %v1426, %v1426
        %v1525 = vpack.c.b16 %v1427, %v1427
        %v1526 = vpack.c.b16 %v1428, %v1428
        %v1527 = vpack.c.b16 %v1429, %v1429
        %v1528 = vpack.c.b16 %v1430, %v1430
        %vm1627 = vcmask 257024
        %1628 = vst.msk [vmem:[%s198] sm:$0xf] %vm1627, %v1431
        %1629 = vst.msk [vmem:[%s198 + $0x4] sm:$0xf] %vm1627, %v1432
        %1630 = vst.msk [vmem:[%s198 + $0x8] sm:$0xf] %vm1627, %v1433
        %1631 = vst.msk [vmem:[%s198 + $0xc] sm:$0xf] %vm1627, %v1434
        %1632 = vst.msk [vmem:[%s198 + $0x10] sm:$0xf] %vm1627, %v1435
        %1633 = vst.msk [vmem:[%s198 + $0x14] sm:$0xf] %vm1627, %v1436
        %1634 = vst.msk [vmem:[%s198 + $0x18] sm:$0xf] %vm1627, %v1437
        %1635 = vst.msk [vmem:[%s198 + $0x1c] sm:$0xf] %vm1627, %v1438
        %1636 = vst.msk [vmem:[%s198 + $0x20] sm:$0xf] %vm1627, %v1439
        %1637 = vst.msk [vmem:[%s198 + $0x24] sm:$0xf] %vm1627, %v1440
        %1638 = vst.msk [vmem:[%s198 + $0x28] sm:$0xf] %vm1627, %v1441
        %1639 = vst.msk [vmem:[%s198 + $0x2c] sm:$0xf] %vm1627, %v1442
        %1640 = vst.msk [vmem:[%s198 + $0x30] sm:$0xf] %vm1627, %v1443
        %1641 = vst.msk [vmem:[%s198 + $0x34] sm:$0xf] %vm1627, %v1444
        %1642 = vst.msk [vmem:[%s198 + $0x38] sm:$0xf] %vm1627, %v1445
        %1643 = vst.msk [vmem:[%s198 + $0x3c] sm:$0xf] %vm1627, %v1446
        %1644 = vst.msk [vmem:[%s198 + $0x40] sm:$0xf] %vm1627, %v1447
        %1645 = vst.msk [vmem:[%s198 + $0x44] sm:$0xf] %vm1627, %v1448
        %1646 = vst.msk [vmem:[%s198 + $0x48] sm:$0xf] %vm1627, %v1449
        %1647 = vst.msk [vmem:[%s198 + $0x4c] sm:$0xf] %vm1627, %v1450
        %1648 = vst.msk [vmem:[%s198 + $0x50] sm:$0xf] %vm1627, %v1451
        %1649 = vst.msk [vmem:[%s198 + $0x54] sm:$0xf] %vm1627, %v1452
        %1650 = vst.msk [vmem:[%s198 + $0x58] sm:$0xf] %vm1627, %v1453
        %1651 = vst.msk [vmem:[%s198 + $0x5c] sm:$0xf] %vm1627, %v1454
        %1652 = vst.msk [vmem:[%s198 + $0x60] sm:$0xf] %vm1627, %v1455
        %1653 = vst.msk [vmem:[%s198 + $0x64] sm:$0xf] %vm1627, %v1456
        %1654 = vst.msk [vmem:[%s198 + $0x68] sm:$0xf] %vm1627, %v1457
        %1655 = vst.msk [vmem:[%s198 + $0x6c] sm:$0xf] %vm1627, %v1458
        %1656 = vst.msk [vmem:[%s198 + $0x70] sm:$0xf] %vm1627, %v1459
        %1657 = vst.msk [vmem:[%s198 + $0x74] sm:$0xf] %vm1627, %v1460
        %1658 = vst.msk [vmem:[%s198 + $0x78] sm:$0xf] %vm1627, %v1461
        %1659 = vst.msk [vmem:[%s198 + $0x7c] sm:$0xf] %vm1627, %v1462
        %1660 = vst.msk [vmem:[%s198 + $0x80] sm:$0xf] %vm1627, %v1463
        %1661 = vst.msk [vmem:[%s198 + $0x84] sm:$0xf] %vm1627, %v1464
        %1662 = vst.msk [vmem:[%s198 + $0x88] sm:$0xf] %vm1627, %v1465
        %1663 = vst.msk [vmem:[%s198 + $0x8c] sm:$0xf] %vm1627, %v1466
        %1664 = vst.msk [vmem:[%s198 + $0x90] sm:$0xf] %vm1627, %v1467
        %1665 = vst.msk [vmem:[%s198 + $0x94] sm:$0xf] %vm1627, %v1468
        %1666 = vst.msk [vmem:[%s198 + $0x98] sm:$0xf] %vm1627, %v1469
        %1667 = vst.msk [vmem:[%s198 + $0x9c] sm:$0xf] %vm1627, %v1470
        %1668 = vst.msk [vmem:[%s198 + $0xa0] sm:$0xf] %vm1627, %v1471
        %1669 = vst.msk [vmem:[%s198 + $0xa4] sm:$0xf] %vm1627, %v1472
        %1670 = vst.msk [vmem:[%s198 + $0xa8] sm:$0xf] %vm1627, %v1473
        %1671 = vst.msk [vmem:[%s198 + $0xac] sm:$0xf] %vm1627, %v1474
        %1672 = vst.msk [vmem:[%s198 + $0xb0] sm:$0xf] %vm1627, %v1475
        %1673 = vst.msk [vmem:[%s198 + $0xb4] sm:$0xf] %vm1627, %v1476
        %1674 = vst.msk [vmem:[%s198 + $0xb8] sm:$0xf] %vm1627, %v1477
        %1675 = vst.msk [vmem:[%s198 + $0xbc] sm:$0xf] %vm1627, %v1478
        %1676 = vst.msk [vmem:[%s198 + $0xc0] sm:$0xf] %vm1627, %v1479
        %1677 = vst.msk [vmem:[%s198 + $0xc4] sm:$0xf] %vm1627, %v1480
        %1678 = vst.msk [vmem:[%s198 + $0xc8] sm:$0xf] %vm1627, %v1481
        %1679 = vst.msk [vmem:[%s198 + $0xcc] sm:$0xf] %vm1627, %v1482
        %1680 = vst.msk [vmem:[%s198 + $0xd0] sm:$0xf] %vm1627, %v1483
        %1681 = vst.msk [vmem:[%s198 + $0xd4] sm:$0xf] %vm1627, %v1484
        %1682 = vst.msk [vmem:[%s198 + $0xd8] sm:$0xf] %vm1627, %v1485
        %1683 = vst.msk [vmem:[%s198 + $0xdc] sm:$0xf] %vm1627, %v1486
        %1684 = vst.msk [vmem:[%s198 + $0xe0] sm:$0xf] %vm1627, %v1487
        %1685 = vst.msk [vmem:[%s198 + $0xe4] sm:$0xf] %vm1627, %v1488
        %1686 = vst.msk [vmem:[%s198 + $0xe8] sm:$0xf] %vm1627, %v1489
        %1687 = vst.msk [vmem:[%s198 + $0xec] sm:$0xf] %vm1627, %v1490
        %1688 = vst.msk [vmem:[%s198 + $0xf0] sm:$0xf] %vm1627, %v1491
        %1689 = vst.msk [vmem:[%s198 + $0xf4] sm:$0xf] %vm1627, %v1492
        %1690 = vst.msk [vmem:[%s198 + $0xf8] sm:$0xf] %vm1627, %v1493
        %1691 = vst.msk [vmem:[%s198 + $0xfc] sm:$0xf] %vm1627, %v1494
        %1692 = vst.msk [vmem:[%s198 + $0x100] sm:$0xf] %vm1627, %v1495
        %1693 = vst.msk [vmem:[%s198 + $0x104] sm:$0xf] %vm1627, %v1496
        %1694 = vst.msk [vmem:[%s198 + $0x108] sm:$0xf] %vm1627, %v1497
        %1695 = vst.msk [vmem:[%s198 + $0x10c] sm:$0xf] %vm1627, %v1498
        %1696 = vst.msk [vmem:[%s198 + $0x110] sm:$0xf] %vm1627, %v1499
        %1697 = vst.msk [vmem:[%s198 + $0x114] sm:$0xf] %vm1627, %v1500
        %1698 = vst.msk [vmem:[%s198 + $0x118] sm:$0xf] %vm1627, %v1501
        %1699 = vst.msk [vmem:[%s198 + $0x11c] sm:$0xf] %vm1627, %v1502
        %1700 = vst.msk [vmem:[%s198 + $0x120] sm:$0xf] %vm1627, %v1503
        %1701 = vst.msk [vmem:[%s198 + $0x124] sm:$0xf] %vm1627, %v1504
        %1702 = vst.msk [vmem:[%s198 + $0x128] sm:$0xf] %vm1627, %v1505
        %1703 = vst.msk [vmem:[%s198 + $0x12c] sm:$0xf] %vm1627, %v1506
        %1704 = vst.msk [vmem:[%s198 + $0x130] sm:$0xf] %vm1627, %v1507
        %1705 = vst.msk [vmem:[%s198 + $0x134] sm:$0xf] %vm1627, %v1508
        %1706 = vst.msk [vmem:[%s198 + $0x138] sm:$0xf] %vm1627, %v1509
        %1707 = vst.msk [vmem:[%s198 + $0x13c] sm:$0xf] %vm1627, %v1510
        %1708 = vst.msk [vmem:[%s198 + $0x140] sm:$0xf] %vm1627, %v1511
        %1709 = vst.msk [vmem:[%s198 + $0x144] sm:$0xf] %vm1627, %v1512
        %1710 = vst.msk [vmem:[%s198 + $0x148] sm:$0xf] %vm1627, %v1513
        %1711 = vst.msk [vmem:[%s198 + $0x14c] sm:$0xf] %vm1627, %v1514
        %1712 = vst.msk [vmem:[%s198 + $0x150] sm:$0xf] %vm1627, %v1515
        %1713 = vst.msk [vmem:[%s198 + $0x154] sm:$0xf] %vm1627, %v1516
        %1714 = vst.msk [vmem:[%s198 + $0x158] sm:$0xf] %vm1627, %v1517
        %1715 = vst.msk [vmem:[%s198 + $0x15c] sm:$0xf] %vm1627, %v1518
        %1716 = vst.msk [vmem:[%s198 + $0x160] sm:$0xf] %vm1627, %v1519
        %1717 = vst.msk [vmem:[%s198 + $0x164] sm:$0xf] %vm1627, %v1520
        %1718 = vst.msk [vmem:[%s198 + $0x168] sm:$0xf] %vm1627, %v1521
        %1719 = vst.msk [vmem:[%s198 + $0x16c] sm:$0xf] %vm1627, %v1522
        %1720 = vst.msk [vmem:[%s198 + $0x170] sm:$0xf] %vm1627, %v1523
        %1721 = vst.msk [vmem:[%s198 + $0x174] sm:$0xf] %vm1627, %v1524
        %1722 = vst.msk [vmem:[%s198 + $0x178] sm:$0xf] %vm1627, %v1525
        %1723 = vst.msk [vmem:[%s198 + $0x17c] sm:$0xf] %vm1627, %v1526
        %1724 = vst.msk [vmem:[%s198 + $0x180] sm:$0xf] %vm1627, %v1527
        %1725 = vst.msk [vmem:[%s198 + $0x184] sm:$0xf] %vm1627, %v1528
        %p1726 = scmp.lt.s32.totalorder %s16, 1
        %s1727 = scalar_select %p1726, %s16, 1
        %s1728 = smul.addr %s1727, 98
        %s1729 = smul.addr %s1728, 4
        %s1730 = scalar_lea.vmem %s3, %s1729
        // Predicated region
        $region41: #{simple_cnn_forward.4} parent=31 // pred_check
          %p1731 = pneg %p102
        $region42: #{simple_cnn_forward.4} parent=31 // pred_check_branch
          %1733 = sbr.rel (%p1731) target = $region44
        $region43: #{simple_cnn_forward.4} parent=31 // pred_region
          _
        $region44: #{simple_cnn_forward.4} parent=31 // pred_fallthru
          _
      $region32: #{simple_cnn_forward.4} parent=5 // pred_fallthru
        _
      %p1734 = scmp.le.s32.totalorder 2, %s11
      // Predicated region
      $region45: #{simple_cnn_forward.4} parent=5 // pred_check
        %p1735 = pneg %p1734
      $region46: #{simple_cnn_forward.4} parent=5 // pred_check_branch
        %1737 = sbr.rel (%p1735) target = $region48
      $region47: #{simple_cnn_forward.4} parent=5 // pred_region
        %s1738 = ssub.s32 %s11, 2
        // Predicated region
        $region49: #{simple_cnn_forward.4} parent=47 // pred_check
          %p1739 = pneg %p108
        $region50: #{simple_cnn_forward.4} parent=47 // pred_check_branch
          %1741 = sbr.rel (%p1739) target = $region52
        $region51: #{simple_cnn_forward.4} parent=47 // pred_region
          %p1742 = scmp.lt.s32.totalorder %s17, 1
          %s1743 = scalar_select %p1742, %s17, 1
          %s1744 = smul.addr %s1743, 98
          %s1745 = smul.addr %s1744, 4
          %s1746 = scalar_lea.vmem %s3, %s1745
        $region52: #{simple_cnn_forward.4} parent=47 // pred_fallthru
          _
      $region48: #{simple_cnn_forward.4} parent=5 // pred_fallthru
        _
    $region6: #{simple_cnn_forward.4} parent=1 // loop_footer
      %s15 = sadd.s32 1, %s11
    $region7: #{simple_cnn_forward.4} parent=1 // loop_footer_branch
      %10 = sbr.rel target = $region3
    $region8: #{simple_cnn_forward.4} parent=1 // loop_exit
      _
    %1747 = vsyncpa [#allocation3], 1
    %s1748 = scalar_lea.sflag [#allocation3], 1
    %1749 = vsyncpa %s1748, 1
    %1750 = vsyncpa [#allocation5], 1

// kernel: simple_cnn_forward.5
$region0: #{simple_cnn_forward.5}
  #allocation0 [shape = 'u32[]', space=smem, size = 0x4, offset = 0x4, fixed_abs, tag = 'smem constant byte address 0x4 - core index']
  #allocation1 [shape = 'u32[144,128]{1,0:T(1,128)}', space=vmem, size = 0x12000, scoped, tag = 'internal scratch']
  %s0 = inlined_call_operand.vmem [shape: bf16[2,4,196,288], index: 0, kind: input, shape index: {}]
  %s1 = inlined_call_operand.vmem [shape: bf16[288,64], index: 1, kind: input, shape index: {}]
  %s2 = inlined_call_operand.vmem [shape: f32[1,64], index: 2, kind: input, shape index: {}]
  %s3 = inlined_call_operand.vmem [shape: bf16[2,196,64], index: 3, kind: output, shape index: {}]
  %s4 = sld [smem:[#allocation0]]
  $region45: #{simple_cnn_forward.5} parent=0
    _
  %s6 = ssub.s32 1, %s4
  %s7 = scalar_select 0, %s6, %s4
  loop: start=0, step=1, limit=4
  $region2: #{simple_cnn_forward.5} parent=0 // loop_pre_header
    _
  $region3: #{simple_cnn_forward.5} parent=0 // loop_header
    %s9 = sphi 0, %s13
    %p10 = scmp.ge.s32.totalorder %s9, 4
    %s19 = sphi 0, %s21
    %s22 = sphi 0, %s19
    %s23 = sphi 0, %s22
    %s39 = sphi 0, %s23
    %s43 = sphi 0, %s43
    %s45 = sphi 0, %s43
    %s46 = sphi 0, %s45
    %s60 = sphi 0, %s46
    %s64 = sphi 0, %s64
    %s66 = sphi 0, %s64
    %s67 = sphi 0, %s66
    %s81 = sphi 0, %s67
    %s87 = sphi 0, %s89
    %s90 = sphi 0, %s87
    %s91 = sphi 0, %s90
    %s107 = sphi 0, %s91
  $region4: #{simple_cnn_forward.5} parent=0 // loop_header_branch
    %12 = sbr.rel (%p10) target = $region8
  $region5: #{simple_cnn_forward.5} parent=0 // loop_body
    %s14 = ssub.s32 %s9, 1
    %s15 = ssub.s32 %s9, 2
    %s16 = sadd.s32 %s9, 1
    %s17 = ssub.s32 %s9, %s16
    %p18 = scmp.eq.s32.totalorder %s17, 0
    %s20 = sadd.s32 %s19, 1
    %s21 = scalar_select %p18, %s19, %s20
    %p24 = pneg %p18
    %p25 = scmp.eq.s32.totalorder %s9, 1
    %p26 = por %p24, %p25
    %p27 = scmp.ne.s32.totalorder %s19, %s22
    %p28 = scmp.eq.s32.totalorder %s9, 0
    %p29 = por %p27, %p28
    %p30 = scmp.ne.s32.totalorder %s19, %s22
    %p31 = scmp.eq.s32.totalorder %s14, 1
    %p32 = por %p30, %p31
    %p33 = scmp.ne.s32.totalorder %s22, %s23
    %p34 = scmp.eq.s32.totalorder %s14, 0
    %p35 = por %p33, %p34
    %p36 = scmp.ne.s32.totalorder %s22, %s23
    %p37 = scmp.eq.s32.totalorder %s15, 1
    %p38 = por %p36, %p37
    %p40 = scmp.ne.s32.totalorder %s23, %s39
    %p41 = scmp.eq.s32.totalorder %s15, 0
    %p42 = por %p40, %p41
    %s44 = sadd.s32 %s43, 1
    %p47 = scmp.eq.s32.totalorder %s9, 1
    %p48 = scmp.ne.s32.totalorder %s43, %s45
    %p49 = scmp.eq.s32.totalorder %s9, 0
    %p50 = por %p48, %p49
    %p51 = scmp.ne.s32.totalorder %s43, %s45
    %p52 = scmp.eq.s32.totalorder %s14, 1
    %p53 = por %p51, %p52
    %p54 = scmp.ne.s32.totalorder %s45, %s46
    %p55 = scmp.eq.s32.totalorder %s14, 0
    %p56 = por %p54, %p55
    %p57 = scmp.ne.s32.totalorder %s45, %s46
    %p58 = scmp.eq.s32.totalorder %s15, 1
    %p59 = por %p57, %p58
    %p61 = scmp.ne.s32.totalorder %s46, %s60
    %p62 = scmp.eq.s32.totalorder %s15, 0
    %p63 = por %p61, %p62
    %s65 = sadd.s32 %s64, 1
    %p68 = scmp.eq.s32.totalorder %s9, 1
    %p69 = scmp.ne.s32.totalorder %s64, %s66
    %p70 = scmp.eq.s32.totalorder %s9, 0
    %p71 = por %p69, %p70
    %p72 = scmp.ne.s32.totalorder %s64, %s66
    %p73 = scmp.eq.s32.totalorder %s14, 1
    %p74 = por %p72, %p73
    %p75 = scmp.ne.s32.totalorder %s66, %s67
    %p76 = scmp.eq.s32.totalorder %s14, 0
    %p77 = por %p75, %p76
    %p78 = scmp.ne.s32.totalorder %s66, %s67
    %p79 = scmp.eq.s32.totalorder %s15, 1
    %p80 = por %p78, %p79
    %p82 = scmp.ne.s32.totalorder %s67, %s81
    %p83 = scmp.eq.s32.totalorder %s15, 0
    %p84 = por %p82, %p83
    %s85 = ssub.s32 %s9, %s16
    %p86 = scmp.eq.s32.totalorder %s85, 0
    %s88 = sadd.s32 %s87, 1
    %s89 = scalar_select %p86, %s87, %s88
    %p92 = pneg %p86
    %p93 = scmp.eq.s32.totalorder %s9, 1
    %p94 = por %p92, %p93
    %p95 = scmp.ne.s32.totalorder %s87, %s90
    %p96 = scmp.eq.s32.totalorder %s9, 0
    %p97 = por %p95, %p96
    %p98 = scmp.ne.s32.totalorder %s87, %s90
    %p99 = scmp.eq.s32.totalorder %s14, 1
    %p100 = por %p98, %p99
    %p101 = scmp.ne.s32.totalorder %s90, %s91
    %p102 = scmp.eq.s32.totalorder %s14, 0
    %p103 = por %p101, %p102
    %p104 = scmp.ne.s32.totalorder %s90, %s91
    %p105 = scmp.eq.s32.totalorder %s15, 1
    %p106 = por %p104, %p105
    %p108 = scmp.ne.s32.totalorder %s91, %s107
    %p109 = scmp.eq.s32.totalorder %s15, 0
    %p110 = por %p108, %p109
    %p111 = scmp.le.s32.totalorder 1, %s9
    %p112 = scmp.lt.s32.totalorder %s9, 3
    %p113 = pnand %p111, %p112
    %p114 = pneg %p113
    // Predicated region
    $region9: #{simple_cnn_forward.5} parent=5 // pred_check
      _
    $region10: #{simple_cnn_forward.5} parent=5 // pred_check_branch
      %116 = sbr.rel (%p113) target = $region12
    $region11: #{simple_cnn_forward.5} parent=5 // pred_region
      %s117 = ssub.s32 %s9, 1
      // Predicated region
      $region13: #{simple_cnn_forward.5} parent=11 // pred_check
        %p118 = pneg %p56
      $region14: #{simple_cnn_forward.5} parent=11 // pred_check_branch
        %120 = sbr.rel (%p118) target = $region16
      $region15: #{simple_cnn_forward.5} parent=11 // pred_region
        _
      $region16: #{simple_cnn_forward.5} parent=11 // pred_fallthru
        _
      // Predicated region
      $region17: #{simple_cnn_forward.5} parent=11 // pred_check
        %p121 = pneg %p77
      $region18: #{simple_cnn_forward.5} parent=11 // pred_check_branch
        %123 = sbr.rel (%p121) target = $region20
      $region19: #{simple_cnn_forward.5} parent=11 // pred_region
        _
      $region20: #{simple_cnn_forward.5} parent=11 // pred_fallthru
        _
    $region12: #{simple_cnn_forward.5} parent=5 // pred_fallthru
      _
    %p124 = scmp.lt.s32.totalorder %s9, 2
    // Predicated region
    $region21: #{simple_cnn_forward.5} parent=5 // pred_check
      %p125 = pneg %p124
    $region22: #{simple_cnn_forward.5} parent=5 // pred_check_branch
      %127 = sbr.rel (%p125) target = $region24
    $region23: #{simple_cnn_forward.5} parent=5 // pred_region
      // Predicated region
      $region25: #{simple_cnn_forward.5} parent=23 // pred_check
        %p128 = pneg %p29
      $region26: #{simple_cnn_forward.5} parent=23 // pred_check_branch
        %130 = sbr.rel (%p128) target = $region28
      $region27: #{simple_cnn_forward.5} parent=23 // pred_region
        %p131 = scmp.lt.s32.totalorder %s9, 1
        %s132 = scalar_select %p131, %s9, 1
        %s133 = smul.addr %s132, 300
        %s134 = smul.addr %s133, 4
        %s135 = scalar_lea.vmem %s0, %s134
      $region28: #{simple_cnn_forward.5} parent=23 // pred_fallthru
        _
    $region24: #{simple_cnn_forward.5} parent=5 // pred_fallthru
      _
    %p136 = scmp.le.s32.totalorder 1, %s9
    %p137 = scmp.lt.s32.totalorder %s9, 3
    %p138 = pnand %p136, %p137
    %p139 = pneg %p138
    // Predicated region
    $region29: #{simple_cnn_forward.5} parent=5 // pred_check
      _
    $region30: #{simple_cnn_forward.5} parent=5 // pred_check_branch
      %141 = sbr.rel (%p138) target = $region32
    $region31: #{simple_cnn_forward.5} parent=5 // pred_region
      %s142 = ssub.s32 %s9, 1
      %p143 = scmp.lt.s32.totalorder %s14, 1
      %s144 = scalar_select %p143, %s14, 1
      %s145 = smul.addr %s144, 300
      %s146 = smul.addr %s145, 4
      %s147 = scalar_lea.vmem %s0, %s146
      %p148 = pneg %p35
      %p149 = pneg %p32
      %p150 = pneg %p56
      %p151 = pneg %p53
      %p152 = pneg %p77
      %p153 = pneg %p74
      %p154 = pneg %p103
      %p155 = pneg %p100
      %p156 = scmp.lt.s32.totalorder %s14, 1
      %s157 = scalar_select %p156, %s14, 1
      %s158 = smul.addr %s157, 25
      %s159 = smul.addr %s158, 4
      %s160 = scalar_lea.vmem %s3, %s159
      %p161 = scmp.lt.s32.totalorder %s14, 1
      %s162 = scalar_select %p161, %s14, 1
      %s163 = smul.addr %s162, 300
      %s164 = smul.addr %s163, 4
      %s165 = scalar_lea.vmem %s0, %s164
      %p166 = scmp.lt.s32.totalorder %s14, 1
      %s167 = scalar_select %p166, %s14, 1
      %s168 = smul.addr %s167, 25
      %s169 = smul.addr %s168, 4
      %s170 = scalar_lea.vmem %s3, %s169
      %v172 = vld [vmem:[%s1] sm:$0xf]
      %v173 = vld [vmem:[%s1 + $0x4] sm:$0xf]
      %v174 = vld [vmem:[%s1 + $0x8] sm:$0xf]
      %v175 = vld [vmem:[%s1 + $0xc] sm:$0xf]
      %v176 = vld [vmem:[%s1 + $0x10] sm:$0xf]
      %v177 = vld [vmem:[%s1 + $0x14] sm:$0xf]
      %v178 = vld [vmem:[%s1 + $0x18] sm:$0xf]
      %v179 = vld [vmem:[%s1 + $0x1c] sm:$0xf]
      %v180 = vld [vmem:[%s1 + $0x20] sm:$0xf]
      %v181 = vld [vmem:[%s1 + $0x24] sm:$0xf]
      %v182 = vld [vmem:[%s1 + $0x28] sm:$0xf]
      %v183 = vld [vmem:[%s1 + $0x2c] sm:$0xf]
      %v184 = vld [vmem:[%s1 + $0x30] sm:$0xf]
      %v185 = vld [vmem:[%s1 + $0x34] sm:$0xf]
      %v186 = vld [vmem:[%s1 + $0x38] sm:$0xf]
      %v187 = vld [vmem:[%s1 + $0x3c] sm:$0xf]
      %v188 = vld [vmem:[%s1 + $0x40] sm:$0xf]
      %v189 = vld [vmem:[%s1 + $0x44] sm:$0xf]
      %v190 = vld [vmem:[%s1 + $0x48] sm:$0xf]
      %v191 = vld [vmem:[%s1 + $0x4c] sm:$0xf]
      %v192 = vld [vmem:[%s1 + $0x50] sm:$0xf]
      %v193 = vld [vmem:[%s1 + $0x54] sm:$0xf]
      %v194 = vld [vmem:[%s1 + $0x58] sm:$0xf]
      %v195 = vld [vmem:[%s1 + $0x5c] sm:$0xf]
      %v196 = vld [vmem:[%s1 + $0x60] sm:$0xf]
      %v197 = vld [vmem:[%s1 + $0x64] sm:$0xf]
      %v198 = vld [vmem:[%s1 + $0x68] sm:$0xf]
      %v199 = vld [vmem:[%s1 + $0x6c] sm:$0xf]
      %v200 = vld [vmem:[%s1 + $0x70] sm:$0xf]
      %v201 = vld [vmem:[%s1 + $0x74] sm:$0xf]
      %v202 = vld [vmem:[%s1 + $0x78] sm:$0xf]
      %v203 = vld [vmem:[%s1 + $0x7c] sm:$0xf]
      %v204 = vld [vmem:[%s1 + $0x80] sm:$0xf]
      %v205 = vld [vmem:[%s1 + $0x84] sm:$0xf]
      %v206 = vld [vmem:[%s1 + $0x88] sm:$0xf]
      %v207 = vld [vmem:[%s1 + $0x8c] sm:$0xf]
      %v208 = vld [vmem:[%s165] sm:$0xff]
      %v209 = vld [vmem:[%s165 + $0x8] sm:$0xf]
      %v210 = vld [vmem:[%s165 + $0xc] sm:$0xff]
      %v211 = vld [vmem:[%s165 + $0x14] sm:$0xf]
      %v212 = vld [vmem:[%s165 + $0x18] sm:$0xff]
      %v213 = vld [vmem:[%s165 + $0x20] sm:$0xf]
      %v214 = vld [vmem:[%s165 + $0x24] sm:$0xff]
      %v215 = vld [vmem:[%s165 + $0x2c] sm:$0xf]
      %v216 = vld [vmem:[%s165 + $0x30] sm:$0xff]
      %v217 = vld [vmem:[%s165 + $0x38] sm:$0xf]
      %v218 = vld [vmem:[%s165 + $0x3c] sm:$0xff]
      %v219 = vld [vmem:[%s165 + $0x44] sm:$0xf]
      %v220 = vld [vmem:[%s165 + $0x48] sm:$0xff]
      %v221 = vld [vmem:[%s165 + $0x50] sm:$0xf]
      %v222 = vld [vmem:[%s165 + $0x54] sm:$0xff]
      %v223 = vld [vmem:[%s165 + $0x5c] sm:$0xf]
      %v224 = vld [vmem:[%s165 + $0x60] sm:$0xff]
      %v225 = vld [vmem:[%s165 + $0x68] sm:$0xf]
      %v226 = vld [vmem:[%s165 + $0x6c] sm:$0xff]
      %v227 = vld [vmem:[%s165 + $0x74] sm:$0xf]
      %v228 = vld [vmem:[%s165 + $0x78] sm:$0xff]
      %v229 = vld [vmem:[%s165 + $0x80] sm:$0xf]
      %v230 = vld [vmem:[%s165 + $0x84] sm:$0xff]
      %v231 = vld [vmem:[%s165 + $0x8c] sm:$0xf]
      %v232 = vld [vmem:[%s165 + $0x90] sm:$0xff]
      %v233 = vld [vmem:[%s165 + $0x98] sm:$0xf]
      %v234 = vld [vmem:[%s165 + $0x9c] sm:$0xff]
      %v235 = vld [vmem:[%s165 + $0xa4] sm:$0xf]
      %v236 = vld [vmem:[%s165 + $0xa8] sm:$0xff]
      %v237 = vld [vmem:[%s165 + $0xb0] sm:$0xf]
      %v238 = vld [vmem:[%s165 + $0xb4] sm:$0xff]
      %v239 = vld [vmem:[%s165 + $0xbc] sm:$0xf]
      %v240 = vld [vmem:[%s165 + $0xc0] sm:$0xff]
      %v241 = vld [vmem:[%s165 + $0xc8] sm:$0xf]
      %v242 = vld [vmem:[%s165 + $0xcc] sm:$0xff]
      %v243 = vld [vmem:[%s165 + $0xd4] sm:$0xf]
      %v244 = vld [vmem:[%s165 + $0xd8] sm:$0xff]
      %v245 = vld [vmem:[%s165 + $0xe0] sm:$0xf]
      %v246 = vld [vmem:[%s165 + $0xe4] sm:$0xff]
      %v247 = vld [vmem:[%s165 + $0xec] sm:$0xf]
      %v248 = vld [vmem:[%s165 + $0xf0] sm:$0xff]
      %v249 = vld [vmem:[%s165 + $0xf8] sm:$0xf]
      %v250 = vld [vmem:[%s165 + $0xfc] sm:$0xff]
      %v251 = vld [vmem:[%s165 + $0x104] sm:$0xf]
      %v252 = vld [vmem:[%s165 + $0x108] sm:$0xff]
      %v253 = vld [vmem:[%s165 + $0x110] sm:$0xf]
      %v254 = vld [vmem:[%s165 + $0x114] sm:$0xff]
      %v255 = vld [vmem:[%s165 + $0x11c] sm:$0xf]
      %v256 = vld [vmem:[%s165 + $0x120] sm:$0x33]
      %v257 = vld [vmem:[%s165 + $0x128] sm:$0x3]
      %v308 = vunpack.c.l.b16 %v208
      %v309 = vunpack.c.h.b16 %v208
      %v310 = vunpack.c.l.b16 %v209
      %v311 = vunpack.c.l.b16 %v210
      %v312 = vunpack.c.h.b16 %v210
      %v313 = vunpack.c.l.b16 %v211
      %v314 = vunpack.c.l.b16 %v212
      %v315 = vunpack.c.h.b16 %v212
      %v316 = vunpack.c.l.b16 %v213
      %v317 = vunpack.c.l.b16 %v214
      %v318 = vunpack.c.h.b16 %v214
      %v319 = vunpack.c.l.b16 %v215
      %v320 = vunpack.c.l.b16 %v216
      %v321 = vunpack.c.h.b16 %v216
      %v322 = vunpack.c.l.b16 %v217
      %v323 = vunpack.c.l.b16 %v218
      %v324 = vunpack.c.h.b16 %v218
      %v325 = vunpack.c.l.b16 %v219
      %v326 = vunpack.c.l.b16 %v220
      %v327 = vunpack.c.h.b16 %v220
      %v328 = vunpack.c.l.b16 %v221
      %v329 = vunpack.c.l.b16 %v222
      %v330 = vunpack.c.h.b16 %v222
      %v331 = vunpack.c.l.b16 %v223
      %v332 = vunpack.c.l.b16 %v224
      %v333 = vunpack.c.h.b16 %v224
      %v334 = vunpack.c.l.b16 %v225
      %v335 = vunpack.c.l.b16 %v226
      %v336 = vunpack.c.h.b16 %v226
      %v337 = vunpack.c.l.b16 %v227
      %v338 = vunpack.c.l.b16 %v228
      %v339 = vunpack.c.h.b16 %v228
      %v340 = vunpack.c.l.b16 %v229
      %v341 = vunpack.c.l.b16 %v230
      %v342 = vunpack.c.h.b16 %v230
      %v343 = vunpack.c.l.b16 %v231
      %v344 = vunpack.c.l.b16 %v232
      %v345 = vunpack.c.h.b16 %v232
      %v346 = vunpack.c.l.b16 %v233
      %v347 = vunpack.c.l.b16 %v234
      %v348 = vunpack.c.h.b16 %v234
      %v349 = vunpack.c.l.b16 %v235
      %v350 = vunpack.c.l.b16 %v236
      %v351 = vunpack.c.h.b16 %v236
      %v352 = vunpack.c.l.b16 %v237
      %v353 = vunpack.c.l.b16 %v238
      %v354 = vunpack.c.h.b16 %v238
      %v355 = vunpack.c.l.b16 %v239
      %v356 = vunpack.c.l.b16 %v240
      %v357 = vunpack.c.h.b16 %v240
      %v358 = vunpack.c.l.b16 %v241
      %v359 = vunpack.c.l.b16 %v242
      %v360 = vunpack.c.h.b16 %v242
      %v361 = vunpack.c.l.b16 %v243
      %v362 = vunpack.c.l.b16 %v244
      %v363 = vunpack.c.h.b16 %v244
      %v364 = vunpack.c.l.b16 %v245
      %v365 = vunpack.c.l.b16 %v246
      %v366 = vunpack.c.h.b16 %v246
      %v367 = vunpack.c.l.b16 %v247
      %v368 = vunpack.c.l.b16 %v248
      %v369 = vunpack.c.h.b16 %v248
      %v370 = vunpack.c.l.b16 %v249
      %v371 = vunpack.c.l.b16 %v250
      %v372 = vunpack.c.h.b16 %v250
      %v373 = vunpack.c.l.b16 %v251
      %v374 = vunpack.c.l.b16 %v252
      %v375 = vunpack.c.h.b16 %v252
      %v376 = vunpack.c.l.b16 %v253
      %v377 = vunpack.c.l.b16 %v254
      %v378 = vunpack.c.h.b16 %v254
      %v379 = vunpack.c.l.b16 %v255
      %v380 = vunpack.c.l.b16 %v256
      %v381 = vunpack.c.h.b16 %v256
      %v382 = vunpack.c.l.b16 %v257
      %v383 = vpack.c.b16 %v311, %v308
      %v384 = vpack.c.b16 %v312, %v309
      %v385 = vpack.c.b16 %v313, %v310
      %v386 = vpack.c.b16 %v317, %v314
      %v387 = vpack.c.b16 %v318, %v315
      %v388 = vpack.c.b16 %v319, %v316
      %v389 = vpack.c.b16 %v323, %v320
      %v390 = vpack.c.b16 %v324, %v321
      %v391 = vpack.c.b16 %v325, %v322
      %v392 = vpack.c.b16 %v329, %v326
      %v393 = vpack.c.b16 %v330, %v327
      %v394 = vpack.c.b16 %v331, %v328
      %v395 = vpack.c.b16 %v335, %v332
      %v396 = vpack.c.b16 %v336, %v333
      %v397 = vpack.c.b16 %v337, %v334
      %v398 = vpack.c.b16 %v341, %v338
      %v399 = vpack.c.b16 %v342, %v339
      %v400 = vpack.c.b16 %v343, %v340
      %v401 = vpack.c.b16 %v347, %v344
      %v402 = vpack.c.b16 %v348, %v345
      %v403 = vpack.c.b16 %v349, %v346
      %v404 = vpack.c.b16 %v353, %v350
      %v405 = vpack.c.b16 %v354, %v351
      %v406 = vpack.c.b16 %v355, %v352
      %v407 = vpack.c.b16 %v359, %v356
      %v408 = vpack.c.b16 %v360, %v357
      %v409 = vpack.c.b16 %v361, %v358
      %v410 = vpack.c.b16 %v365, %v362
      %v411 = vpack.c.b16 %v366, %v363
      %v412 = vpack.c.b16 %v367, %v364
      %v413 = vpack.c.b16 %v371, %v368
      %v414 = vpack.c.b16 %v372, %v369
      %v415 = vpack.c.b16 %v373, %v370
      %v416 = vpack.c.b16 %v377, %v374
      %v417 = vpack.c.b16 %v378, %v375
      %v418 = vpack.c.b16 %v379, %v376
      %v419 = vpack.c.b16 %v380, %v380
      %v420 = vpack.c.b16 %v381, %v381
      %v421 = vpack.c.b16 %v382, %v382
      %v484 = vunpack.c.l.b16 %v172
      %v485 = vunpack.c.l.b16 %v173
      %v486 = vunpack.c.l.b16 %v174
      %v487 = vunpack.c.l.b16 %v175
      %v488 = vunpack.c.l.b16 %v176
      %v489 = vunpack.c.l.b16 %v177
      %v490 = vunpack.c.l.b16 %v178
      %v491 = vunpack.c.l.b16 %v179
      %v492 = vunpack.c.l.b16 %v180
      %v493 = vunpack.c.l.b16 %v181
      %v494 = vunpack.c.l.b16 %v182
      %v495 = vunpack.c.l.b16 %v183
      %v496 = vunpack.c.l.b16 %v184
      %v497 = vunpack.c.l.b16 %v185
      %v498 = vunpack.c.l.b16 %v186
      %v499 = vunpack.c.l.b16 %v187
      %v500 = vunpack.c.l.b16 %v188
      %v501 = vunpack.c.l.b16 %v189
      %v502 = vunpack.c.l.b16 %v190
      %v503 = vunpack.c.l.b16 %v191
      %v504 = vunpack.c.l.b16 %v192
      %v505 = vunpack.c.l.b16 %v193
      %v506 = vunpack.c.l.b16 %v194
      %v507 = vunpack.c.l.b16 %v195
      %v508 = vunpack.c.l.b16 %v196
      %v509 = vunpack.c.l.b16 %v197
      %v510 = vunpack.c.l.b16 %v198
      %v511 = vunpack.c.l.b16 %v199
      %v512 = vunpack.c.l.b16 %v200
      %v513 = vunpack.c.l.b16 %v201
      %v514 = vunpack.c.l.b16 %v202
      %v515 = vunpack.c.l.b16 %v203
      %v516 = vunpack.c.l.b16 %v204
      %v517 = vunpack.c.l.b16 %v205
      %v518 = vunpack.c.l.b16 %v206
      %v519 = vunpack.c.l.b16 %v207
      %v520 = vpack.c.b16 %v485, %v484
      %v521 = vpack.c.b16 %v487, %v486
      %v522 = vpack.c.b16 %v489, %v488
      %v523 = vpack.c.b16 %v491, %v490
      %v524 = vpack.c.b16 %v493, %v492
      %v525 = vpack.c.b16 %v495, %v494
      %v526 = vpack.c.b16 %v497, %v496
      %v527 = vpack.c.b16 %v499, %v498
      %v528 = vpack.c.b16 %v501, %v500
      %v529 = vpack.c.b16 %v503, %v502
      %v530 = vpack.c.b16 %v505, %v504
      %v531 = vpack.c.b16 %v507, %v506
      %v532 = vpack.c.b16 %v509, %v508
      %v533 = vpack.c.b16 %v511, %v510
      %v534 = vpack.c.b16 %v513, %v512
      %v535 = vpack.c.b16 %v515, %v514
      %v536 = vpack.c.b16 %v517, %v516
      %v537 = vpack.c.b16 %v519, %v518
      %vm556 = vcmask 261120
      %v558 = vsel %vm556, %v385, 0
      %v561 = vsel %vm556, %v388, 0
      %v564 = vsel %vm556, %v391, 0
      %v567 = vsel %vm556, %v394, 0
      %v570 = vsel %vm556, %v397, 0
      %v573 = vsel %vm556, %v400, 0
      %v576 = vsel %vm556, %v403, 0
      %v579 = vsel %vm556, %v406, 0
      %v582 = vsel %vm556, %v409, 0
      %v585 = vsel %vm556, %v412, 0
      %v588 = vsel %vm556, %v415, 0
      %v591 = vsel %vm556, %v418, 0
      %v594 = vsel %vm556, %v421, 0
      %596 = vmatprep.subr.bf16.mxu0 0
      %597 = vmatpush1.bf16.msra.mxu0 %v527
      %598 = vmatprep.subr.bf16.mxu0 0
      %599 = vmatpush1.bf16.msra.mxu0 %v526
      %600 = vmatprep.subr.bf16.mxu0 0
      %601 = vmatpush1.bf16.msra.mxu0 %v525
      %602 = vmatprep.subr.bf16.mxu0 0
      %603 = vmatpush1.bf16.msra.mxu0 %v524
      %604 = vmatprep.subr.bf16.mxu0 0
      %605 = vmatpush1.bf16.msra.mxu0 %v523
      %606 = vmatprep.subr.bf16.mxu0 0
      %607 = vmatpush1.bf16.msra.mxu0 %v522
      %608 = vmatprep.subr.bf16.mxu0 0
      %609 = vmatpush1.bf16.msra.mxu0 %v521
      %610 = vmatprep.subr.bf16.mxu0 0
      %611 = vmatpush1.bf16.msra.mxu0 %v520
      %612 = vmatprep.subr.bf16.mxu0 0
      %613 = vmatpush2.bf16.msra.mxu0 %v535
      %614 = vmatprep.subr.bf16.mxu0 0
      %615 = vmatpush2.bf16.msra.mxu0 %v534
      %616 = vmatprep.subr.bf16.mxu0 0
      %617 = vmatpush2.bf16.msra.mxu0 %v533
      %618 = vmatprep.subr.bf16.mxu0 0
      %619 = vmatpush2.bf16.msra.mxu0 %v532
      %620 = vmatprep.subr.bf16.mxu0 0
      %621 = vmatpush2.bf16.msra.mxu0 %v531
      %622 = vmatprep.subr.bf16.mxu0 0
      %623 = vmatpush2.bf16.msra.mxu0 %v530
      %624 = vmatprep.subr.bf16.mxu0 0
      %625 = vmatpush2.bf16.msra.mxu0 %v529
      %626 = vmatprep.subr.bf16.mxu0 0
      %627 = vmatpush2.bf16.msra.mxu0 %v528
      %628 = vmatprep.mubr.bf16.mxu0 %v384
      %629 = vmatmul.mubr.bf16.gmra.mxu0 %v383
      %v630 = vpop.f32.mrf.mxu0
      %v631 = vadd.f32 0.0, %v630
      %v632 = vpop.f32.mrf.mxu0
      %v633 = vpop.f32.mrf.mxu0
      %v634 = vadd.f32 0.0, %v633
      %v635 = vpop.f32.mrf.mxu0
      %636 = vmatprep.mubr.bf16.mxu0 %v387
      %637 = vmatmul.mubr.bf16.gmra.mxu0 %v386
      %v638 = vpop.f32.mrf.mxu0
      %v639 = vadd.f32 0.0, %v638
      %v640 = vpop.f32.mrf.mxu0
      %v641 = vpop.f32.mrf.mxu0
      %v642 = vadd.f32 0.0, %v641
      %v643 = vpop.f32.mrf.mxu0
      %644 = vmatprep.mubr.bf16.mxu0 %v390
      %645 = vmatmul.mubr.bf16.gmra.mxu0 %v389
      %v646 = vpop.f32.mrf.mxu0
      %v647 = vadd.f32 0.0, %v646
      %v648 = vpop.f32.mrf.mxu0
      %v649 = vpop.f32.mrf.mxu0
      %v650 = vadd.f32 0.0, %v649
      %v651 = vpop.f32.mrf.mxu0
      %652 = vmatprep.mubr.bf16.mxu0 %v393
      %653 = vmatmul.mubr.bf16.gmra.mxu0 %v392
      %v654 = vpop.f32.mrf.mxu0
      %v655 = vadd.f32 0.0, %v654
      %v656 = vpop.f32.mrf.mxu0
      %v657 = vpop.f32.mrf.mxu0
      %v658 = vadd.f32 0.0, %v657
      %v659 = vpop.f32.mrf.mxu0
      %660 = vmatprep.mubr.bf16.mxu0 %v396
      %661 = vmatmul.mubr.bf16.gmra.mxu0 %v395
      %v662 = vpop.f32.mrf.mxu0
      %v663 = vadd.f32 0.0, %v662
      %v664 = vpop.f32.mrf.mxu0
      %v665 = vpop.f32.mrf.mxu0
      %v666 = vadd.f32 0.0, %v665
      %v667 = vpop.f32.mrf.mxu0
      %668 = vmatprep.mubr.bf16.mxu0 %v399
      %669 = vmatmul.mubr.bf16.gmra.mxu0 %v398
      %v670 = vpop.f32.mrf.mxu0
      %v671 = vadd.f32 0.0, %v670
      %v672 = vpop.f32.mrf.mxu0
      %v673 = vpop.f32.mrf.mxu0
      %v674 = vadd.f32 0.0, %v673
      %v675 = vpop.f32.mrf.mxu0
      %676 = vmatprep.mubr.bf16.mxu0 %v402
      %677 = vmatmul.mubr.bf16.gmra.mxu0 %v401
      %v678 = vpop.f32.mrf.mxu0
      %v679 = vadd.f32 0.0, %v678
      %v680 = vpop.f32.mrf.mxu0
      %v681 = vpop.f32.mrf.mxu0
      %v682 = vadd.f32 0.0, %v681
      %v683 = vpop.f32.mrf.mxu0
      %684 = vmatprep.mubr.bf16.mxu0 %v405
      %685 = vmatmul.mubr.bf16.gmra.mxu0 %v404
      %v686 = vpop.f32.mrf.mxu0
      %v687 = vadd.f32 0.0, %v686
      %v688 = vpop.f32.mrf.mxu0
      %v689 = vpop.f32.mrf.mxu0
      %v690 = vadd.f32 0.0, %v689
      %v691 = vpop.f32.mrf.mxu0
      %692 = vmatprep.mubr.bf16.mxu0 %v408
      %693 = vmatmul.mubr.bf16.gmra.mxu0 %v407
      %v694 = vpop.f32.mrf.mxu0
      %v695 = vadd.f32 0.0, %v694
      %v696 = vpop.f32.mrf.mxu0
      %v697 = vpop.f32.mrf.mxu0
      %v698 = vadd.f32 0.0, %v697
      %v699 = vpop.f32.mrf.mxu0
      %700 = vmatprep.mubr.bf16.mxu0 %v411
      %701 = vmatmul.mubr.bf16.gmra.mxu0 %v410
      %v702 = vpop.f32.mrf.mxu0
      %v703 = vadd.f32 0.0, %v702
      %v704 = vpop.f32.mrf.mxu0
      %v705 = vpop.f32.mrf.mxu0
      %v706 = vadd.f32 0.0, %v705
      %v707 = vpop.f32.mrf.mxu0
      %708 = vmatprep.mubr.bf16.mxu0 %v414
      %709 = vmatmul.mubr.bf16.gmra.mxu0 %v413
      %v710 = vpop.f32.mrf.mxu0
      %v711 = vadd.f32 0.0, %v710
      %v712 = vpop.f32.mrf.mxu0
      %v713 = vpop.f32.mrf.mxu0
      %v714 = vadd.f32 0.0, %v713
      %v715 = vpop.f32.mrf.mxu0
      %716 = vmatprep.mubr.bf16.mxu0 %v417
      %717 = vmatmul.mubr.bf16.gmra.mxu0 %v416
      %v718 = vpop.f32.mrf.mxu0
      %v719 = vadd.f32 0.0, %v718
      %v720 = vpop.f32.mrf.mxu0
      %v721 = vpop.f32.mrf.mxu0
      %v722 = vadd.f32 0.0, %v721
      %v723 = vpop.f32.mrf.mxu0
      %724 = vmatprep.mubr.bf16.mxu0 %v420
      %725 = vmatmul.mubr.bf16.gmra.mxu0 %v419
      %v726 = vpop.f32.mrf.mxu0
      %v727 = vadd.f32 0.0, %v726
      %v728 = vpop.f32.mrf.mxu0
      %v729 = vpop.f32.mrf.mxu0
      %v730 = vpop.f32.mrf.mxu0
      %731 = vdwg.mxu0
      %732 = vmatprep.subr.bf16.mxu0 0
      %733 = vmatpush1.bf16.msra.mxu0 0
      %734 = vmatprep.subr.bf16.mxu0 0
      %735 = vmatpush1.bf16.msra.mxu0 0
      %736 = vmatprep.subr.bf16.mxu0 0
      %737 = vmatpush1.bf16.msra.mxu0 0
      %738 = vmatprep.subr.bf16.mxu0 0
      %739 = vmatpush1.bf16.msra.mxu0 0
      %740 = vmatprep.subr.bf16.mxu0 0
      %741 = vmatpush1.bf16.msra.mxu0 0
      %742 = vmatprep.subr.bf16.mxu0 0
      %743 = vmatpush1.bf16.msra.mxu0 0
      %744 = vmatprep.subr.bf16.mxu0 0
      %745 = vmatpush1.bf16.msra.mxu0 %v537
      %746 = vmatprep.subr.bf16.mxu0 0
      %747 = vmatpush1.bf16.msra.mxu0 %v536
      %748 = vmatprep.subr.bf16.mxu0 0
      %749 = vmatpush2.bf16.msra.mxu0 0
      %750 = vmatprep.subr.bf16.mxu0 0
      %751 = vmatpush2.bf16.msra.mxu0 0
      %752 = vmatprep.subr.bf16.mxu0 0
      %753 = vmatpush2.bf16.msra.mxu0 0
      %754 = vmatprep.subr.bf16.mxu0 0
      %755 = vmatpush2.bf16.msra.mxu0 0
      %756 = vmatprep.subr.bf16.mxu0 0
      %757 = vmatpush2.bf16.msra.mxu0 0
      %758 = vmatprep.subr.bf16.mxu0 0
      %759 = vmatpush2.bf16.msra.mxu0 0
      %760 = vmatprep.subr.bf16.mxu0 0
      %761 = vmatpush2.bf16.msra.mxu0 0
      %762 = vmatprep.subr.bf16.mxu0 0
      %763 = vmatpush2.bf16.msra.mxu0 0
      %764 = vmatprep.mubr.bf16.mxu0 0
      %765 = vmatmul.mubr.bf16.gmra.mxu0 %v558
      %v766 = vpop.f32.mrf.mxu0
      %v767 = vadd.f32 %v631, %v766
      %v768 = vpop.f32.mrf.mxu0
      %v769 = vpop.f32.mrf.mxu0
      %v770 = vadd.f32 %v634, %v769
      %v771 = vpop.f32.mrf.mxu0
      %772 = vmatprep.mubr.bf16.mxu0 0
      %773 = vmatmul.mubr.bf16.gmra.mxu0 %v561
      %v774 = vpop.f32.mrf.mxu0
      %v775 = vadd.f32 %v639, %v774
      %v776 = vpop.f32.mrf.mxu0
      %v777 = vpop.f32.mrf.mxu0
      %v778 = vadd.f32 %v642, %v777
      %v779 = vpop.f32.mrf.mxu0
      %780 = vmatprep.mubr.bf16.mxu0 0
      %781 = vmatmul.mubr.bf16.gmra.mxu0 %v564
      %v782 = vpop.f32.mrf.mxu0
      %v783 = vadd.f32 %v647, %v782
      %v784 = vpop.f32.mrf.mxu0
      %v785 = vpop.f32.mrf.mxu0
      %v786 = vadd.f32 %v650, %v785
      %v787 = vpop.f32.mrf.mxu0
      %788 = vmatprep.mubr.bf16.mxu0 0
      %789 = vmatmul.mubr.bf16.gmra.mxu0 %v567
      %v790 = vpop.f32.mrf.mxu0
      %v791 = vadd.f32 %v655, %v790
      %v792 = vpop.f32.mrf.mxu0
      %v793 = vpop.f32.mrf.mxu0
      %v794 = vadd.f32 %v658, %v793
      %v795 = vpop.f32.mrf.mxu0
      %796 = vmatprep.mubr.bf16.mxu0 0
      %797 = vmatmul.mubr.bf16.gmra.mxu0 %v570
      %v798 = vpop.f32.mrf.mxu0
      %v799 = vadd.f32 %v663, %v798
      %v800 = vpop.f32.mrf.mxu0
      %v801 = vpop.f32.mrf.mxu0
      %v802 = vadd.f32 %v666, %v801
      %v803 = vpop.f32.mrf.mxu0
      %804 = vmatprep.mubr.bf16.mxu0 0
      %805 = vmatmul.mubr.bf16.gmra.mxu0 %v573
      %v806 = vpop.f32.mrf.mxu0
      %v807 = vadd.f32 %v671, %v806
      %v808 = vpop.f32.mrf.mxu0
      %v809 = vpop.f32.mrf.mxu0
      %v810 = vadd.f32 %v674, %v809
      %v811 = vpop.f32.mrf.mxu0
      %812 = vmatprep.mubr.bf16.mxu0 0
      %813 = vmatmul.mubr.bf16.gmra.mxu0 %v576
      %v814 = vpop.f32.mrf.mxu0
      %v815 = vadd.f32 %v679, %v814
      %v816 = vpop.f32.mrf.mxu0
      %v817 = vpop.f32.mrf.mxu0
      %v818 = vadd.f32 %v682, %v817
      %v819 = vpop.f32.mrf.mxu0
      %820 = vmatprep.mubr.bf16.mxu0 0
      %821 = vmatmul.mubr.bf16.gmra.mxu0 %v579
      %v822 = vpop.f32.mrf.mxu0
      %v823 = vadd.f32 %v687, %v822
      %v824 = vpop.f32.mrf.mxu0
      %v825 = vpop.f32.mrf.mxu0
      %v826 = vadd.f32 %v690, %v825
      %v827 = vpop.f32.mrf.mxu0
      %828 = vmatprep.mubr.bf16.mxu0 0
      %829 = vmatmul.mubr.bf16.gmra.mxu0 %v582
      %v830 = vpop.f32.mrf.mxu0
      %v831 = vadd.f32 %v695, %v830
      %v832 = vpop.f32.mrf.mxu0
      %v833 = vpop.f32.mrf.mxu0
      %v834 = vadd.f32 %v698, %v833
      %v835 = vpop.f32.mrf.mxu0
      %836 = vmatprep.mubr.bf16.mxu0 0
      %837 = vmatmul.mubr.bf16.gmra.mxu0 %v585
      %v838 = vpop.f32.mrf.mxu0
      %v839 = vadd.f32 %v703, %v838
      %v840 = vpop.f32.mrf.mxu0
      %v841 = vpop.f32.mrf.mxu0
      %v842 = vadd.f32 %v706, %v841
      %v843 = vpop.f32.mrf.mxu0
      %844 = vmatprep.mubr.bf16.mxu0 0
      %845 = vmatmul.mubr.bf16.gmra.mxu0 %v588
      %v846 = vpop.f32.mrf.mxu0
      %v847 = vadd.f32 %v711, %v846
      %v848 = vpop.f32.mrf.mxu0
      %v849 = vpop.f32.mrf.mxu0
      %v850 = vadd.f32 %v714, %v849
      %v851 = vpop.f32.mrf.mxu0
      %852 = vmatprep.mubr.bf16.mxu0 0
      %853 = vmatmul.mubr.bf16.gmra.mxu0 %v591
      %v854 = vpop.f32.mrf.mxu0
      %v855 = vadd.f32 %v719, %v854
      %v856 = vpop.f32.mrf.mxu0
      %v857 = vpop.f32.mrf.mxu0
      %v858 = vadd.f32 %v722, %v857
      %v859 = vpop.f32.mrf.mxu0
      %860 = vmatprep.mubr.bf16.mxu0 0
      %861 = vmatmul.mubr.bf16.gmra.mxu0 %v594
      %v862 = vpop.f32.mrf.mxu0
      %v863 = vadd.f32 %v727, %v862
      %v864 = vpop.f32.mrf.mxu0
      %v865 = vpop.f32.mrf.mxu0
      %v866 = vpop.f32.mrf.mxu0
      %867 = vdwg.mxu0
      %s868 = scalar_lea.vmem %s165, 300
      %v869 = vld [vmem:[%s868] sm:$0xff]
      %v870 = vld [vmem:[%s868 + $0x8] sm:$0xf]
      %v871 = vld [vmem:[%s868 + $0xc] sm:$0xff]
      %v872 = vld [vmem:[%s868 + $0x14] sm:$0xf]
      %v873 = vld [vmem:[%s868 + $0x18] sm:$0xff]
      %v874 = vld [vmem:[%s868 + $0x20] sm:$0xf]
      %v875 = vld [vmem:[%s868 + $0x24] sm:$0xff]
      %v876 = vld [vmem:[%s868 + $0x2c] sm:$0xf]
      %v877 = vld [vmem:[%s868 + $0x30] sm:$0xff]
      %v878 = vld [vmem:[%s868 + $0x38] sm:$0xf]
      %v879 = vld [vmem:[%s868 + $0x3c] sm:$0xff]
      %v880 = vld [vmem:[%s868 + $0x44] sm:$0xf]
      %v881 = vld [vmem:[%s868 + $0x48] sm:$0xff]
      %v882 = vld [vmem:[%s868 + $0x50] sm:$0xf]
      %v883 = vld [vmem:[%s868 + $0x54] sm:$0xff]
      %v884 = vld [vmem:[%s868 + $0x5c] sm:$0xf]
      %v885 = vld [vmem:[%s868 + $0x60] sm:$0xff]
      %v886 = vld [vmem:[%s868 + $0x68] sm:$0xf]
      %v887 = vld [vmem:[%s868 + $0x6c] sm:$0xff]
      %v888 = vld [vmem:[%s868 + $0x74] sm:$0xf]
      %v889 = vld [vmem:[%s868 + $0x78] sm:$0xff]
      %v890 = vld [vmem:[%s868 + $0x80] sm:$0xf]
      %v891 = vld [vmem:[%s868 + $0x84] sm:$0xff]
      %v892 = vld [vmem:[%s868 + $0x8c] sm:$0xf]
      %v893 = vld [vmem:[%s868 + $0x90] sm:$0xff]
      %v894 = vld [vmem:[%s868 + $0x98] sm:$0xf]
      %v895 = vld [vmem:[%s868 + $0x9c] sm:$0xff]
      %v896 = vld [vmem:[%s868 + $0xa4] sm:$0xf]
      %v897 = vld [vmem:[%s868 + $0xa8] sm:$0xff]
      %v898 = vld [vmem:[%s868 + $0xb0] sm:$0xf]
      %v899 = vld [vmem:[%s868 + $0xb4] sm:$0xff]
      %v900 = vld [vmem:[%s868 + $0xbc] sm:$0xf]
      %v901 = vld [vmem:[%s868 + $0xc0] sm:$0xff]
      %v902 = vld [vmem:[%s868 + $0xc8] sm:$0xf]
      %v903 = vld [vmem:[%s868 + $0xcc] sm:$0xff]
      %v904 = vld [vmem:[%s868 + $0xd4] sm:$0xf]
      %v905 = vld [vmem:[%s868 + $0xd8] sm:$0xff]
      %v906 = vld [vmem:[%s868 + $0xe0] sm:$0xf]
      %v907 = vld [vmem:[%s868 + $0xe4] sm:$0xff]
      %v908 = vld [vmem:[%s868 + $0xec] sm:$0xf]
      %v909 = vld [vmem:[%s868 + $0xf0] sm:$0xff]
      %v910 = vld [vmem:[%s868 + $0xf8] sm:$0xf]
      %v911 = vld [vmem:[%s868 + $0xfc] sm:$0xff]
      %v912 = vld [vmem:[%s868 + $0x104] sm:$0xf]
      %v913 = vld [vmem:[%s868 + $0x108] sm:$0xff]
      %v914 = vld [vmem:[%s868 + $0x110] sm:$0xf]
      %v915 = vld [vmem:[%s868 + $0x114] sm:$0xff]
      %v916 = vld [vmem:[%s868 + $0x11c] sm:$0xf]
      %v917 = vld [vmem:[%s868 + $0x120] sm:$0x33]
      %v918 = vld [vmem:[%s868 + $0x128] sm:$0x3]
      %v969 = vunpack.c.l.b16 %v869
      %v970 = vunpack.c.h.b16 %v869
      %v971 = vunpack.c.l.b16 %v870
      %v972 = vunpack.c.l.b16 %v871
      %v973 = vunpack.c.h.b16 %v871
      %v974 = vunpack.c.l.b16 %v872
      %v975 = vunpack.c.l.b16 %v873
      %v976 = vunpack.c.h.b16 %v873
      %v977 = vunpack.c.l.b16 %v874
      %v978 = vunpack.c.l.b16 %v875
      %v979 = vunpack.c.h.b16 %v875
      %v980 = vunpack.c.l.b16 %v876
      %v981 = vunpack.c.l.b16 %v877
      %v982 = vunpack.c.h.b16 %v877
      %v983 = vunpack.c.l.b16 %v878
      %v984 = vunpack.c.l.b16 %v879
      %v985 = vunpack.c.h.b16 %v879
      %v986 = vunpack.c.l.b16 %v880
      %v987 = vunpack.c.l.b16 %v881
      %v988 = vunpack.c.h.b16 %v881
      %v989 = vunpack.c.l.b16 %v882
      %v990 = vunpack.c.l.b16 %v883
      %v991 = vunpack.c.h.b16 %v883
      %v992 = vunpack.c.l.b16 %v884
      %v993 = vunpack.c.l.b16 %v885
      %v994 = vunpack.c.h.b16 %v885
      %v995 = vunpack.c.l.b16 %v886
      %v996 = vunpack.c.l.b16 %v887
      %v997 = vunpack.c.h.b16 %v887
      %v998 = vunpack.c.l.b16 %v888
      %v999 = vunpack.c.l.b16 %v889
      %v1000 = vunpack.c.h.b16 %v889
      %v1001 = vunpack.c.l.b16 %v890
      %v1002 = vunpack.c.l.b16 %v891
      %v1003 = vunpack.c.h.b16 %v891
      %v1004 = vunpack.c.l.b16 %v892
      %v1005 = vunpack.c.l.b16 %v893
      %v1006 = vunpack.c.h.b16 %v893
      %v1007 = vunpack.c.l.b16 %v894
      %v1008 = vunpack.c.l.b16 %v895
      %v1009 = vunpack.c.h.b16 %v895
      %v1010 = vunpack.c.l.b16 %v896
      %v1011 = vunpack.c.l.b16 %v897
      %v1012 = vunpack.c.h.b16 %v897
      %v1013 = vunpack.c.l.b16 %v898
      %v1014 = vunpack.c.l.b16 %v899
      %v1015 = vunpack.c.h.b16 %v899
      %v1016 = vunpack.c.l.b16 %v900
      %v1017 = vunpack.c.l.b16 %v901
      %v1018 = vunpack.c.h.b16 %v901
      %v1019 = vunpack.c.l.b16 %v902
      %v1020 = vunpack.c.l.b16 %v903
      %v1021 = vunpack.c.h.b16 %v903
      %v1022 = vunpack.c.l.b16 %v904
      %v1023 = vunpack.c.l.b16 %v905
      %v1024 = vunpack.c.h.b16 %v905
      %v1025 = vunpack.c.l.b16 %v906
      %v1026 = vunpack.c.l.b16 %v907
      %v1027 = vunpack.c.h.b16 %v907
      %v1028 = vunpack.c.l.b16 %v908
      %v1029 = vunpack.c.l.b16 %v909
      %v1030 = vunpack.c.h.b16 %v909
      %v1031 = vunpack.c.l.b16 %v910
      %v1032 = vunpack.c.l.b16 %v911
      %v1033 = vunpack.c.h.b16 %v911
      %v1034 = vunpack.c.l.b16 %v912
      %v1035 = vunpack.c.l.b16 %v913
      %v1036 = vunpack.c.h.b16 %v913
      %v1037 = vunpack.c.l.b16 %v914
      %v1038 = vunpack.c.l.b16 %v915
      %v1039 = vunpack.c.h.b16 %v915
      %v1040 = vunpack.c.l.b16 %v916
      %v1041 = vunpack.c.l.b16 %v917
      %v1042 = vunpack.c.h.b16 %v917
      %v1043 = vunpack.c.l.b16 %v918
      %v1044 = vpack.c.b16 %v972, %v969
      %v1045 = vpack.c.b16 %v973, %v970
      %v1046 = vpack.c.b16 %v974, %v971
      %v1047 = vpack.c.b16 %v978, %v975
      %v1048 = vpack.c.b16 %v979, %v976
      %v1049 = vpack.c.b16 %v980, %v977
      %v1050 = vpack.c.b16 %v984, %v981
      %v1051 = vpack.c.b16 %v985, %v982
      %v1052 = vpack.c.b16 %v986, %v983
      %v1053 = vpack.c.b16 %v990, %v987
      %v1054 = vpack.c.b16 %v991, %v988
      %v1055 = vpack.c.b16 %v992, %v989
      %v1056 = vpack.c.b16 %v996, %v993
      %v1057 = vpack.c.b16 %v997, %v994
      %v1058 = vpack.c.b16 %v998, %v995
      %v1059 = vpack.c.b16 %v1002, %v999
      %v1060 = vpack.c.b16 %v1003, %v1000
      %v1061 = vpack.c.b16 %v1004, %v1001
      %v1062 = vpack.c.b16 %v1008, %v1005
      %v1063 = vpack.c.b16 %v1009, %v1006
      %v1064 = vpack.c.b16 %v1010, %v1007
      %v1065 = vpack.c.b16 %v1014, %v1011
      %v1066 = vpack.c.b16 %v1015, %v1012
      %v1067 = vpack.c.b16 %v1016, %v1013
      %v1068 = vpack.c.b16 %v1020, %v1017
      %v1069 = vpack.c.b16 %v1021, %v1018
      %v1070 = vpack.c.b16 %v1022, %v1019
      %v1071 = vpack.c.b16 %v1026, %v1023
      %v1072 = vpack.c.b16 %v1027, %v1024
      %v1073 = vpack.c.b16 %v1028, %v1025
      %v1074 = vpack.c.b16 %v1032, %v1029
      %v1075 = vpack.c.b16 %v1033, %v1030
      %v1076 = vpack.c.b16 %v1034, %v1031
      %v1077 = vpack.c.b16 %v1038, %v1035
      %v1078 = vpack.c.b16 %v1039, %v1036
      %v1079 = vpack.c.b16 %v1040, %v1037
      %v1080 = vpack.c.b16 %v1041, %v1041
      %v1081 = vpack.c.b16 %v1042, %v1042
      %v1082 = vpack.c.b16 %v1043, %v1043
      %v1110 = vsel %vm556, %v1046, 0
      %v1113 = vsel %vm556, %v1049, 0
      %v1116 = vsel %vm556, %v1052, 0
      %v1119 = vsel %vm556, %v1055, 0
      %v1122 = vsel %vm556, %v1058, 0
      %v1125 = vsel %vm556, %v1061, 0
      %v1128 = vsel %vm556, %v1064, 0
      %v1131 = vsel %vm556, %v1067, 0
      %v1134 = vsel %vm556, %v1070, 0
      %v1137 = vsel %vm556, %v1073, 0
      %v1140 = vsel %vm556, %v1076, 0
      %v1143 = vsel %vm556, %v1079, 0
      %v1146 = vsel %vm556, %v1082, 0
      %1148 = vmatprep.subr.bf16.mxu0 0
      %1149 = vmatpush1.bf16.msra.mxu0 %v527
      %1150 = vmatprep.subr.bf16.mxu0 0
      %1151 = vmatpush1.bf16.msra.mxu0 %v526
      %1152 = vmatprep.subr.bf16.mxu0 0
      %1153 = vmatpush1.bf16.msra.mxu0 %v525
      %1154 = vmatprep.subr.bf16.mxu0 0
      %1155 = vmatpush1.bf16.msra.mxu0 %v524
      %1156 = vmatprep.subr.bf16.mxu0 0
      %1157 = vmatpush1.bf16.msra.mxu0 %v523
      %1158 = vmatprep.subr.bf16.mxu0 0
      %1159 = vmatpush1.bf16.msra.mxu0 %v522
      %1160 = vmatprep.subr.bf16.mxu0 0
      %1161 = vmatpush1.bf16.msra.mxu0 %v521
      %1162 = vmatprep.subr.bf16.mxu0 0
      %1163 = vmatpush1.bf16.msra.mxu0 %v520
      %1164 = vmatprep.subr.bf16.mxu0 0
      %1165 = vmatpush2.bf16.msra.mxu0 %v535
      %1166 = vmatprep.subr.bf16.mxu0 0
      %1167 = vmatpush2.bf16.msra.mxu0 %v534
      %1168 = vmatprep.subr.bf16.mxu0 0
      %1169 = vmatpush2.bf16.msra.mxu0 %v533
      %1170 = vmatprep.subr.bf16.mxu0 0
      %1171 = vmatpush2.bf16.msra.mxu0 %v532
      %1172 = vmatprep.subr.bf16.mxu0 0
      %1173 = vmatpush2.bf16.msra.mxu0 %v531
      %1174 = vmatprep.subr.bf16.mxu0 0
      %1175 = vmatpush2.bf16.msra.mxu0 %v530
      %1176 = vmatprep.subr.bf16.mxu0 0
      %1177 = vmatpush2.bf16.msra.mxu0 %v529
      %1178 = vmatprep.subr.bf16.mxu0 0
      %1179 = vmatpush2.bf16.msra.mxu0 %v528
      %1180 = vmatprep.mubr.bf16.mxu0 %v1045
      %1181 = vmatmul.mubr.bf16.gmra.mxu0 %v1044
      %v1182 = vpop.f32.mrf.mxu0
      %v1183 = vadd.f32 0.0, %v1182
      %v1184 = vpop.f32.mrf.mxu0
      %v1185 = vpop.f32.mrf.mxu0
      %v1186 = vadd.f32 0.0, %v1185
      %v1187 = vpop.f32.mrf.mxu0
      %1188 = vmatprep.mubr.bf16.mxu0 %v1048
      %1189 = vmatmul.mubr.bf16.gmra.mxu0 %v1047
      %v1190 = vpop.f32.mrf.mxu0
      %v1191 = vadd.f32 0.0, %v1190
      %v1192 = vpop.f32.mrf.mxu0
      %v1193 = vpop.f32.mrf.mxu0
      %v1194 = vadd.f32 0.0, %v1193
      %v1195 = vpop.f32.mrf.mxu0
      %1196 = vmatprep.mubr.bf16.mxu0 %v1051
      %1197 = vmatmul.mubr.bf16.gmra.mxu0 %v1050
      %v1198 = vpop.f32.mrf.mxu0
      %v1199 = vadd.f32 0.0, %v1198
      %v1200 = vpop.f32.mrf.mxu0
      %v1201 = vpop.f32.mrf.mxu0
      %v1202 = vadd.f32 0.0, %v1201
      %v1203 = vpop.f32.mrf.mxu0
      %1204 = vmatprep.mubr.bf16.mxu0 %v1054
      %1205 = vmatmul.mubr.bf16.gmra.mxu0 %v1053
      %v1206 = vpop.f32.mrf.mxu0
      %v1207 = vadd.f32 0.0, %v1206
      %v1208 = vpop.f32.mrf.mxu0
      %v1209 = vpop.f32.mrf.mxu0
      %v1210 = vadd.f32 0.0, %v1209
      %v1211 = vpop.f32.mrf.mxu0
      %1212 = vmatprep.mubr.bf16.mxu0 %v1057
      %1213 = vmatmul.mubr.bf16.gmra.mxu0 %v1056
      %v1214 = vpop.f32.mrf.mxu0
      %v1215 = vadd.f32 0.0, %v1214
      %v1216 = vpop.f32.mrf.mxu0
      %v1217 = vpop.f32.mrf.mxu0
      %v1218 = vadd.f32 0.0, %v1217
      %v1219 = vpop.f32.mrf.mxu0
      %1220 = vmatprep.mubr.bf16.mxu0 %v1060
      %1221 = vmatmul.mubr.bf16.gmra.mxu0 %v1059
      %v1222 = vpop.f32.mrf.mxu0
      %v1223 = vadd.f32 0.0, %v1222
      %v1224 = vpop.f32.mrf.mxu0
      %v1225 = vpop.f32.mrf.mxu0
      %v1226 = vadd.f32 0.0, %v1225
      %v1227 = vpop.f32.mrf.mxu0
      %1228 = vmatprep.mubr.bf16.mxu0 %v1063
      %1229 = vmatmul.mubr.bf16.gmra.mxu0 %v1062
      %v1230 = vpop.f32.mrf.mxu0
      %v1231 = vadd.f32 0.0, %v1230
      %v1232 = vpop.f32.mrf.mxu0
      %v1233 = vpop.f32.mrf.mxu0
      %v1234 = vadd.f32 0.0, %v1233
      %v1235 = vpop.f32.mrf.mxu0
      %1236 = vmatprep.mubr.bf16.mxu0 %v1066
      %1237 = vmatmul.mubr.bf16.gmra.mxu0 %v1065
      %v1238 = vpop.f32.mrf.mxu0
      %v1239 = vadd.f32 0.0, %v1238
      %v1240 = vpop.f32.mrf.mxu0
      %v1241 = vpop.f32.mrf.mxu0
      %v1242 = vadd.f32 0.0, %v1241
      %v1243 = vpop.f32.mrf.mxu0
      %1244 = vmatprep.mubr.bf16.mxu0 %v1069
      %1245 = vmatmul.mubr.bf16.gmra.mxu0 %v1068
      %v1246 = vpop.f32.mrf.mxu0
      %v1247 = vadd.f32 0.0, %v1246
      %v1248 = vpop.f32.mrf.mxu0
      %v1249 = vpop.f32.mrf.mxu0
      %v1250 = vadd.f32 0.0, %v1249
      %v1251 = vpop.f32.mrf.mxu0
      %1252 = vmatprep.mubr.bf16.mxu0 %v1072
      %1253 = vmatmul.mubr.bf16.gmra.mxu0 %v1071
      %v1254 = vpop.f32.mrf.mxu0
      %v1255 = vadd.f32 0.0, %v1254
      %v1256 = vpop.f32.mrf.mxu0
      %v1257 = vpop.f32.mrf.mxu0
      %v1258 = vadd.f32 0.0, %v1257
      %v1259 = vpop.f32.mrf.mxu0
      %1260 = vmatprep.mubr.bf16.mxu0 %v1075
      %1261 = vmatmul.mubr.bf16.gmra.mxu0 %v1074
      %v1262 = vpop.f32.mrf.mxu0
      %v1263 = vadd.f32 0.0, %v1262
      %v1264 = vpop.f32.mrf.mxu0
      %v1265 = vpop.f32.mrf.mxu0
      %v1266 = vadd.f32 0.0, %v1265
      %v1267 = vpop.f32.mrf.mxu0
      %1268 = vmatprep.mubr.bf16.mxu0 %v1078
      %1269 = vmatmul.mubr.bf16.gmra.mxu0 %v1077
      %v1270 = vpop.f32.mrf.mxu0
      %v1271 = vadd.f32 0.0, %v1270
      %v1272 = vpop.f32.mrf.mxu0
      %v1273 = vpop.f32.mrf.mxu0
      %v1274 = vadd.f32 0.0, %v1273
      %v1275 = vpop.f32.mrf.mxu0
      %1276 = vmatprep.mubr.bf16.mxu0 %v1081
      %1277 = vmatmul.mubr.bf16.gmra.mxu0 %v1080
      %v1278 = vpop.f32.mrf.mxu0
      %v1279 = vadd.f32 0.0, %v1278
      %v1280 = vpop.f32.mrf.mxu0
      %v1281 = vpop.f32.mrf.mxu0
      %v1282 = vpop.f32.mrf.mxu0
      %1283 = vdwg.mxu0
      %1284 = vmatprep.subr.bf16.mxu0 0
      %1285 = vmatpush1.bf16.msra.mxu0 0
      %1286 = vmatprep.subr.bf16.mxu0 0
      %1287 = vmatpush1.bf16.msra.mxu0 0
      %1288 = vmatprep.subr.bf16.mxu0 0
      %1289 = vmatpush1.bf16.msra.mxu0 0
      %1290 = vmatprep.subr.bf16.mxu0 0
      %1291 = vmatpush1.bf16.msra.mxu0 0
      %1292 = vmatprep.subr.bf16.mxu0 0
      %1293 = vmatpush1.bf16.msra.mxu0 0
      %1294 = vmatprep.subr.bf16.mxu0 0
      %1295 = vmatpush1.bf16.msra.mxu0 0
      %1296 = vmatprep.subr.bf16.mxu0 0
      %1297 = vmatpush1.bf16.msra.mxu0 %v537
      %1298 = vmatprep.subr.bf16.mxu0 0
      %1299 = vmatpush1.bf16.msra.mxu0 %v536
      %1300 = vmatprep.subr.bf16.mxu0 0
      %1301 = vmatpush2.bf16.msra.mxu0 0
      %1302 = vmatprep.subr.bf16.mxu0 0
      %1303 = vmatpush2.bf16.msra.mxu0 0
      %1304 = vmatprep.subr.bf16.mxu0 0
      %1305 = vmatpush2.bf16.msra.mxu0 0
      %1306 = vmatprep.subr.bf16.mxu0 0
      %1307 = vmatpush2.bf16.msra.mxu0 0
      %1308 = vmatprep.subr.bf16.mxu0 0
      %1309 = vmatpush2.bf16.msra.mxu0 0
      %1310 = vmatprep.subr.bf16.mxu0 0
      %1311 = vmatpush2.bf16.msra.mxu0 0
      %1312 = vmatprep.subr.bf16.mxu0 0
      %1313 = vmatpush2.bf16.msra.mxu0 0
      %1314 = vmatprep.subr.bf16.mxu0 0
      %1315 = vmatpush2.bf16.msra.mxu0 0
      %1316 = vmatprep.mubr.bf16.mxu0 0
      %1317 = vmatmul.mubr.bf16.gmra.mxu0 %v1110
      %v1318 = vpop.f32.mrf.mxu0
      %v1319 = vadd.f32 %v1183, %v1318
      %v1320 = vpop.f32.mrf.mxu0
      %v1321 = vpop.f32.mrf.mxu0
      %v1322 = vadd.f32 %v1186, %v1321
      %v1323 = vpop.f32.mrf.mxu0
      %1324 = vmatprep.mubr.bf16.mxu0 0
      %1325 = vmatmul.mubr.bf16.gmra.mxu0 %v1113
      %v1326 = vpop.f32.mrf.mxu0
      %v1327 = vadd.f32 %v1191, %v1326
      %v1328 = vpop.f32.mrf.mxu0
      %v1329 = vpop.f32.mrf.mxu0
      %v1330 = vadd.f32 %v1194, %v1329
      %v1331 = vpop.f32.mrf.mxu0
      %1332 = vmatprep.mubr.bf16.mxu0 0
      %1333 = vmatmul.mubr.bf16.gmra.mxu0 %v1116
      %v1334 = vpop.f32.mrf.mxu0
      %v1335 = vadd.f32 %v1199, %v1334
      %v1336 = vpop.f32.mrf.mxu0
      %v1337 = vpop.f32.mrf.mxu0
      %v1338 = vadd.f32 %v1202, %v1337
      %v1339 = vpop.f32.mrf.mxu0
      %1340 = vmatprep.mubr.bf16.mxu0 0
      %1341 = vmatmul.mubr.bf16.gmra.mxu0 %v1119
      %v1342 = vpop.f32.mrf.mxu0
      %v1343 = vadd.f32 %v1207, %v1342
      %v1344 = vpop.f32.mrf.mxu0
      %v1345 = vpop.f32.mrf.mxu0
      %v1346 = vadd.f32 %v1210, %v1345
      %v1347 = vpop.f32.mrf.mxu0
      %1348 = vmatprep.mubr.bf16.mxu0 0
      %1349 = vmatmul.mubr.bf16.gmra.mxu0 %v1122
      %v1350 = vpop.f32.mrf.mxu0
      %v1351 = vadd.f32 %v1215, %v1350
      %v1352 = vpop.f32.mrf.mxu0
      %v1353 = vpop.f32.mrf.mxu0
      %v1354 = vadd.f32 %v1218, %v1353
      %v1355 = vpop.f32.mrf.mxu0
      %1356 = vmatprep.mubr.bf16.mxu0 0
      %1357 = vmatmul.mubr.bf16.gmra.mxu0 %v1125
      %v1358 = vpop.f32.mrf.mxu0
      %v1359 = vadd.f32 %v1223, %v1358
      %v1360 = vpop.f32.mrf.mxu0
      %v1361 = vpop.f32.mrf.mxu0
      %v1362 = vadd.f32 %v1226, %v1361
      %v1363 = vpop.f32.mrf.mxu0
      %1364 = vmatprep.mubr.bf16.mxu0 0
      %1365 = vmatmul.mubr.bf16.gmra.mxu0 %v1128
      %v1366 = vpop.f32.mrf.mxu0
      %v1367 = vadd.f32 %v1231, %v1366
      %v1368 = vpop.f32.mrf.mxu0
      %v1369 = vpop.f32.mrf.mxu0
      %v1370 = vadd.f32 %v1234, %v1369
      %v1371 = vpop.f32.mrf.mxu0
      %1372 = vmatprep.mubr.bf16.mxu0 0
      %1373 = vmatmul.mubr.bf16.gmra.mxu0 %v1131
      %v1374 = vpop.f32.mrf.mxu0
      %v1375 = vadd.f32 %v1239, %v1374
      %v1376 = vpop.f32.mrf.mxu0
      %v1377 = vpop.f32.mrf.mxu0
      %v1378 = vadd.f32 %v1242, %v1377
      %v1379 = vpop.f32.mrf.mxu0
      %1380 = vmatprep.mubr.bf16.mxu0 0
      %1381 = vmatmul.mubr.bf16.gmra.mxu0 %v1134
      %v1382 = vpop.f32.mrf.mxu0
      %v1383 = vadd.f32 %v1247, %v1382
      %v1384 = vpop.f32.mrf.mxu0
      %v1385 = vpop.f32.mrf.mxu0
      %v1386 = vadd.f32 %v1250, %v1385
      %v1387 = vpop.f32.mrf.mxu0
      %1388 = vmatprep.mubr.bf16.mxu0 0
      %1389 = vmatmul.mubr.bf16.gmra.mxu0 %v1137
      %v1390 = vpop.f32.mrf.mxu0
      %v1391 = vadd.f32 %v1255, %v1390
      %v1392 = vpop.f32.mrf.mxu0
      %v1393 = vpop.f32.mrf.mxu0
      %v1394 = vadd.f32 %v1258, %v1393
      %v1395 = vpop.f32.mrf.mxu0
      %1396 = vmatprep.mubr.bf16.mxu0 0
      %1397 = vmatmul.mubr.bf16.gmra.mxu0 %v1140
      %v1398 = vpop.f32.mrf.mxu0
      %v1399 = vadd.f32 %v1263, %v1398
      %v1400 = vpop.f32.mrf.mxu0
      %v1401 = vpop.f32.mrf.mxu0
      %v1402 = vadd.f32 %v1266, %v1401
      %v1403 = vpop.f32.mrf.mxu0
      %1404 = vmatprep.mubr.bf16.mxu0 0
      %1405 = vmatmul.mubr.bf16.gmra.mxu0 %v1143
      %v1406 = vpop.f32.mrf.mxu0
      %v1407 = vadd.f32 %v1271, %v1406
      %v1408 = vpop.f32.mrf.mxu0
      %v1409 = vpop.f32.mrf.mxu0
      %v1410 = vadd.f32 %v1274, %v1409
      %v1411 = vpop.f32.mrf.mxu0
      %1412 = vmatprep.mubr.bf16.mxu0 0
      %1413 = vmatmul.mubr.bf16.gmra.mxu0 %v1146
      %v1414 = vpop.f32.mrf.mxu0
      %v1415 = vadd.f32 %v1279, %v1414
      %v1416 = vpop.f32.mrf.mxu0
      %v1417 = vpop.f32.mrf.mxu0
      %v1418 = vpop.f32.mrf.mxu0
      %1419 = vdwg.mxu0
      %v1420 = vmax.f32 %v767, %v1319
      %v1421 = vmax.f32 %v770, %v1322
      %v1422 = vmax.f32 %v775, %v1327
      %v1423 = vmax.f32 %v778, %v1330
      %v1424 = vmax.f32 %v783, %v1335
      %v1425 = vmax.f32 %v786, %v1338
      %v1426 = vmax.f32 %v791, %v1343
      %v1427 = vmax.f32 %v794, %v1346
      %v1428 = vmax.f32 %v799, %v1351
      %v1429 = vmax.f32 %v802, %v1354
      %v1430 = vmax.f32 %v807, %v1359
      %v1431 = vmax.f32 %v810, %v1362
      %v1432 = vmax.f32 %v815, %v1367
      %v1433 = vmax.f32 %v818, %v1370
      %v1434 = vmax.f32 %v823, %v1375
      %v1435 = vmax.f32 %v826, %v1378
      %v1436 = vmax.f32 %v831, %v1383
      %v1437 = vmax.f32 %v834, %v1386
      %v1438 = vmax.f32 %v839, %v1391
      %v1439 = vmax.f32 %v842, %v1394
      %v1440 = vmax.f32 %v847, %v1399
      %v1441 = vmax.f32 %v850, %v1402
      %v1442 = vmax.f32 %v855, %v1407
      %v1443 = vmax.f32 %v858, %v1410
      %v1444 = vmax.f32 %v863, %v1415
      %s1445 = scalar_lea.vmem %s165, 600
      %v1446 = vld [vmem:[%s1445] sm:$0xff]
      %v1447 = vld [vmem:[%s1445 + $0x8] sm:$0xf]
      %v1448 = vld [vmem:[%s1445 + $0xc] sm:$0xff]
      %v1449 = vld [vmem:[%s1445 + $0x14] sm:$0xf]
      %v1450 = vld [vmem:[%s1445 + $0x18] sm:$0xff]
      %v1451 = vld [vmem:[%s1445 + $0x20] sm:$0xf]
      %v1452 = vld [vmem:[%s1445 + $0x24] sm:$0xff]
      %v1453 = vld [vmem:[%s1445 + $0x2c] sm:$0xf]
      %v1454 = vld [vmem:[%s1445 + $0x30] sm:$0xff]
      %v1455 = vld [vmem:[%s1445 + $0x38] sm:$0xf]
      %v1456 = vld [vmem:[%s1445 + $0x3c] sm:$0xff]
      %v1457 = vld [vmem:[%s1445 + $0x44] sm:$0xf]
      %v1458 = vld [vmem:[%s1445 + $0x48] sm:$0xff]
      %v1459 = vld [vmem:[%s1445 + $0x50] sm:$0xf]
      %v1460 = vld [vmem:[%s1445 + $0x54] sm:$0xff]
      %v1461 = vld [vmem:[%s1445 + $0x5c] sm:$0xf]
      %v1462 = vld [vmem:[%s1445 + $0x60] sm:$0xff]
      %v1463 = vld [vmem:[%s1445 + $0x68] sm:$0xf]
      %v1464 = vld [vmem:[%s1445 + $0x6c] sm:$0xff]
      %v1465 = vld [vmem:[%s1445 + $0x74] sm:$0xf]
      %v1466 = vld [vmem:[%s1445 + $0x78] sm:$0xff]
      %v1467 = vld [vmem:[%s1445 + $0x80] sm:$0xf]
      %v1468 = vld [vmem:[%s1445 + $0x84] sm:$0xff]
      %v1469 = vld [vmem:[%s1445 + $0x8c] sm:$0xf]
      %v1470 = vld [vmem:[%s1445 + $0x90] sm:$0xff]
      %v1471 = vld [vmem:[%s1445 + $0x98] sm:$0xf]
      %v1472 = vld [vmem:[%s1445 + $0x9c] sm:$0xff]
      %v1473 = vld [vmem:[%s1445 + $0xa4] sm:$0xf]
      %v1474 = vld [vmem:[%s1445 + $0xa8] sm:$0xff]
      %v1475 = vld [vmem:[%s1445 + $0xb0] sm:$0xf]
      %v1476 = vld [vmem:[%s1445 + $0xb4] sm:$0xff]
      %v1477 = vld [vmem:[%s1445 + $0xbc] sm:$0xf]
      %v1478 = vld [vmem:[%s1445 + $0xc0] sm:$0xff]
      %v1479 = vld [vmem:[%s1445 + $0xc8] sm:$0xf]
      %v1480 = vld [vmem:[%s1445 + $0xcc] sm:$0xff]
      %v1481 = vld [vmem:[%s1445 + $0xd4] sm:$0xf]
      %v1482 = vld [vmem:[%s1445 + $0xd8] sm:$0xff]
      %v1483 = vld [vmem:[%s1445 + $0xe0] sm:$0xf]
      %v1484 = vld [vmem:[%s1445 + $0xe4] sm:$0xff]
      %v1485 = vld [vmem:[%s1445 + $0xec] sm:$0xf]
      %v1486 = vld [vmem:[%s1445 + $0xf0] sm:$0xff]
      %v1487 = vld [vmem:[%s1445 + $0xf8] sm:$0xf]
      %v1488 = vld [vmem:[%s1445 + $0xfc] sm:$0xff]
      %v1489 = vld [vmem:[%s1445 + $0x104] sm:$0xf]
      %v1490 = vld [vmem:[%s1445 + $0x108] sm:$0xff]
      %v1491 = vld [vmem:[%s1445 + $0x110] sm:$0xf]
      %v1492 = vld [vmem:[%s1445 + $0x114] sm:$0xff]
      %v1493 = vld [vmem:[%s1445 + $0x11c] sm:$0xf]
      %v1494 = vld [vmem:[%s1445 + $0x120] sm:$0x33]
      %v1495 = vld [vmem:[%s1445 + $0x128] sm:$0x3]
      %v1546 = vunpack.c.l.b16 %v1446
      %v1547 = vunpack.c.h.b16 %v1446
      %v1548 = vunpack.c.l.b16 %v1447
      %v1549 = vunpack.c.l.b16 %v1448
      %v1550 = vunpack.c.h.b16 %v1448
      %v1551 = vunpack.c.l.b16 %v1449
      %v1552 = vunpack.c.l.b16 %v1450
      %v1553 = vunpack.c.h.b16 %v1450
      %v1554 = vunpack.c.l.b16 %v1451
      %v1555 = vunpack.c.l.b16 %v1452
      %v1556 = vunpack.c.h.b16 %v1452
      %v1557 = vunpack.c.l.b16 %v1453
      %v1558 = vunpack.c.l.b16 %v1454
      %v1559 = vunpack.c.h.b16 %v1454
      %v1560 = vunpack.c.l.b16 %v1455
      %v1561 = vunpack.c.l.b16 %v1456
      %v1562 = vunpack.c.h.b16 %v1456
      %v1563 = vunpack.c.l.b16 %v1457
      %v1564 = vunpack.c.l.b16 %v1458
      %v1565 = vunpack.c.h.b16 %v1458
      %v1566 = vunpack.c.l.b16 %v1459
      %v1567 = vunpack.c.l.b16 %v1460
      %v1568 = vunpack.c.h.b16 %v1460
      %v1569 = vunpack.c.l.b16 %v1461
      %v1570 = vunpack.c.l.b16 %v1462
      %v1571 = vunpack.c.h.b16 %v1462
      %v1572 = vunpack.c.l.b16 %v1463
      %v1573 = vunpack.c.l.b16 %v1464
      %v1574 = vunpack.c.h.b16 %v1464
      %v1575 = vunpack.c.l.b16 %v1465
      %v1576 = vunpack.c.l.b16 %v1466
      %v1577 = vunpack.c.h.b16 %v1466
      %v1578 = vunpack.c.l.b16 %v1467
      %v1579 = vunpack.c.l.b16 %v1468
      %v1580 = vunpack.c.h.b16 %v1468
      %v1581 = vunpack.c.l.b16 %v1469
      %v1582 = vunpack.c.l.b16 %v1470
      %v1583 = vunpack.c.h.b16 %v1470
      %v1584 = vunpack.c.l.b16 %v1471
      %v1585 = vunpack.c.l.b16 %v1472
      %v1586 = vunpack.c.h.b16 %v1472
      %v1587 = vunpack.c.l.b16 %v1473
      %v1588 = vunpack.c.l.b16 %v1474
      %v1589 = vunpack.c.h.b16 %v1474
      %v1590 = vunpack.c.l.b16 %v1475
      %v1591 = vunpack.c.l.b16 %v1476
      %v1592 = vunpack.c.h.b16 %v1476
      %v1593 = vunpack.c.l.b16 %v1477
      %v1594 = vunpack.c.l.b16 %v1478
      %v1595 = vunpack.c.h.b16 %v1478
      %v1596 = vunpack.c.l.b16 %v1479
      %v1597 = vunpack.c.l.b16 %v1480
      %v1598 = vunpack.c.h.b16 %v1480
      %v1599 = vunpack.c.l.b16 %v1481
      %v1600 = vunpack.c.l.b16 %v1482
      %v1601 = vunpack.c.h.b16 %v1482
      %v1602 = vunpack.c.l.b16 %v1483
      %v1603 = vunpack.c.l.b16 %v1484
      %v1604 = vunpack.c.h.b16 %v1484
      %v1605 = vunpack.c.l.b16 %v1485
      %v1606 = vunpack.c.l.b16 %v1486
      %v1607 = vunpack.c.h.b16 %v1486
      %v1608 = vunpack.c.l.b16 %v1487
      %v1609 = vunpack.c.l.b16 %v1488
      %v1610 = vunpack.c.h.b16 %v1488
      %v1611 = vunpack.c.l.b16 %v1489
      %v1612 = vunpack.c.l.b16 %v1490
      %v1613 = vunpack.c.h.b16 %v1490
      %v1614 = vunpack.c.l.b16 %v1491
      %v1615 = vunpack.c.l.b16 %v1492
      %v1616 = vunpack.c.h.b16 %v1492
      %v1617 = vunpack.c.l.b16 %v1493
      %v1618 = vunpack.c.l.b16 %v1494
      %v1619 = vunpack.c.h.b16 %v1494
      %v1620 = vunpack.c.l.b16 %v1495
      %v1621 = vpack.c.b16 %v1549, %v1546
      %v1622 = vpack.c.b16 %v1550, %v1547
      %v1623 = vpack.c.b16 %v1551, %v1548
      %v1624 = vpack.c.b16 %v1555, %v1552
      %v1625 = vpack.c.b16 %v1556, %v1553
      %v1626 = vpack.c.b16 %v1557, %v1554
      %v1627 = vpack.c.b16 %v1561, %v1558
      %v1628 = vpack.c.b16 %v1562, %v1559
      %v1629 = vpack.c.b16 %v1563, %v1560
      %v1630 = vpack.c.b16 %v1567, %v1564
      %v1631 = vpack.c.b16 %v1568, %v1565
      %v1632 = vpack.c.b16 %v1569, %v1566
      %v1633 = vpack.c.b16 %v1573, %v1570
      %v1634 = vpack.c.b16 %v1574, %v1571
      %v1635 = vpack.c.b16 %v1575, %v1572
      %v1636 = vpack.c.b16 %v1579, %v1576
      %v1637 = vpack.c.b16 %v1580, %v1577
      %v1638 = vpack.c.b16 %v1581, %v1578
      %v1639 = vpack.c.b16 %v1585, %v1582
      %v1640 = vpack.c.b16 %v1586, %v1583
      %v1641 = vpack.c.b16 %v1587, %v1584
      %v1642 = vpack.c.b16 %v1591, %v1588
      %v1643 = vpack.c.b16 %v1592, %v1589
      %v1644 = vpack.c.b16 %v1593, %v1590
      %v1645 = vpack.c.b16 %v1597, %v1594
      %v1646 = vpack.c.b16 %v1598, %v1595
      %v1647 = vpack.c.b16 %v1599, %v1596
      %v1648 = vpack.c.b16 %v1603, %v1600
      %v1649 = vpack.c.b16 %v1604, %v1601
      %v1650 = vpack.c.b16 %v1605, %v1602
      %v1651 = vpack.c.b16 %v1609, %v1606
      %v1652 = vpack.c.b16 %v1610, %v1607
      %v1653 = vpack.c.b16 %v1611, %v1608
      %v1654 = vpack.c.b16 %v1615, %v1612
      %v1655 = vpack.c.b16 %v1616, %v1613
      %v1656 = vpack.c.b16 %v1617, %v1614
      %v1657 = vpack.c.b16 %v1618, %v1618
      %v1658 = vpack.c.b16 %v1619, %v1619
      %v1659 = vpack.c.b16 %v1620, %v1620
      %v1687 = vsel %vm556, %v1623, 0
      %v1690 = vsel %vm556, %v1626, 0
      %v1693 = vsel %vm556, %v1629, 0
      %v1696 = vsel %vm556, %v1632, 0
      %v1699 = vsel %vm556, %v1635, 0
      %v1702 = vsel %vm556, %v1638, 0
      %v1705 = vsel %vm556, %v1641, 0
      %v1708 = vsel %vm556, %v1644, 0
      %v1711 = vsel %vm556, %v1647, 0
      %v1714 = vsel %vm556, %v1650, 0
      %v1717 = vsel %vm556, %v1653, 0
      %v1720 = vsel %vm556, %v1656, 0
      %v1723 = vsel %vm556, %v1659, 0
      %1725 = vmatprep.subr.bf16.mxu0 0
      %1726 = vmatpush1.bf16.msra.mxu0 %v527
      %1727 = vmatprep.subr.bf16.mxu0 0
      %1728 = vmatpush1.bf16.msra.mxu0 %v526
      %1729 = vmatprep.subr.bf16.mxu0 0
      %1730 = vmatpush1.bf16.msra.mxu0 %v525
      %1731 = vmatprep.subr.bf16.mxu0 0
      %1732 = vmatpush1.bf16.msra.mxu0 %v524
      %1733 = vmatprep.subr.bf16.mxu0 0
      %1734 = vmatpush1.bf16.msra.mxu0 %v523
      %1735 = vmatprep.subr.bf16.mxu0 0
      %1736 = vmatpush1.bf16.msra.mxu0 %v522
      %1737 = vmatprep.subr.bf16.mxu0 0
      %1738 = vmatpush1.bf16.msra.mxu0 %v521
      %1739 = vmatprep.subr.bf16.mxu0 0
      %1740 = vmatpush1.bf16.msra.mxu0 %v520
      %1741 = vmatprep.subr.bf16.mxu0 0
      %1742 = vmatpush2.bf16.msra.mxu0 %v535
      %1743 = vmatprep.subr.bf16.mxu0 0
      %1744 = vmatpush2.bf16.msra.mxu0 %v534
      %1745 = vmatprep.subr.bf16.mxu0 0
      %1746 = vmatpush2.bf16.msra.mxu0 %v533
      %1747 = vmatprep.subr.bf16.mxu0 0
      %1748 = vmatpush2.bf16.msra.mxu0 %v532
      %1749 = vmatprep.subr.bf16.mxu0 0
      %1750 = vmatpush2.bf16.msra.mxu0 %v531
      %1751 = vmatprep.subr.bf16.mxu0 0
      %1752 = vmatpush2.bf16.msra.mxu0 %v530
      %1753 = vmatprep.subr.bf16.mxu0 0
      %1754 = vmatpush2.bf16.msra.mxu0 %v529
      %1755 = vmatprep.subr.bf16.mxu0 0
      %1756 = vmatpush2.bf16.msra.mxu0 %v528
      %1757 = vmatprep.mubr.bf16.mxu0 %v1622
      %1758 = vmatmul.mubr.bf16.gmra.mxu0 %v1621
      %v1759 = vpop.f32.mrf.mxu0
      %v1760 = vadd.f32 0.0, %v1759
      %v1761 = vpop.f32.mrf.mxu0
      %v1762 = vpop.f32.mrf.mxu0
      %v1763 = vadd.f32 0.0, %v1762
      %v1764 = vpop.f32.mrf.mxu0
      %1765 = vmatprep.mubr.bf16.mxu0 %v1625
      %1766 = vmatmul.mubr.bf16.gmra.mxu0 %v1624
      %v1767 = vpop.f32.mrf.mxu0
      %v1768 = vadd.f32 0.0, %v1767
      %v1769 = vpop.f32.mrf.mxu0
      %v1770 = vpop.f32.mrf.mxu0
      %v1771 = vadd.f32 0.0, %v1770
      %v1772 = vpop.f32.mrf.mxu0
      %1773 = vmatprep.mubr.bf16.mxu0 %v1628
      %1774 = vmatmul.mubr.bf16.gmra.mxu0 %v1627
      %v1775 = vpop.f32.mrf.mxu0
      %v1776 = vadd.f32 0.0, %v1775
      %v1777 = vpop.f32.mrf.mxu0
      %v1778 = vpop.f32.mrf.mxu0
      %v1779 = vadd.f32 0.0, %v1778
      %v1780 = vpop.f32.mrf.mxu0
      %1781 = vmatprep.mubr.bf16.mxu0 %v1631
      %1782 = vmatmul.mubr.bf16.gmra.mxu0 %v1630
      %v1783 = vpop.f32.mrf.mxu0
      %v1784 = vadd.f32 0.0, %v1783
      %v1785 = vpop.f32.mrf.mxu0
      %v1786 = vpop.f32.mrf.mxu0
      %v1787 = vadd.f32 0.0, %v1786
      %v1788 = vpop.f32.mrf.mxu0
      %1789 = vmatprep.mubr.bf16.mxu0 %v1634
      %1790 = vmatmul.mubr.bf16.gmra.mxu0 %v1633
      %v1791 = vpop.f32.mrf.mxu0
      %v1792 = vadd.f32 0.0, %v1791
      %v1793 = vpop.f32.mrf.mxu0
      %v1794 = vpop.f32.mrf.mxu0
      %v1795 = vadd.f32 0.0, %v1794
      %v1796 = vpop.f32.mrf.mxu0
      %1797 = vmatprep.mubr.bf16.mxu0 %v1637
      %1798 = vmatmul.mubr.bf16.gmra.mxu0 %v1636
      %v1799 = vpop.f32.mrf.mxu0
      %v1800 = vadd.f32 0.0, %v1799
      %v1801 = vpop.f32.mrf.mxu0
      %v1802 = vpop.f32.mrf.mxu0
      %v1803 = vadd.f32 0.0, %v1802
      %v1804 = vpop.f32.mrf.mxu0
      %1805 = vmatprep.mubr.bf16.mxu0 %v1640
      %1806 = vmatmul.mubr.bf16.gmra.mxu0 %v1639
      %v1807 = vpop.f32.mrf.mxu0
      %v1808 = vadd.f32 0.0, %v1807
      %v1809 = vpop.f32.mrf.mxu0
      %v1810 = vpop.f32.mrf.mxu0
      %v1811 = vadd.f32 0.0, %v1810
      %v1812 = vpop.f32.mrf.mxu0
      %1813 = vmatprep.mubr.bf16.mxu0 %v1643
      %1814 = vmatmul.mubr.bf16.gmra.mxu0 %v1642
      %v1815 = vpop.f32.mrf.mxu0
      %v1816 = vadd.f32 0.0, %v1815
      %v1817 = vpop.f32.mrf.mxu0
      %v1818 = vpop.f32.mrf.mxu0
      %v1819 = vadd.f32 0.0, %v1818
      %v1820 = vpop.f32.mrf.mxu0
      %1821 = vmatprep.mubr.bf16.mxu0 %v1646
      %1822 = vmatmul.mubr.bf16.gmra.mxu0 %v1645
      %v1823 = vpop.f32.mrf.mxu0
      %v1824 = vadd.f32 0.0, %v1823
      %v1825 = vpop.f32.mrf.mxu0
      %v1826 = vpop.f32.mrf.mxu0
      %v1827 = vadd.f32 0.0, %v1826
      %v1828 = vpop.f32.mrf.mxu0
      %1829 = vmatprep.mubr.bf16.mxu0 %v1649
      %1830 = vmatmul.mubr.bf16.gmra.mxu0 %v1648
      %v1831 = vpop.f32.mrf.mxu0
      %v1832 = vadd.f32 0.0, %v1831
      %v1833 = vpop.f32.mrf.mxu0
      %v1834 = vpop.f32.mrf.mxu0
      %v1835 = vadd.f32 0.0, %v1834
      %v1836 = vpop.f32.mrf.mxu0
      %1837 = vmatprep.mubr.bf16.mxu0 %v1652
      %1838 = vmatmul.mubr.bf16.gmra.mxu0 %v1651
      %v1839 = vpop.f32.mrf.mxu0
      %v1840 = vadd.f32 0.0, %v1839
      %v1841 = vpop.f32.mrf.mxu0
      %v1842 = vpop.f32.mrf.mxu0
      %v1843 = vadd.f32 0.0, %v1842
      %v1844 = vpop.f32.mrf.mxu0
      %1845 = vmatprep.mubr.bf16.mxu0 %v1655
      %1846 = vmatmul.mubr.bf16.gmra.mxu0 %v1654
      %v1847 = vpop.f32.mrf.mxu0
      %v1848 = vadd.f32 0.0, %v1847
      %v1849 = vpop.f32.mrf.mxu0
      %v1850 = vpop.f32.mrf.mxu0
      %v1851 = vadd.f32 0.0, %v1850
      %v1852 = vpop.f32.mrf.mxu0
      %1853 = vmatprep.mubr.bf16.mxu0 %v1658
      %1854 = vmatmul.mubr.bf16.gmra.mxu0 %v1657
      %v1855 = vpop.f32.mrf.mxu0
      %v1856 = vadd.f32 0.0, %v1855
      %v1857 = vpop.f32.mrf.mxu0
      %v1858 = vpop.f32.mrf.mxu0
      %v1859 = vpop.f32.mrf.mxu0
      %1860 = vdwg.mxu0
      %1861 = vmatprep.subr.bf16.mxu0 0
      %1862 = vmatpush1.bf16.msra.mxu0 0
      %1863 = vmatprep.subr.bf16.mxu0 0
      %1864 = vmatpush1.bf16.msra.mxu0 0
      %1865 = vmatprep.subr.bf16.mxu0 0
      %1866 = vmatpush1.bf16.msra.mxu0 0
      %1867 = vmatprep.subr.bf16.mxu0 0
      %1868 = vmatpush1.bf16.msra.mxu0 0
      %1869 = vmatprep.subr.bf16.mxu0 0
      %1870 = vmatpush1.bf16.msra.mxu0 0
      %1871 = vmatprep.subr.bf16.mxu0 0
      %1872 = vmatpush1.bf16.msra.mxu0 0
      %1873 = vmatprep.subr.bf16.mxu0 0
      %1874 = vmatpush1.bf16.msra.mxu0 %v537
      %1875 = vmatprep.subr.bf16.mxu0 0
      %1876 = vmatpush1.bf16.msra.mxu0 %v536
      %1877 = vmatprep.subr.bf16.mxu0 0
      %1878 = vmatpush2.bf16.msra.mxu0 0
      %1879 = vmatprep.subr.bf16.mxu0 0
      %1880 = vmatpush2.bf16.msra.mxu0 0
      %1881 = vmatprep.subr.bf16.mxu0 0
      %1882 = vmatpush2.bf16.msra.mxu0 0
      %1883 = vmatprep.subr.bf16.mxu0 0
      %1884 = vmatpush2.bf16.msra.mxu0 0
      %1885 = vmatprep.subr.bf16.mxu0 0
      %1886 = vmatpush2.bf16.msra.mxu0 0
      %1887 = vmatprep.subr.bf16.mxu0 0
      %1888 = vmatpush2.bf16.msra.mxu0 0
      %1889 = vmatprep.subr.bf16.mxu0 0
      %1890 = vmatpush2.bf16.msra.mxu0 0
      %1891 = vmatprep.subr.bf16.mxu0 0
      %1892 = vmatpush2.bf16.msra.mxu0 0
      %1893 = vmatprep.mubr.bf16.mxu0 0
      %1894 = vmatmul.mubr.bf16.gmra.mxu0 %v1687
      %v1895 = vpop.f32.mrf.mxu0
      %v1896 = vadd.f32 %v1760, %v1895
      %v1897 = vpop.f32.mrf.mxu0
      %v1898 = vpop.f32.mrf.mxu0
      %v1899 = vadd.f32 %v1763, %v1898
      %v1900 = vpop.f32.mrf.mxu0
      %1901 = vmatprep.mubr.bf16.mxu0 0
      %1902 = vmatmul.mubr.bf16.gmra.mxu0 %v1690
      %v1903 = vpop.f32.mrf.mxu0
      %v1904 = vadd.f32 %v1768, %v1903
      %v1905 = vpop.f32.mrf.mxu0
      %v1906 = vpop.f32.mrf.mxu0
      %v1907 = vadd.f32 %v1771, %v1906
      %v1908 = vpop.f32.mrf.mxu0
      %1909 = vmatprep.mubr.bf16.mxu0 0
      %1910 = vmatmul.mubr.bf16.gmra.mxu0 %v1693
      %v1911 = vpop.f32.mrf.mxu0
      %v1912 = vadd.f32 %v1776, %v1911
      %v1913 = vpop.f32.mrf.mxu0
      %v1914 = vpop.f32.mrf.mxu0
      %v1915 = vadd.f32 %v1779, %v1914
      %v1916 = vpop.f32.mrf.mxu0
      %1917 = vmatprep.mubr.bf16.mxu0 0
      %1918 = vmatmul.mubr.bf16.gmra.mxu0 %v1696
      %v1919 = vpop.f32.mrf.mxu0
      %v1920 = vadd.f32 %v1784, %v1919
      %v1921 = vpop.f32.mrf.mxu0
      %v1922 = vpop.f32.mrf.mxu0
      %v1923 = vadd.f32 %v1787, %v1922
      %v1924 = vpop.f32.mrf.mxu0
      %1925 = vmatprep.mubr.bf16.mxu0 0
      %1926 = vmatmul.mubr.bf16.gmra.mxu0 %v1699
      %v1927 = vpop.f32.mrf.mxu0
      %v1928 = vadd.f32 %v1792, %v1927
      %v1929 = vpop.f32.mrf.mxu0
      %v1930 = vpop.f32.mrf.mxu0
      %v1931 = vadd.f32 %v1795, %v1930
      %v1932 = vpop.f32.mrf.mxu0
      %1933 = vmatprep.mubr.bf16.mxu0 0
      %1934 = vmatmul.mubr.bf16.gmra.mxu0 %v1702
      %v1935 = vpop.f32.mrf.mxu0
      %v1936 = vadd.f32 %v1800, %v1935
      %v1937 = vpop.f32.mrf.mxu0
      %v1938 = vpop.f32.mrf.mxu0
      %v1939 = vadd.f32 %v1803, %v1938
      %v1940 = vpop.f32.mrf.mxu0
      %1941 = vmatprep.mubr.bf16.mxu0 0
      %1942 = vmatmul.mubr.bf16.gmra.mxu0 %v1705
      %v1943 = vpop.f32.mrf.mxu0
      %v1944 = vadd.f32 %v1808, %v1943
      %v1945 = vpop.f32.mrf.mxu0
      %v1946 = vpop.f32.mrf.mxu0
      %v1947 = vadd.f32 %v1811, %v1946
      %v1948 = vpop.f32.mrf.mxu0
      %1949 = vmatprep.mubr.bf16.mxu0 0
      %1950 = vmatmul.mubr.bf16.gmra.mxu0 %v1708
      %v1951 = vpop.f32.mrf.mxu0
      %v1952 = vadd.f32 %v1816, %v1951
      %v1953 = vpop.f32.mrf.mxu0
      %v1954 = vpop.f32.mrf.mxu0
      %v1955 = vadd.f32 %v1819, %v1954
      %v1956 = vpop.f32.mrf.mxu0
      %1957 = vmatprep.mubr.bf16.mxu0 0
      %1958 = vmatmul.mubr.bf16.gmra.mxu0 %v1711
      %v1959 = vpop.f32.mrf.mxu0
      %v1960 = vadd.f32 %v1824, %v1959
      %v1961 = vpop.f32.mrf.mxu0
      %v1962 = vpop.f32.mrf.mxu0
      %v1963 = vadd.f32 %v1827, %v1962
      %v1964 = vpop.f32.mrf.mxu0
      %1965 = vmatprep.mubr.bf16.mxu0 0
      %1966 = vmatmul.mubr.bf16.gmra.mxu0 %v1714
      %v1967 = vpop.f32.mrf.mxu0
      %v1968 = vadd.f32 %v1832, %v1967
      %v1969 = vpop.f32.mrf.mxu0
      %v1970 = vpop.f32.mrf.mxu0
      %v1971 = vadd.f32 %v1835, %v1970
      %v1972 = vpop.f32.mrf.mxu0
      %1973 = vmatprep.mubr.bf16.mxu0 0
      %1974 = vmatmul.mubr.bf16.gmra.mxu0 %v1717
      %v1975 = vpop.f32.mrf.mxu0
      %v1976 = vadd.f32 %v1840, %v1975
      %v1977 = vpop.f32.mrf.mxu0
      %v1978 = vpop.f32.mrf.mxu0
      %v1979 = vadd.f32 %v1843, %v1978
      %v1980 = vpop.f32.mrf.mxu0
      %1981 = vmatprep.mubr.bf16.mxu0 0
      %1982 = vmatmul.mubr.bf16.gmra.mxu0 %v1720
      %v1983 = vpop.f32.mrf.mxu0
      %v1984 = vadd.f32 %v1848, %v1983
      %v1985 = vpop.f32.mrf.mxu0
      %v1986 = vpop.f32.mrf.mxu0
      %v1987 = vadd.f32 %v1851, %v1986
      %v1988 = vpop.f32.mrf.mxu0
      %1989 = vmatprep.mubr.bf16.mxu0 0
      %1990 = vmatmul.mubr.bf16.gmra.mxu0 %v1723
      %v1991 = vpop.f32.mrf.mxu0
      %v1992 = vadd.f32 %v1856, %v1991
      %v1993 = vpop.f32.mrf.mxu0
      %v1994 = vpop.f32.mrf.mxu0
      %v1995 = vpop.f32.mrf.mxu0
      %1996 = vdwg.mxu0
      %v1997 = vmax.f32 %v1420, %v1896
      %v1998 = vmax.f32 %v1421, %v1899
      %v1999 = vmax.f32 %v1422, %v1904
      %v2000 = vmax.f32 %v1423, %v1907
      %v2001 = vmax.f32 %v1424, %v1912
      %v2002 = vmax.f32 %v1425, %v1915
      %v2003 = vmax.f32 %v1426, %v1920
      %v2004 = vmax.f32 %v1427, %v1923
      %v2005 = vmax.f32 %v1428, %v1928
      %v2006 = vmax.f32 %v1429, %v1931
      %v2007 = vmax.f32 %v1430, %v1936
      %v2008 = vmax.f32 %v1431, %v1939
      %v2009 = vmax.f32 %v1432, %v1944
      %v2010 = vmax.f32 %v1433, %v1947
      %v2011 = vmax.f32 %v1434, %v1952
      %v2012 = vmax.f32 %v1435, %v1955
      %v2013 = vmax.f32 %v1436, %v1960
      %v2014 = vmax.f32 %v1437, %v1963
      %v2015 = vmax.f32 %v1438, %v1968
      %v2016 = vmax.f32 %v1439, %v1971
      %v2017 = vmax.f32 %v1440, %v1976
      %v2018 = vmax.f32 %v1441, %v1979
      %v2019 = vmax.f32 %v1442, %v1984
      %v2020 = vmax.f32 %v1443, %v1987
      %v2021 = vmax.f32 %v1444, %v1992
      %s2022 = scalar_lea.vmem %s165, 900
      %v2023 = vld [vmem:[%s2022] sm:$0xff]
      %v2024 = vld [vmem:[%s2022 + $0x8] sm:$0xf]
      %v2025 = vld [vmem:[%s2022 + $0xc] sm:$0xff]
      %v2026 = vld [vmem:[%s2022 + $0x14] sm:$0xf]
      %v2027 = vld [vmem:[%s2022 + $0x18] sm:$0xff]
      %v2028 = vld [vmem:[%s2022 + $0x20] sm:$0xf]
      %v2029 = vld [vmem:[%s2022 + $0x24] sm:$0xff]
      %v2030 = vld [vmem:[%s2022 + $0x2c] sm:$0xf]
      %v2031 = vld [vmem:[%s2022 + $0x30] sm:$0xff]
      %v2032 = vld [vmem:[%s2022 + $0x38] sm:$0xf]
      %v2033 = vld [vmem:[%s2022 + $0x3c] sm:$0xff]
      %v2034 = vld [vmem:[%s2022 + $0x44] sm:$0xf]
      %v2035 = vld [vmem:[%s2022 + $0x48] sm:$0xff]
      %v2036 = vld [vmem:[%s2022 + $0x50] sm:$0xf]
      %v2037 = vld [vmem:[%s2022 + $0x54] sm:$0xff]
      %v2038 = vld [vmem:[%s2022 + $0x5c] sm:$0xf]
      %v2039 = vld [vmem:[%s2022 + $0x60] sm:$0xff]
      %v2040 = vld [vmem:[%s2022 + $0x68] sm:$0xf]
      %v2041 = vld [vmem:[%s2022 + $0x6c] sm:$0xff]
      %v2042 = vld [vmem:[%s2022 + $0x74] sm:$0xf]
      %v2043 = vld [vmem:[%s2022 + $0x78] sm:$0xff]
      %v2044 = vld [vmem:[%s2022 + $0x80] sm:$0xf]
      %v2045 = vld [vmem:[%s2022 + $0x84] sm:$0xff]
      %v2046 = vld [vmem:[%s2022 + $0x8c] sm:$0xf]
      %v2047 = vld [vmem:[%s2022 + $0x90] sm:$0xff]
      %v2048 = vld [vmem:[%s2022 + $0x98] sm:$0xf]
      %v2049 = vld [vmem:[%s2022 + $0x9c] sm:$0xff]
      %v2050 = vld [vmem:[%s2022 + $0xa4] sm:$0xf]
      %v2051 = vld [vmem:[%s2022 + $0xa8] sm:$0xff]
      %v2052 = vld [vmem:[%s2022 + $0xb0] sm:$0xf]
      %v2053 = vld [vmem:[%s2022 + $0xb4] sm:$0xff]
      %v2054 = vld [vmem:[%s2022 + $0xbc] sm:$0xf]
      %v2055 = vld [vmem:[%s2022 + $0xc0] sm:$0xff]
      %v2056 = vld [vmem:[%s2022 + $0xc8] sm:$0xf]
      %v2057 = vld [vmem:[%s2022 + $0xcc] sm:$0xff]
      %v2058 = vld [vmem:[%s2022 + $0xd4] sm:$0xf]
      %v2059 = vld [vmem:[%s2022 + $0xd8] sm:$0xff]
      %v2060 = vld [vmem:[%s2022 + $0xe0] sm:$0xf]
      %v2061 = vld [vmem:[%s2022 + $0xe4] sm:$0xff]
      %v2062 = vld [vmem:[%s2022 + $0xec] sm:$0xf]
      %v2063 = vld [vmem:[%s2022 + $0xf0] sm:$0xff]
      %v2064 = vld [vmem:[%s2022 + $0xf8] sm:$0xf]
      %v2065 = vld [vmem:[%s2022 + $0xfc] sm:$0xff]
      %v2066 = vld [vmem:[%s2022 + $0x104] sm:$0xf]
      %v2067 = vld [vmem:[%s2022 + $0x108] sm:$0xff]
      %v2068 = vld [vmem:[%s2022 + $0x110] sm:$0xf]
      %v2069 = vld [vmem:[%s2022 + $0x114] sm:$0xff]
      %v2070 = vld [vmem:[%s2022 + $0x11c] sm:$0xf]
      %v2071 = vld [vmem:[%s2022 + $0x120] sm:$0x33]
      %v2072 = vld [vmem:[%s2022 + $0x128] sm:$0x3]
      %v2123 = vunpack.c.l.b16 %v2023
      %v2124 = vunpack.c.h.b16 %v2023
      %v2125 = vunpack.c.l.b16 %v2024
      %v2126 = vunpack.c.l.b16 %v2025
      %v2127 = vunpack.c.h.b16 %v2025
      %v2128 = vunpack.c.l.b16 %v2026
      %v2129 = vunpack.c.l.b16 %v2027
      %v2130 = vunpack.c.h.b16 %v2027
      %v2131 = vunpack.c.l.b16 %v2028
      %v2132 = vunpack.c.l.b16 %v2029
      %v2133 = vunpack.c.h.b16 %v2029
      %v2134 = vunpack.c.l.b16 %v2030
      %v2135 = vunpack.c.l.b16 %v2031
      %v2136 = vunpack.c.h.b16 %v2031
      %v2137 = vunpack.c.l.b16 %v2032
      %v2138 = vunpack.c.l.b16 %v2033
      %v2139 = vunpack.c.h.b16 %v2033
      %v2140 = vunpack.c.l.b16 %v2034
      %v2141 = vunpack.c.l.b16 %v2035
      %v2142 = vunpack.c.h.b16 %v2035
      %v2143 = vunpack.c.l.b16 %v2036
      %v2144 = vunpack.c.l.b16 %v2037
      %v2145 = vunpack.c.h.b16 %v2037
      %v2146 = vunpack.c.l.b16 %v2038
      %v2147 = vunpack.c.l.b16 %v2039
      %v2148 = vunpack.c.h.b16 %v2039
      %v2149 = vunpack.c.l.b16 %v2040
      %v2150 = vunpack.c.l.b16 %v2041
      %v2151 = vunpack.c.h.b16 %v2041
      %v2152 = vunpack.c.l.b16 %v2042
      %v2153 = vunpack.c.l.b16 %v2043
      %v2154 = vunpack.c.h.b16 %v2043
      %v2155 = vunpack.c.l.b16 %v2044
      %v2156 = vunpack.c.l.b16 %v2045
      %v2157 = vunpack.c.h.b16 %v2045
      %v2158 = vunpack.c.l.b16 %v2046
      %v2159 = vunpack.c.l.b16 %v2047
      %v2160 = vunpack.c.h.b16 %v2047
      %v2161 = vunpack.c.l.b16 %v2048
      %v2162 = vunpack.c.l.b16 %v2049
      %v2163 = vunpack.c.h.b16 %v2049
      %v2164 = vunpack.c.l.b16 %v2050
      %v2165 = vunpack.c.l.b16 %v2051
      %v2166 = vunpack.c.h.b16 %v2051
      %v2167 = vunpack.c.l.b16 %v2052
      %v2168 = vunpack.c.l.b16 %v2053
      %v2169 = vunpack.c.h.b16 %v2053
      %v2170 = vunpack.c.l.b16 %v2054
      %v2171 = vunpack.c.l.b16 %v2055
      %v2172 = vunpack.c.h.b16 %v2055
      %v2173 = vunpack.c.l.b16 %v2056
      %v2174 = vunpack.c.l.b16 %v2057
      %v2175 = vunpack.c.h.b16 %v2057
      %v2176 = vunpack.c.l.b16 %v2058
      %v2177 = vunpack.c.l.b16 %v2059
      %v2178 = vunpack.c.h.b16 %v2059
      %v2179 = vunpack.c.l.b16 %v2060
      %v2180 = vunpack.c.l.b16 %v2061
      %v2181 = vunpack.c.h.b16 %v2061
      %v2182 = vunpack.c.l.b16 %v2062
      %v2183 = vunpack.c.l.b16 %v2063
      %v2184 = vunpack.c.h.b16 %v2063
      %v2185 = vunpack.c.l.b16 %v2064
      %v2186 = vunpack.c.l.b16 %v2065
      %v2187 = vunpack.c.h.b16 %v2065
      %v2188 = vunpack.c.l.b16 %v2066
      %v2189 = vunpack.c.l.b16 %v2067
      %v2190 = vunpack.c.h.b16 %v2067
      %v2191 = vunpack.c.l.b16 %v2068
      %v2192 = vunpack.c.l.b16 %v2069
      %v2193 = vunpack.c.h.b16 %v2069
      %v2194 = vunpack.c.l.b16 %v2070
      %v2195 = vunpack.c.l.b16 %v2071
      %v2196 = vunpack.c.h.b16 %v2071
      %v2197 = vunpack.c.l.b16 %v2072
      %v2198 = vpack.c.b16 %v2126, %v2123
      %v2199 = vpack.c.b16 %v2127, %v2124
      %v2200 = vpack.c.b16 %v2128, %v2125
      %v2201 = vpack.c.b16 %v2132, %v2129
      %v2202 = vpack.c.b16 %v2133, %v2130
      %v2203 = vpack.c.b16 %v2134, %v2131
      %v2204 = vpack.c.b16 %v2138, %v2135
      %v2205 = vpack.c.b16 %v2139, %v2136
      %v2206 = vpack.c.b16 %v2140, %v2137
      %v2207 = vpack.c.b16 %v2144, %v2141
      %v2208 = vpack.c.b16 %v2145, %v2142
      %v2209 = vpack.c.b16 %v2146, %v2143
      %v2210 = vpack.c.b16 %v2150, %v2147
      %v2211 = vpack.c.b16 %v2151, %v2148
      %v2212 = vpack.c.b16 %v2152, %v2149
      %v2213 = vpack.c.b16 %v2156, %v2153
      %v2214 = vpack.c.b16 %v2157, %v2154
      %v2215 = vpack.c.b16 %v2158, %v2155
      %v2216 = vpack.c.b16 %v2162, %v2159
      %v2217 = vpack.c.b16 %v2163, %v2160
      %v2218 = vpack.c.b16 %v2164, %v2161
      %v2219 = vpack.c.b16 %v2168, %v2165
      %v2220 = vpack.c.b16 %v2169, %v2166
      %v2221 = vpack.c.b16 %v2170, %v2167
      %v2222 = vpack.c.b16 %v2174, %v2171
      %v2223 = vpack.c.b16 %v2175, %v2172
      %v2224 = vpack.c.b16 %v2176, %v2173
      %v2225 = vpack.c.b16 %v2180, %v2177
      %v2226 = vpack.c.b16 %v2181, %v2178
      %v2227 = vpack.c.b16 %v2182, %v2179
      %v2228 = vpack.c.b16 %v2186, %v2183
      %v2229 = vpack.c.b16 %v2187, %v2184
      %v2230 = vpack.c.b16 %v2188, %v2185
      %v2231 = vpack.c.b16 %v2192, %v2189
      %v2232 = vpack.c.b16 %v2193, %v2190
      %v2233 = vpack.c.b16 %v2194, %v2191
      %v2234 = vpack.c.b16 %v2195, %v2195
      %v2235 = vpack.c.b16 %v2196, %v2196
      %v2236 = vpack.c.b16 %v2197, %v2197
      %v2264 = vsel %vm556, %v2200, 0
      %v2267 = vsel %vm556, %v2203, 0
      %v2270 = vsel %vm556, %v2206, 0
      %v2273 = vsel %vm556, %v2209, 0
      %v2276 = vsel %vm556, %v2212, 0
      %v2279 = vsel %vm556, %v2215, 0
      %v2282 = vsel %vm556, %v2218, 0
      %v2285 = vsel %vm556, %v2221, 0
      %v2288 = vsel %vm556, %v2224, 0
      %v2291 = vsel %vm556, %v2227, 0
      %v2294 = vsel %vm556, %v2230, 0
      %v2297 = vsel %vm556, %v2233, 0
      %v2300 = vsel %vm556, %v2236, 0
      %2302 = vmatprep.subr.bf16.mxu0 0
      %2303 = vmatpush1.bf16.msra.mxu0 %v527
      %2304 = vmatprep.subr.bf16.mxu0 0
      %2305 = vmatpush1.bf16.msra.mxu0 %v526
      %2306 = vmatprep.subr.bf16.mxu0 0
      %2307 = vmatpush1.bf16.msra.mxu0 %v525
      %2308 = vmatprep.subr.bf16.mxu0 0
      %2309 = vmatpush1.bf16.msra.mxu0 %v524
      %2310 = vmatprep.subr.bf16.mxu0 0
      %2311 = vmatpush1.bf16.msra.mxu0 %v523
      %2312 = vmatprep.subr.bf16.mxu0 0
      %2313 = vmatpush1.bf16.msra.mxu0 %v522
      %2314 = vmatprep.subr.bf16.mxu0 0
      %2315 = vmatpush1.bf16.msra.mxu0 %v521
      %2316 = vmatprep.subr.bf16.mxu0 0
      %2317 = vmatpush1.bf16.msra.mxu0 %v520
      %2318 = vmatprep.subr.bf16.mxu0 0
      %2319 = vmatpush2.bf16.msra.mxu0 %v535
      %2320 = vmatprep.subr.bf16.mxu0 0
      %2321 = vmatpush2.bf16.msra.mxu0 %v534
      %2322 = vmatprep.subr.bf16.mxu0 0
      %2323 = vmatpush2.bf16.msra.mxu0 %v533
      %2324 = vmatprep.subr.bf16.mxu0 0
      %2325 = vmatpush2.bf16.msra.mxu0 %v532
      %2326 = vmatprep.subr.bf16.mxu0 0
      %2327 = vmatpush2.bf16.msra.mxu0 %v531
      %2328 = vmatprep.subr.bf16.mxu0 0
      %2329 = vmatpush2.bf16.msra.mxu0 %v530
      %2330 = vmatprep.subr.bf16.mxu0 0
      %2331 = vmatpush2.bf16.msra.mxu0 %v529
      %2332 = vmatprep.subr.bf16.mxu0 0
      %2333 = vmatpush2.bf16.msra.mxu0 %v528
      %2334 = vmatprep.mubr.bf16.mxu0 %v2199
      %2335 = vmatmul.mubr.bf16.gmra.mxu0 %v2198
      %v2336 = vpop.f32.mrf.mxu0
      %v2337 = vadd.f32 0.0, %v2336
      %v2338 = vpop.f32.mrf.mxu0
      %v2339 = vpop.f32.mrf.mxu0
      %v2340 = vadd.f32 0.0, %v2339
      %v2341 = vpop.f32.mrf.mxu0
      %2342 = vmatprep.mubr.bf16.mxu0 %v2202
      %2343 = vmatmul.mubr.bf16.gmra.mxu0 %v2201
      %v2344 = vpop.f32.mrf.mxu0
      %v2345 = vadd.f32 0.0, %v2344
      %v2346 = vpop.f32.mrf.mxu0
      %v2347 = vpop.f32.mrf.mxu0
      %v2348 = vadd.f32 0.0, %v2347
      %v2349 = vpop.f32.mrf.mxu0
      %2350 = vmatprep.mubr.bf16.mxu0 %v2205
      %2351 = vmatmul.mubr.bf16.gmra.mxu0 %v2204
      %v2352 = vpop.f32.mrf.mxu0
      %v2353 = vadd.f32 0.0, %v2352
      %v2354 = vpop.f32.mrf.mxu0
      %v2355 = vpop.f32.mrf.mxu0
      %v2356 = vadd.f32 0.0, %v2355
      %v2357 = vpop.f32.mrf.mxu0
      %2358 = vmatprep.mubr.bf16.mxu0 %v2208
      %2359 = vmatmul.mubr.bf16.gmra.mxu0 %v2207
      %v2360 = vpop.f32.mrf.mxu0
      %v2361 = vadd.f32 0.0, %v2360
      %v2362 = vpop.f32.mrf.mxu0
      %v2363 = vpop.f32.mrf.mxu0
      %v2364 = vadd.f32 0.0, %v2363
      %v2365 = vpop.f32.mrf.mxu0
      %2366 = vmatprep.mubr.bf16.mxu0 %v2211
      %2367 = vmatmul.mubr.bf16.gmra.mxu0 %v2210
      %v2368 = vpop.f32.mrf.mxu0
      %v2369 = vadd.f32 0.0, %v2368
      %v2370 = vpop.f32.mrf.mxu0
      %v2371 = vpop.f32.mrf.mxu0
      %v2372 = vadd.f32 0.0, %v2371
      %v2373 = vpop.f32.mrf.mxu0
      %2374 = vmatprep.mubr.bf16.mxu0 %v2214
      %2375 = vmatmul.mubr.bf16.gmra.mxu0 %v2213
      %v2376 = vpop.f32.mrf.mxu0
      %v2377 = vadd.f32 0.0, %v2376
      %v2378 = vpop.f32.mrf.mxu0
      %v2379 = vpop.f32.mrf.mxu0
      %v2380 = vadd.f32 0.0, %v2379
      %v2381 = vpop.f32.mrf.mxu0
      %2382 = vmatprep.mubr.bf16.mxu0 %v2217
      %2383 = vmatmul.mubr.bf16.gmra.mxu0 %v2216
      %v2384 = vpop.f32.mrf.mxu0
      %v2385 = vadd.f32 0.0, %v2384
      %v2386 = vpop.f32.mrf.mxu0
      %v2387 = vpop.f32.mrf.mxu0
      %v2388 = vadd.f32 0.0, %v2387
      %v2389 = vpop.f32.mrf.mxu0
      %2390 = vmatprep.mubr.bf16.mxu0 %v2220
      %2391 = vmatmul.mubr.bf16.gmra.mxu0 %v2219
      %v2392 = vpop.f32.mrf.mxu0
      %v2393 = vadd.f32 0.0, %v2392
      %v2394 = vpop.f32.mrf.mxu0
      %v2395 = vpop.f32.mrf.mxu0
      %v2396 = vadd.f32 0.0, %v2395
      %v2397 = vpop.f32.mrf.mxu0
      %2398 = vmatprep.mubr.bf16.mxu0 %v2223
      %2399 = vmatmul.mubr.bf16.gmra.mxu0 %v2222
      %v2400 = vpop.f32.mrf.mxu0
      %v2401 = vadd.f32 0.0, %v2400
      %v2402 = vpop.f32.mrf.mxu0
      %v2403 = vpop.f32.mrf.mxu0
      %v2404 = vadd.f32 0.0, %v2403
      %v2405 = vpop.f32.mrf.mxu0
      %2406 = vmatprep.mubr.bf16.mxu0 %v2226
      %2407 = vmatmul.mubr.bf16.gmra.mxu0 %v2225
      %v2408 = vpop.f32.mrf.mxu0
      %v2409 = vadd.f32 0.0, %v2408
      %v2410 = vpop.f32.mrf.mxu0
      %v2411 = vpop.f32.mrf.mxu0
      %v2412 = vadd.f32 0.0, %v2411
      %v2413 = vpop.f32.mrf.mxu0
      %2414 = vmatprep.mubr.bf16.mxu0 %v2229
      %2415 = vmatmul.mubr.bf16.gmra.mxu0 %v2228
      %v2416 = vpop.f32.mrf.mxu0
      %v2417 = vadd.f32 0.0, %v2416
      %v2418 = vpop.f32.mrf.mxu0
      %v2419 = vpop.f32.mrf.mxu0
      %v2420 = vadd.f32 0.0, %v2419
      %v2421 = vpop.f32.mrf.mxu0
      %2422 = vmatprep.mubr.bf16.mxu0 %v2232
      %2423 = vmatmul.mubr.bf16.gmra.mxu0 %v2231
      %v2424 = vpop.f32.mrf.mxu0
      %v2425 = vadd.f32 0.0, %v2424
      %v2426 = vpop.f32.mrf.mxu0
      %v2427 = vpop.f32.mrf.mxu0
      %v2428 = vadd.f32 0.0, %v2427
      %v2429 = vpop.f32.mrf.mxu0
      %2430 = vmatprep.mubr.bf16.mxu0 %v2235
      %2431 = vmatmul.mubr.bf16.gmra.mxu0 %v2234
      %v2432 = vpop.f32.mrf.mxu0
      %v2433 = vadd.f32 0.0, %v2432
      %v2434 = vpop.f32.mrf.mxu0
      %v2435 = vpop.f32.mrf.mxu0
      %v2436 = vpop.f32.mrf.mxu0
      %2437 = vdwg.mxu0
      %2438 = vmatprep.subr.bf16.mxu0 0
      %2439 = vmatpush1.bf16.msra.mxu0 0
      %2440 = vmatprep.subr.bf16.mxu0 0
      %2441 = vmatpush1.bf16.msra.mxu0 0
      %2442 = vmatprep.subr.bf16.mxu0 0
      %2443 = vmatpush1.bf16.msra.mxu0 0
      %2444 = vmatprep.subr.bf16.mxu0 0
      %2445 = vmatpush1.bf16.msra.mxu0 0
      %2446 = vmatprep.subr.bf16.mxu0 0
      %2447 = vmatpush1.bf16.msra.mxu0 0
      %2448 = vmatprep.subr.bf16.mxu0 0
      %2449 = vmatpush1.bf16.msra.mxu0 0
      %2450 = vmatprep.subr.bf16.mxu0 0
      %2451 = vmatpush1.bf16.msra.mxu0 %v537
      %2452 = vmatprep.subr.bf16.mxu0 0
      %2453 = vmatpush1.bf16.msra.mxu0 %v536
      %2454 = vmatprep.subr.bf16.mxu0 0
      %2455 = vmatpush2.bf16.msra.mxu0 0
      %2456 = vmatprep.subr.bf16.mxu0 0
      %2457 = vmatpush2.bf16.msra.mxu0 0
      %2458 = vmatprep.subr.bf16.mxu0 0
      %2459 = vmatpush2.bf16.msra.mxu0 0
      %2460 = vmatprep.subr.bf16.mxu0 0
      %2461 = vmatpush2.bf16.msra.mxu0 0
      %2462 = vmatprep.subr.bf16.mxu0 0
      %2463 = vmatpush2.bf16.msra.mxu0 0
      %2464 = vmatprep.subr.bf16.mxu0 0
      %2465 = vmatpush2.bf16.msra.mxu0 0
      %2466 = vmatprep.subr.bf16.mxu0 0
      %2467 = vmatpush2.bf16.msra.mxu0 0
      %2468 = vmatprep.subr.bf16.mxu0 0
      %2469 = vmatpush2.bf16.msra.mxu0 0
      %2470 = vmatprep.mubr.bf16.mxu0 0
      %2471 = vmatmul.mubr.bf16.gmra.mxu0 %v2264
      %v2472 = vpop.f32.mrf.mxu0
      %v2473 = vadd.f32 %v2337, %v2472
      %v2474 = vpop.f32.mrf.mxu0
      %v2475 = vpop.f32.mrf.mxu0
      %v2476 = vadd.f32 %v2340, %v2475
      %v2477 = vpop.f32.mrf.mxu0
      %2478 = vmatprep.mubr.bf16.mxu0 0
      %2479 = vmatmul.mubr.bf16.gmra.mxu0 %v2267
      %v2480 = vpop.f32.mrf.mxu0
      %v2481 = vadd.f32 %v2345, %v2480
      %v2482 = vpop.f32.mrf.mxu0
      %v2483 = vpop.f32.mrf.mxu0
      %v2484 = vadd.f32 %v2348, %v2483
      %v2485 = vpop.f32.mrf.mxu0
      %2486 = vmatprep.mubr.bf16.mxu0 0
      %2487 = vmatmul.mubr.bf16.gmra.mxu0 %v2270
      %v2488 = vpop.f32.mrf.mxu0
      %v2489 = vadd.f32 %v2353, %v2488
      %v2490 = vpop.f32.mrf.mxu0
      %v2491 = vpop.f32.mrf.mxu0
      %v2492 = vadd.f32 %v2356, %v2491
      %v2493 = vpop.f32.mrf.mxu0
      %2494 = vmatprep.mubr.bf16.mxu0 0
      %2495 = vmatmul.mubr.bf16.gmra.mxu0 %v2273
      %v2496 = vpop.f32.mrf.mxu0
      %v2497 = vadd.f32 %v2361, %v2496
      %v2498 = vpop.f32.mrf.mxu0
      %v2499 = vpop.f32.mrf.mxu0
      %v2500 = vadd.f32 %v2364, %v2499
      %v2501 = vpop.f32.mrf.mxu0
      %2502 = vmatprep.mubr.bf16.mxu0 0
      %2503 = vmatmul.mubr.bf16.gmra.mxu0 %v2276
      %v2504 = vpop.f32.mrf.mxu0
      %v2505 = vadd.f32 %v2369, %v2504
      %v2506 = vpop.f32.mrf.mxu0
      %v2507 = vpop.f32.mrf.mxu0
      %v2508 = vadd.f32 %v2372, %v2507
      %v2509 = vpop.f32.mrf.mxu0
      %2510 = vmatprep.mubr.bf16.mxu0 0
      %2511 = vmatmul.mubr.bf16.gmra.mxu0 %v2279
      %v2512 = vpop.f32.mrf.mxu0
      %v2513 = vadd.f32 %v2377, %v2512
      %v2514 = vpop.f32.mrf.mxu0
      %v2515 = vpop.f32.mrf.mxu0
      %v2516 = vadd.f32 %v2380, %v2515
      %v2517 = vpop.f32.mrf.mxu0
      %2518 = vmatprep.mubr.bf16.mxu0 0
      %2519 = vmatmul.mubr.bf16.gmra.mxu0 %v2282
      %v2520 = vpop.f32.mrf.mxu0
      %v2521 = vadd.f32 %v2385, %v2520
      %v2522 = vpop.f32.mrf.mxu0
      %v2523 = vpop.f32.mrf.mxu0
      %v2524 = vadd.f32 %v2388, %v2523
      %v2525 = vpop.f32.mrf.mxu0
      %2526 = vmatprep.mubr.bf16.mxu0 0
      %2527 = vmatmul.mubr.bf16.gmra.mxu0 %v2285
      %v2528 = vpop.f32.mrf.mxu0
      %v2529 = vadd.f32 %v2393, %v2528
      %v2530 = vpop.f32.mrf.mxu0
      %v2531 = vpop.f32.mrf.mxu0
      %v2532 = vadd.f32 %v2396, %v2531
      %v2533 = vpop.f32.mrf.mxu0
      %2534 = vmatprep.mubr.bf16.mxu0 0
      %2535 = vmatmul.mubr.bf16.gmra.mxu0 %v2288
      %v2536 = vpop.f32.mrf.mxu0
      %v2537 = vadd.f32 %v2401, %v2536
      %v2538 = vpop.f32.mrf.mxu0
      %v2539 = vpop.f32.mrf.mxu0
      %v2540 = vadd.f32 %v2404, %v2539
      %v2541 = vpop.f32.mrf.mxu0
      %2542 = vmatprep.mubr.bf16.mxu0 0
      %2543 = vmatmul.mubr.bf16.gmra.mxu0 %v2291
      %v2544 = vpop.f32.mrf.mxu0
      %v2545 = vadd.f32 %v2409, %v2544
      %v2546 = vpop.f32.mrf.mxu0
      %v2547 = vpop.f32.mrf.mxu0
      %v2548 = vadd.f32 %v2412, %v2547
      %v2549 = vpop.f32.mrf.mxu0
      %2550 = vmatprep.mubr.bf16.mxu0 0
      %2551 = vmatmul.mubr.bf16.gmra.mxu0 %v2294
      %v2552 = vpop.f32.mrf.mxu0
      %v2553 = vadd.f32 %v2417, %v2552
      %v2554 = vpop.f32.mrf.mxu0
      %v2555 = vpop.f32.mrf.mxu0
      %v2556 = vadd.f32 %v2420, %v2555
      %v2557 = vpop.f32.mrf.mxu0
      %2558 = vmatprep.mubr.bf16.mxu0 0
      %2559 = vmatmul.mubr.bf16.gmra.mxu0 %v2297
      %v2560 = vpop.f32.mrf.mxu0
      %v2561 = vadd.f32 %v2425, %v2560
      %v2562 = vpop.f32.mrf.mxu0
      %v2563 = vpop.f32.mrf.mxu0
      %v2564 = vadd.f32 %v2428, %v2563
      %v2565 = vpop.f32.mrf.mxu0
      %2566 = vmatprep.mubr.bf16.mxu0 0
      %2567 = vmatmul.mubr.bf16.gmra.mxu0 %v2300
      %v2568 = vpop.f32.mrf.mxu0
      %v2569 = vadd.f32 %v2433, %v2568
      %v2570 = vpop.f32.mrf.mxu0
      %v2571 = vpop.f32.mrf.mxu0
      %v2572 = vpop.f32.mrf.mxu0
      %2573 = vdwg.mxu0
      %v2574 = vmax.f32 %v1997, %v2473
      %v2575 = vmax.f32 %v1998, %v2476
      %v2576 = vmax.f32 %v1999, %v2481
      %v2577 = vmax.f32 %v2000, %v2484
      %v2578 = vmax.f32 %v2001, %v2489
      %v2579 = vmax.f32 %v2002, %v2492
      %v2580 = vmax.f32 %v2003, %v2497
      %v2581 = vmax.f32 %v2004, %v2500
      %v2582 = vmax.f32 %v2005, %v2505
      %v2583 = vmax.f32 %v2006, %v2508
      %v2584 = vmax.f32 %v2007, %v2513
      %v2585 = vmax.f32 %v2008, %v2516
      %v2586 = vmax.f32 %v2009, %v2521
      %v2587 = vmax.f32 %v2010, %v2524
      %v2588 = vmax.f32 %v2011, %v2529
      %v2589 = vmax.f32 %v2012, %v2532
      %v2590 = vmax.f32 %v2013, %v2537
      %v2591 = vmax.f32 %v2014, %v2540
      %v2592 = vmax.f32 %v2015, %v2545
      %v2593 = vmax.f32 %v2016, %v2548
      %v2594 = vmax.f32 %v2017, %v2553
      %v2595 = vmax.f32 %v2018, %v2556
      %v2596 = vmax.f32 %v2019, %v2561
      %v2597 = vmax.f32 %v2020, %v2564
      %v2598 = vmax.f32 %v2021, %v2569
      %v2599 = vld [vmem:[%s2] sm:$0x1]
      %v2601 = vlaneseq
      %v2602 = vshrl.u32 %v2601, 7
      %v2603 = vsub.s32 0, %v2602
      %v2604 = vrot.slane %v2599, %v2603
      %v2606 = vadd.f32 %v2574, %v2604
      %v2607 = vadd.f32 %v2575, %v2604
      %v2608 = vadd.f32 %v2576, %v2604
      %v2609 = vadd.f32 %v2577, %v2604
      %v2610 = vadd.f32 %v2578, %v2604
      %v2611 = vadd.f32 %v2579, %v2604
      %v2612 = vadd.f32 %v2580, %v2604
      %v2613 = vadd.f32 %v2581, %v2604
      %v2614 = vadd.f32 %v2582, %v2604
      %v2615 = vadd.f32 %v2583, %v2604
      %v2616 = vadd.f32 %v2584, %v2604
      %v2617 = vadd.f32 %v2585, %v2604
      %v2618 = vadd.f32 %v2586, %v2604
      %v2619 = vadd.f32 %v2587, %v2604
      %v2620 = vadd.f32 %v2588, %v2604
      %v2621 = vadd.f32 %v2589, %v2604
      %v2622 = vadd.f32 %v2590, %v2604
      %v2623 = vadd.f32 %v2591, %v2604
      %v2624 = vadd.f32 %v2592, %v2604
      %v2625 = vadd.f32 %v2593, %v2604
      %v2626 = vadd.f32 %v2594, %v2604
      %v2627 = vadd.f32 %v2595, %v2604
      %v2628 = vadd.f32 %v2596, %v2604
      %v2629 = vadd.f32 %v2597, %v2604
      %v2630 = vadd.f32 %v2598, %v2604
      %v2631 = vmax.f32 %v2606, 0.0
      %v2632 = vmax.f32 %v2607, 0.0
      %v2633 = vmax.f32 %v2608, 0.0
      %v2634 = vmax.f32 %v2609, 0.0
      %v2635 = vmax.f32 %v2610, 0.0
      %v2636 = vmax.f32 %v2611, 0.0
      %v2637 = vmax.f32 %v2612, 0.0
      %v2638 = vmax.f32 %v2613, 0.0
      %v2639 = vmax.f32 %v2614, 0.0
      %v2640 = vmax.f32 %v2615, 0.0
      %v2641 = vmax.f32 %v2616, 0.0
      %v2642 = vmax.f32 %v2617, 0.0
      %v2643 = vmax.f32 %v2618, 0.0
      %v2644 = vmax.f32 %v2619, 0.0
      %v2645 = vmax.f32 %v2620, 0.0
      %v2646 = vmax.f32 %v2621, 0.0
      %v2647 = vmax.f32 %v2622, 0.0
      %v2648 = vmax.f32 %v2623, 0.0
      %v2649 = vmax.f32 %v2624, 0.0
      %v2650 = vmax.f32 %v2625, 0.0
      %v2651 = vmax.f32 %v2626, 0.0
      %v2652 = vmax.f32 %v2627, 0.0
      %v2653 = vmax.f32 %v2628, 0.0
      %v2654 = vmax.f32 %v2629, 0.0
      %v2655 = vmax.f32 %v2630, 0.0
      %v2656 = vpack.c.bf16 %v2632, %v2631
      %v2657 = vpack.c.bf16 %v2634, %v2633
      %v2658 = vpack.c.bf16 %v2636, %v2635
      %v2659 = vpack.c.bf16 %v2638, %v2637
      %v2660 = vpack.c.bf16 %v2640, %v2639
      %v2661 = vpack.c.bf16 %v2642, %v2641
      %v2662 = vpack.c.bf16 %v2644, %v2643
      %v2663 = vpack.c.bf16 %v2646, %v2645
      %v2664 = vpack.c.bf16 %v2648, %v2647
      %v2665 = vpack.c.bf16 %v2650, %v2649
      %v2666 = vpack.c.bf16 %v2652, %v2651
      %v2667 = vpack.c.bf16 %v2654, %v2653
      %v2668 = vpack.c.bf16 %v2655, %v2655
      %v2682 = vunpack.c.l.b16 %v2656
      %v2683 = vunpack.c.h.b16 %v2656
      %v2684 = vunpack.c.l.b16 %v2657
      %v2685 = vunpack.c.h.b16 %v2657
      %v2686 = vunpack.c.l.b16 %v2658
      %v2687 = vunpack.c.h.b16 %v2658
      %v2688 = vunpack.c.l.b16 %v2659
      %v2689 = vunpack.c.h.b16 %v2659
      %v2690 = vunpack.c.l.b16 %v2660
      %v2691 = vunpack.c.h.b16 %v2660
      %v2692 = vunpack.c.l.b16 %v2661
      %v2693 = vunpack.c.h.b16 %v2661
      %v2694 = vunpack.c.l.b16 %v2662
      %v2695 = vunpack.c.h.b16 %v2662
      %v2696 = vunpack.c.l.b16 %v2663
      %v2697 = vunpack.c.h.b16 %v2663
      %v2698 = vunpack.c.l.b16 %v2664
      %v2699 = vunpack.c.h.b16 %v2664
      %v2700 = vunpack.c.l.b16 %v2665
      %v2701 = vunpack.c.h.b16 %v2665
      %v2702 = vunpack.c.l.b16 %v2666
      %v2703 = vunpack.c.h.b16 %v2666
      %v2704 = vunpack.c.l.b16 %v2667
      %v2705 = vunpack.c.h.b16 %v2667
      %v2706 = vunpack.c.l.b16 %v2668
      %v2707 = vpack.c.b16 %v2682, %v2682
      %v2708 = vpack.c.b16 %v2683, %v2683
      %v2709 = vpack.c.b16 %v2684, %v2684
      %v2710 = vpack.c.b16 %v2685, %v2685
      %v2711 = vpack.c.b16 %v2686, %v2686
      %v2712 = vpack.c.b16 %v2687, %v2687
      %v2713 = vpack.c.b16 %v2688, %v2688
      %v2714 = vpack.c.b16 %v2689, %v2689
      %v2715 = vpack.c.b16 %v2690, %v2690
      %v2716 = vpack.c.b16 %v2691, %v2691
      %v2717 = vpack.c.b16 %v2692, %v2692
      %v2718 = vpack.c.b16 %v2693, %v2693
      %v2719 = vpack.c.b16 %v2694, %v2694
      %v2720 = vpack.c.b16 %v2695, %v2695
      %v2721 = vpack.c.b16 %v2696, %v2696
      %v2722 = vpack.c.b16 %v2697, %v2697
      %v2723 = vpack.c.b16 %v2698, %v2698
      %v2724 = vpack.c.b16 %v2699, %v2699
      %v2725 = vpack.c.b16 %v2700, %v2700
      %v2726 = vpack.c.b16 %v2701, %v2701
      %v2727 = vpack.c.b16 %v2702, %v2702
      %v2728 = vpack.c.b16 %v2703, %v2703
      %v2729 = vpack.c.b16 %v2704, %v2704
      %v2730 = vpack.c.b16 %v2705, %v2705
      %v2731 = vpack.c.b16 %v2706, %v2706
      %vm2757 = vcmask 519168
      %2758 = vst.msk [vmem:[%s170] sm:$0xf] %vm2757, %v2707
      %2759 = vst.msk [vmem:[%s170 + $0x4] sm:$0xf] %vm2757, %v2708
      %2760 = vst.msk [vmem:[%s170 + $0x8] sm:$0xf] %vm2757, %v2709
      %2761 = vst.msk [vmem:[%s170 + $0xc] sm:$0xf] %vm2757, %v2710
      %2762 = vst.msk [vmem:[%s170 + $0x10] sm:$0xf] %vm2757, %v2711
      %2763 = vst.msk [vmem:[%s170 + $0x14] sm:$0xf] %vm2757, %v2712
      %2764 = vst.msk [vmem:[%s170 + $0x18] sm:$0xf] %vm2757, %v2713
      %2765 = vst.msk [vmem:[%s170 + $0x1c] sm:$0xf] %vm2757, %v2714
      %2766 = vst.msk [vmem:[%s170 + $0x20] sm:$0xf] %vm2757, %v2715
      %2767 = vst.msk [vmem:[%s170 + $0x24] sm:$0xf] %vm2757, %v2716
      %2768 = vst.msk [vmem:[%s170 + $0x28] sm:$0xf] %vm2757, %v2717
      %2769 = vst.msk [vmem:[%s170 + $0x2c] sm:$0xf] %vm2757, %v2718
      %2770 = vst.msk [vmem:[%s170 + $0x30] sm:$0xf] %vm2757, %v2719
      %2771 = vst.msk [vmem:[%s170 + $0x34] sm:$0xf] %vm2757, %v2720
      %2772 = vst.msk [vmem:[%s170 + $0x38] sm:$0xf] %vm2757, %v2721
      %2773 = vst.msk [vmem:[%s170 + $0x3c] sm:$0xf] %vm2757, %v2722
      %2774 = vst.msk [vmem:[%s170 + $0x40] sm:$0xf] %vm2757, %v2723
      %2775 = vst.msk [vmem:[%s170 + $0x44] sm:$0xf] %vm2757, %v2724
      %2776 = vst.msk [vmem:[%s170 + $0x48] sm:$0xf] %vm2757, %v2725
      %2777 = vst.msk [vmem:[%s170 + $0x4c] sm:$0xf] %vm2757, %v2726
      %2778 = vst.msk [vmem:[%s170 + $0x50] sm:$0xf] %vm2757, %v2727
      %2779 = vst.msk [vmem:[%s170 + $0x54] sm:$0xf] %vm2757, %v2728
      %2780 = vst.msk [vmem:[%s170 + $0x58] sm:$0xf] %vm2757, %v2729
      %2781 = vst.msk [vmem:[%s170 + $0x5c] sm:$0xf] %vm2757, %v2730
      %vm2782 = vcmask 517120
      %2783 = vst.msk [vmem:[%s170 + $0x60] sm:$0x3] %vm2782, %v2731
      %p2784 = scmp.lt.s32.totalorder %s14, 1
      %s2785 = scalar_select %p2784, %s14, 1
      %s2786 = smul.addr %s2785, 25
      %s2787 = smul.addr %s2786, 4
      %s2788 = scalar_lea.vmem %s3, %s2787
      // Predicated region
      $region33: #{simple_cnn_forward.5} parent=31 // pred_check
        %p2789 = pneg %p100
      $region34: #{simple_cnn_forward.5} parent=31 // pred_check_branch
        %2791 = sbr.rel (%p2789) target = $region36
      $region35: #{simple_cnn_forward.5} parent=31 // pred_region
        _
      $region36: #{simple_cnn_forward.5} parent=31 // pred_fallthru
        _
    $region32: #{simple_cnn_forward.5} parent=5 // pred_fallthru
      _
    %p2792 = scmp.le.s32.totalorder 2, %s9
    // Predicated region
    $region37: #{simple_cnn_forward.5} parent=5 // pred_check
      %p2793 = pneg %p2792
    $region38: #{simple_cnn_forward.5} parent=5 // pred_check_branch
      %2795 = sbr.rel (%p2793) target = $region40
    $region39: #{simple_cnn_forward.5} parent=5 // pred_region
      %s2796 = ssub.s32 %s9, 2
      // Predicated region
      $region41: #{simple_cnn_forward.5} parent=39 // pred_check
        %p2797 = pneg %p106
      $region42: #{simple_cnn_forward.5} parent=39 // pred_check_branch
        %2799 = sbr.rel (%p2797) target = $region44
      $region43: #{simple_cnn_forward.5} parent=39 // pred_region
        %p2800 = scmp.lt.s32.totalorder %s15, 1
        %s2801 = scalar_select %p2800, %s15, 1
        %s2802 = smul.addr %s2801, 25
        %s2803 = smul.addr %s2802, 4
        %s2804 = scalar_lea.vmem %s3, %s2803
      $region44: #{simple_cnn_forward.5} parent=39 // pred_fallthru
        _
    $region40: #{simple_cnn_forward.5} parent=5 // pred_fallthru
      _
  $region6: #{simple_cnn_forward.5} parent=0 // loop_footer
    %s13 = sadd.s32 1, %s9
  $region7: #{simple_cnn_forward.5} parent=0 // loop_footer_branch
    %8 = sbr.rel target = $region3
  $region8: #{simple_cnn_forward.5} parent=0 // loop_exit
    _

// kernel: simple_cnn_forward.6
$region0: #{simple_cnn_forward.6}
  #allocation0 [shape = 'u32[]', space=smem, size = 0x4, offset = 0x4, fixed_abs, tag = 'smem constant byte address 0x4 - core index']
  #allocation1 [shape = 'u32[144,128]{1,0:T(1,128)}', space=vmem, size = 0x12000, scoped, tag = 'internal scratch']
  %s0 = inlined_call_operand.vmem [shape: bf16[2,12544], index: 0, kind: input, shape index: {}]
  %s1 = inlined_call_operand.vmem [shape: bf16[12544,128], index: 1, kind: input, shape index: {}]
  %s2 = inlined_call_operand.vmem [shape: f32[1,128], index: 2, kind: input, shape index: {}]
  %s3 = inlined_call_operand.vmem [shape: f32[2,128], index: 3, kind: output, shape index: {}]
  %s4 = sld [smem:[#allocation0]]
  $region53: #{simple_cnn_forward.6} parent=0
    _
  %s6 = ssub.s32 1, %s4
  %s7 = scalar_select 0, %s6, %s4
  loop: start=0, step=1, limit=9
  $region2: #{simple_cnn_forward.6} parent=0 // loop_pre_header
    _
  $region3: #{simple_cnn_forward.6} parent=0 // loop_header
    %s9 = sphi 0, %s13
    %p10 = scmp.ge.s32.totalorder %s9, 9
    %s19 = sphi 0, %s21
    %s22 = sphi 0, %s19
    %s23 = sphi 0, %s22
    %s39 = sphi 0, %s23
    %s45 = sphi 0, %s47
    %s48 = sphi 0, %s45
    %s49 = sphi 0, %s48
    %s65 = sphi 0, %s49
    %s69 = sphi 0, %s69
    %s71 = sphi 0, %s69
    %s72 = sphi 0, %s71
    %s86 = sphi 0, %s72
    %s90 = sphi 0, %s90
    %s92 = sphi 0, %s90
    %s93 = sphi 0, %s92
    %s107 = sphi 0, %s93
  $region4: #{simple_cnn_forward.6} parent=0 // loop_header_branch
    %12 = sbr.rel (%p10) target = $region8
  $region5: #{simple_cnn_forward.6} parent=0 // loop_body
    %s14 = ssub.s32 %s9, 1
    %s15 = ssub.s32 %s9, 2
    %s16 = sadd.s32 %s9, 1
    %s17 = ssub.s32 %s9, %s16
    %p18 = scmp.eq.s32.totalorder %s17, 0
    %s20 = sadd.s32 %s19, 1
    %s21 = scalar_select %p18, %s19, %s20
    %p24 = pneg %p18
    %p25 = scmp.eq.s32.totalorder %s9, 6
    %p26 = por %p24, %p25
    %p27 = scmp.ne.s32.totalorder %s19, %s22
    %p28 = scmp.eq.s32.totalorder %s9, 0
    %p29 = por %p27, %p28
    %p30 = scmp.ne.s32.totalorder %s19, %s22
    %p31 = scmp.eq.s32.totalorder %s14, 6
    %p32 = por %p30, %p31
    %p33 = scmp.ne.s32.totalorder %s22, %s23
    %p34 = scmp.eq.s32.totalorder %s14, 0
    %p35 = por %p33, %p34
    %p36 = scmp.ne.s32.totalorder %s22, %s23
    %p37 = scmp.eq.s32.totalorder %s15, 6
    %p38 = por %p36, %p37
    %p40 = scmp.ne.s32.totalorder %s23, %s39
    %p41 = scmp.eq.s32.totalorder %s15, 0
    %p42 = por %p40, %p41
    %s43 = ssub.s32 %s9, %s16
    %p44 = scmp.eq.s32.totalorder %s43, 0
    %s46 = sadd.s32 %s45, 1
    %s47 = scalar_select %p44, %s45, %s46
    %p50 = pneg %p44
    %p51 = scmp.eq.s32.totalorder %s9, 6
    %p52 = por %p50, %p51
    %p53 = scmp.ne.s32.totalorder %s45, %s48
    %p54 = scmp.eq.s32.totalorder %s9, 0
    %p55 = por %p53, %p54
    %p56 = scmp.ne.s32.totalorder %s45, %s48
    %p57 = scmp.eq.s32.totalorder %s14, 6
    %p58 = por %p56, %p57
    %p59 = scmp.ne.s32.totalorder %s48, %s49
    %p60 = scmp.eq.s32.totalorder %s14, 0
    %p61 = por %p59, %p60
    %p62 = scmp.ne.s32.totalorder %s48, %s49
    %p63 = scmp.eq.s32.totalorder %s15, 6
    %p64 = por %p62, %p63
    %p66 = scmp.ne.s32.totalorder %s49, %s65
    %p67 = scmp.eq.s32.totalorder %s15, 0
    %p68 = por %p66, %p67
    %s70 = sadd.s32 %s69, 1
    %p73 = scmp.eq.s32.totalorder %s9, 6
    %p74 = scmp.ne.s32.totalorder %s69, %s71
    %p75 = scmp.eq.s32.totalorder %s9, 0
    %p76 = por %p74, %p75
    %p77 = scmp.ne.s32.totalorder %s69, %s71
    %p78 = scmp.eq.s32.totalorder %s14, 6
    %p79 = por %p77, %p78
    %p80 = scmp.ne.s32.totalorder %s71, %s72
    %p81 = scmp.eq.s32.totalorder %s14, 0
    %p82 = por %p80, %p81
    %p83 = scmp.ne.s32.totalorder %s71, %s72
    %p84 = scmp.eq.s32.totalorder %s15, 6
    %p85 = por %p83, %p84
    %p87 = scmp.ne.s32.totalorder %s72, %s86
    %p88 = scmp.eq.s32.totalorder %s15, 0
    %p89 = por %p87, %p88
    %s91 = sadd.s32 %s90, 1
    %p94 = scmp.eq.s32.totalorder %s9, 6
    %p95 = scmp.ne.s32.totalorder %s90, %s92
    %p96 = scmp.eq.s32.totalorder %s9, 0
    %p97 = por %p95, %p96
    %p98 = scmp.ne.s32.totalorder %s90, %s92
    %p99 = scmp.eq.s32.totalorder %s14, 6
    %p100 = por %p98, %p99
    %p101 = scmp.ne.s32.totalorder %s92, %s93
    %p102 = scmp.eq.s32.totalorder %s14, 0
    %p103 = por %p101, %p102
    %p104 = scmp.ne.s32.totalorder %s92, %s93
    %p105 = scmp.eq.s32.totalorder %s15, 6
    %p106 = por %p104, %p105
    %p108 = scmp.ne.s32.totalorder %s93, %s107
    %p109 = scmp.eq.s32.totalorder %s15, 0
    %p110 = por %p108, %p109
    %p111 = scmp.le.s32.totalorder 1, %s9
    %p112 = scmp.lt.s32.totalorder %s9, 8
    %p113 = pnand %p111, %p112
    %p114 = pneg %p113
    // Predicated region
    $region9: #{simple_cnn_forward.6} parent=5 // pred_check
      _
    $region10: #{simple_cnn_forward.6} parent=5 // pred_check_branch
      %116 = sbr.rel (%p113) target = $region12
    $region11: #{simple_cnn_forward.6} parent=5 // pred_region
      %s117 = ssub.s32 %s9, 1
      // Predicated region
      $region13: #{simple_cnn_forward.6} parent=11 // pred_check
        %p118 = pneg %p82
      $region14: #{simple_cnn_forward.6} parent=11 // pred_check_branch
        %120 = sbr.rel (%p118) target = $region16
      $region15: #{simple_cnn_forward.6} parent=11 // pred_region
        _
      $region16: #{simple_cnn_forward.6} parent=11 // pred_fallthru
        _
    $region12: #{simple_cnn_forward.6} parent=5 // pred_fallthru
      _
    %p121 = scmp.lt.s32.totalorder %s9, 7
    // Predicated region
    $region17: #{simple_cnn_forward.6} parent=5 // pred_check
      %p122 = pneg %p121
    $region18: #{simple_cnn_forward.6} parent=5 // pred_check_branch
      %124 = sbr.rel (%p122) target = $region20
    $region19: #{simple_cnn_forward.6} parent=5 // pred_region
      // Predicated region
      $region21: #{simple_cnn_forward.6} parent=19 // pred_check
        %p125 = pneg %p29
      $region22: #{simple_cnn_forward.6} parent=19 // pred_check_branch
        %127 = sbr.rel (%p125) target = $region24
      $region23: #{simple_cnn_forward.6} parent=19 // pred_region
        %s128 = smul.u32 14, %s9
        %p129 = scmp.lt.s32.totalorder %s128, 97
        %s130 = scalar_select %p129, %s128, 97
        %s131 = scalar_lea.vmem %s0, %s130
        %s132 = smul.u32 14, %s9
      $region24: #{simple_cnn_forward.6} parent=19 // pred_fallthru
        _
      // Predicated region
      $region25: #{simple_cnn_forward.6} parent=19 // pred_check
        %p133 = pneg %p55
      $region26: #{simple_cnn_forward.6} parent=19 // pred_check_branch
        %135 = sbr.rel (%p133) target = $region28
      $region27: #{simple_cnn_forward.6} parent=19 // pred_region
        %s136 = smul.u32 224, %s9
        %p137 = scmp.lt.s32.totalorder %s136, 1567
        %s138 = scalar_select %p137, %s136, 1567
        %s139 = smul.addr %s138, 4
        %s140 = scalar_lea.vmem %s1, %s139
        %s141 = smul.u32 224, %s9
      $region28: #{simple_cnn_forward.6} parent=19 // pred_fallthru
        _
    $region20: #{simple_cnn_forward.6} parent=5 // pred_fallthru
      _
    %p142 = scmp.le.s32.totalorder 1, %s9
    %p143 = scmp.lt.s32.totalorder %s9, 8
    %p144 = pnand %p142, %p143
    %p145 = pneg %p144
    // Predicated region
    $region29: #{simple_cnn_forward.6} parent=5 // pred_check
      _
    $region30: #{simple_cnn_forward.6} parent=5 // pred_check_branch
      %147 = sbr.rel (%p144) target = $region32
    $region31: #{simple_cnn_forward.6} parent=5 // pred_region
      %s148 = ssub.s32 %s9, 1
      %s149 = smul.u32 14, %s14
      %p150 = scmp.lt.s32.totalorder %s149, 97
      %s151 = scalar_select %p150, %s149, 97
      %s152 = scalar_lea.vmem %s0, %s151
      %p153 = pneg %p35
      %p154 = pneg %p32
      %s155 = smul.u32 224, %s14
      %p156 = scmp.lt.s32.totalorder %s155, 1567
      %s157 = scalar_select %p156, %s155, 1567
      %s158 = smul.addr %s157, 4
      %s159 = scalar_lea.vmem %s1, %s158
      %p160 = pneg %p61
      %p161 = pneg %p58
      %p162 = pneg %p82
      %p163 = pneg %p79
      %p164 = pneg %p103
      %p165 = pneg %p100
      %s166 = smul.u32 14, %s14
      %p167 = scmp.lt.s32.totalorder %s166, 97
      %s168 = scalar_select %p167, %s166, 97
      %s169 = scalar_lea.vmem %s0, %s168
      %s170 = smul.u32 14, %s14
      %s171 = smul.u32 224, %s14
      %p172 = scmp.lt.s32.totalorder %s171, 1567
      %s173 = scalar_select %p172, %s171, 1567
      %s174 = smul.addr %s173, 4
      %s175 = scalar_lea.vmem %s1, %s174
      %s176 = smul.u32 224, %s14
      %v178 = vld [vmem:[%s169] sm:$0xff]
      %v179 = vld [vmem:[%s169 + $0x8] sm:$0x3f]
      %v180 = vld [vmem:[%s175] sm:$0xf]
      %v181 = vld [vmem:[%s175 + $0x4] sm:$0xf]
      %v182 = vld [vmem:[%s175 + $0x8] sm:$0xf]
      %v183 = vld [vmem:[%s175 + $0xc] sm:$0xf]
      %v184 = vld [vmem:[%s175 + $0x10] sm:$0xf]
      %v185 = vld [vmem:[%s175 + $0x14] sm:$0xf]
      %v186 = vld [vmem:[%s175 + $0x18] sm:$0xf]
      %v187 = vld [vmem:[%s175 + $0x1c] sm:$0xf]
      %v188 = vld [vmem:[%s175 + $0x20] sm:$0xf]
      %v189 = vld [vmem:[%s175 + $0x24] sm:$0xf]
      %v190 = vld [vmem:[%s175 + $0x28] sm:$0xf]
      %v191 = vld [vmem:[%s175 + $0x2c] sm:$0xf]
      %v192 = vld [vmem:[%s175 + $0x30] sm:$0xf]
      %v193 = vld [vmem:[%s175 + $0x34] sm:$0xf]
      %v194 = vld [vmem:[%s175 + $0x38] sm:$0xf]
      %v195 = vld [vmem:[%s175 + $0x3c] sm:$0xf]
      %v196 = vld [vmem:[%s175 + $0x40] sm:$0xf]
      %v197 = vld [vmem:[%s175 + $0x44] sm:$0xf]
      %v198 = vld [vmem:[%s175 + $0x48] sm:$0xf]
      %v199 = vld [vmem:[%s175 + $0x4c] sm:$0xf]
      %v200 = vld [vmem:[%s175 + $0x50] sm:$0xf]
      %v201 = vld [vmem:[%s175 + $0x54] sm:$0xf]
      %v202 = vld [vmem:[%s175 + $0x58] sm:$0xf]
      %v203 = vld [vmem:[%s175 + $0x5c] sm:$0xf]
      %v204 = vld [vmem:[%s175 + $0x60] sm:$0xf]
      %v205 = vld [vmem:[%s175 + $0x64] sm:$0xf]
      %v206 = vld [vmem:[%s175 + $0x68] sm:$0xf]
      %v207 = vld [vmem:[%s175 + $0x6c] sm:$0xf]
      %v208 = vld [vmem:[%s175 + $0x70] sm:$0xf]
      %v209 = vld [vmem:[%s175 + $0x74] sm:$0xf]
      %v210 = vld [vmem:[%s175 + $0x78] sm:$0xf]
      %v211 = vld [vmem:[%s175 + $0x7c] sm:$0xf]
      %v212 = vld [vmem:[%s175 + $0x80] sm:$0xf]
      %v213 = vld [vmem:[%s175 + $0x84] sm:$0xf]
      %v214 = vld [vmem:[%s175 + $0x88] sm:$0xf]
      %v215 = vld [vmem:[%s175 + $0x8c] sm:$0xf]
      %v216 = vld [vmem:[%s175 + $0x90] sm:$0xf]
      %v217 = vld [vmem:[%s175 + $0x94] sm:$0xf]
      %v218 = vld [vmem:[%s175 + $0x98] sm:$0xf]
      %v219 = vld [vmem:[%s175 + $0x9c] sm:$0xf]
      %v220 = vld [vmem:[%s175 + $0xa0] sm:$0xf]
      %v221 = vld [vmem:[%s175 + $0xa4] sm:$0xf]
      %v222 = vld [vmem:[%s175 + $0xa8] sm:$0xf]
      %v223 = vld [vmem:[%s175 + $0xac] sm:$0xf]
      %v224 = vld [vmem:[%s175 + $0xb0] sm:$0xf]
      %v225 = vld [vmem:[%s175 + $0xb4] sm:$0xf]
      %v226 = vld [vmem:[%s175 + $0xb8] sm:$0xf]
      %v227 = vld [vmem:[%s175 + $0xbc] sm:$0xf]
      %v228 = vld [vmem:[%s175 + $0xc0] sm:$0xf]
      %v229 = vld [vmem:[%s175 + $0xc4] sm:$0xf]
      %v230 = vld [vmem:[%s175 + $0xc8] sm:$0xf]
      %v231 = vld [vmem:[%s175 + $0xcc] sm:$0xf]
      %v232 = vld [vmem:[%s175 + $0xd0] sm:$0xf]
      %v233 = vld [vmem:[%s175 + $0xd4] sm:$0xf]
      %v234 = vld [vmem:[%s175 + $0xd8] sm:$0xf]
      %v235 = vld [vmem:[%s175 + $0xdc] sm:$0xf]
      %v236 = vld [vmem:[%s175 + $0xe0] sm:$0xf]
      %v237 = vld [vmem:[%s175 + $0xe4] sm:$0xf]
      %v238 = vld [vmem:[%s175 + $0xe8] sm:$0xf]
      %v239 = vld [vmem:[%s175 + $0xec] sm:$0xf]
      %v240 = vld [vmem:[%s175 + $0xf0] sm:$0xf]
      %v241 = vld [vmem:[%s175 + $0xf4] sm:$0xf]
      %v242 = vld [vmem:[%s175 + $0xf8] sm:$0xf]
      %v243 = vld [vmem:[%s175 + $0xfc] sm:$0xf]
      %v244 = vld [vmem:[%s175 + $0x100] sm:$0xf]
      %v245 = vld [vmem:[%s175 + $0x104] sm:$0xf]
      %v246 = vld [vmem:[%s175 + $0x108] sm:$0xf]
      %v247 = vld [vmem:[%s175 + $0x10c] sm:$0xf]
      %v248 = vld [vmem:[%s175 + $0x110] sm:$0xf]
      %v249 = vld [vmem:[%s175 + $0x114] sm:$0xf]
      %v250 = vld [vmem:[%s175 + $0x118] sm:$0xf]
      %v251 = vld [vmem:[%s175 + $0x11c] sm:$0xf]
      %v252 = vld [vmem:[%s175 + $0x120] sm:$0xf]
      %v253 = vld [vmem:[%s175 + $0x124] sm:$0xf]
      %v254 = vld [vmem:[%s175 + $0x128] sm:$0xf]
      %v255 = vld [vmem:[%s175 + $0x12c] sm:$0xf]
      %v256 = vld [vmem:[%s175 + $0x130] sm:$0xf]
      %v257 = vld [vmem:[%s175 + $0x134] sm:$0xf]
      %v258 = vld [vmem:[%s175 + $0x138] sm:$0xf]
      %v259 = vld [vmem:[%s175 + $0x13c] sm:$0xf]
      %v260 = vld [vmem:[%s175 + $0x140] sm:$0xf]
      %v261 = vld [vmem:[%s175 + $0x144] sm:$0xf]
      %v262 = vld [vmem:[%s175 + $0x148] sm:$0xf]
      %v263 = vld [vmem:[%s175 + $0x14c] sm:$0xf]
      %v264 = vld [vmem:[%s175 + $0x150] sm:$0xf]
      %v265 = vld [vmem:[%s175 + $0x154] sm:$0xf]
      %v266 = vld [vmem:[%s175 + $0x158] sm:$0xf]
      %v267 = vld [vmem:[%s175 + $0x15c] sm:$0xf]
      %v268 = vld [vmem:[%s175 + $0x160] sm:$0xf]
      %v269 = vld [vmem:[%s175 + $0x164] sm:$0xf]
      %v270 = vld [vmem:[%s175 + $0x168] sm:$0xf]
      %v271 = vld [vmem:[%s175 + $0x16c] sm:$0xf]
      %v272 = vld [vmem:[%s175 + $0x170] sm:$0xf]
      %v273 = vld [vmem:[%s175 + $0x174] sm:$0xf]
      %v274 = vld [vmem:[%s175 + $0x178] sm:$0xf]
      %v275 = vld [vmem:[%s175 + $0x17c] sm:$0xf]
      %v276 = vld [vmem:[%s175 + $0x180] sm:$0xf]
      %v277 = vld [vmem:[%s175 + $0x184] sm:$0xf]
      %v278 = vld [vmem:[%s175 + $0x188] sm:$0xf]
      %v279 = vld [vmem:[%s175 + $0x18c] sm:$0xf]
      %v280 = vld [vmem:[%s175 + $0x190] sm:$0xf]
      %v281 = vld [vmem:[%s175 + $0x194] sm:$0xf]
      %v282 = vld [vmem:[%s175 + $0x198] sm:$0xf]
      %v283 = vld [vmem:[%s175 + $0x19c] sm:$0xf]
      %v284 = vld [vmem:[%s175 + $0x1a0] sm:$0xf]
      %v285 = vld [vmem:[%s175 + $0x1a4] sm:$0xf]
      %v286 = vld [vmem:[%s175 + $0x1a8] sm:$0xf]
      %v287 = vld [vmem:[%s175 + $0x1ac] sm:$0xf]
      %v288 = vld [vmem:[%s175 + $0x1b0] sm:$0xf]
      %v289 = vld [vmem:[%s175 + $0x1b4] sm:$0xf]
      %v290 = vld [vmem:[%s175 + $0x1b8] sm:$0xf]
      %v291 = vld [vmem:[%s175 + $0x1bc] sm:$0xf]
      %v292 = vld [vmem:[%s175 + $0x1c0] sm:$0xf]
      %v293 = vld [vmem:[%s175 + $0x1c4] sm:$0xf]
      %v294 = vld [vmem:[%s175 + $0x1c8] sm:$0xf]
      %v295 = vld [vmem:[%s175 + $0x1cc] sm:$0xf]
      %v296 = vld [vmem:[%s175 + $0x1d0] sm:$0xf]
      %v297 = vld [vmem:[%s175 + $0x1d4] sm:$0xf]
      %v298 = vld [vmem:[%s175 + $0x1d8] sm:$0xf]
      %v299 = vld [vmem:[%s175 + $0x1dc] sm:$0xf]
      %v300 = vld [vmem:[%s175 + $0x1e0] sm:$0xf]
      %v301 = vld [vmem:[%s175 + $0x1e4] sm:$0xf]
      %v302 = vld [vmem:[%s175 + $0x1e8] sm:$0xf]
      %v303 = vld [vmem:[%s175 + $0x1ec] sm:$0xf]
      %v304 = vld [vmem:[%s175 + $0x1f0] sm:$0xf]
      %v305 = vld [vmem:[%s175 + $0x1f4] sm:$0xf]
      %v306 = vld [vmem:[%s175 + $0x1f8] sm:$0xf]
      %v307 = vld [vmem:[%s175 + $0x1fc] sm:$0xf]
      %v308 = vld [vmem:[%s175 + $0x200] sm:$0xf]
      %v309 = vld [vmem:[%s175 + $0x204] sm:$0xf]
      %v310 = vld [vmem:[%s175 + $0x208] sm:$0xf]
      %v311 = vld [vmem:[%s175 + $0x20c] sm:$0xf]
      %v312 = vld [vmem:[%s175 + $0x210] sm:$0xf]
      %v313 = vld [vmem:[%s175 + $0x214] sm:$0xf]
      %v314 = vld [vmem:[%s175 + $0x218] sm:$0xf]
      %v315 = vld [vmem:[%s175 + $0x21c] sm:$0xf]
      %v316 = vld [vmem:[%s175 + $0x220] sm:$0xf]
      %v317 = vld [vmem:[%s175 + $0x224] sm:$0xf]
      %v318 = vld [vmem:[%s175 + $0x228] sm:$0xf]
      %v319 = vld [vmem:[%s175 + $0x22c] sm:$0xf]
      %v320 = vld [vmem:[%s175 + $0x230] sm:$0xf]
      %v321 = vld [vmem:[%s175 + $0x234] sm:$0xf]
      %v322 = vld [vmem:[%s175 + $0x238] sm:$0xf]
      %v323 = vld [vmem:[%s175 + $0x23c] sm:$0xf]
      %v324 = vld [vmem:[%s175 + $0x240] sm:$0xf]
      %v325 = vld [vmem:[%s175 + $0x244] sm:$0xf]
      %v326 = vld [vmem:[%s175 + $0x248] sm:$0xf]
      %v327 = vld [vmem:[%s175 + $0x24c] sm:$0xf]
      %v328 = vld [vmem:[%s175 + $0x250] sm:$0xf]
      %v329 = vld [vmem:[%s175 + $0x254] sm:$0xf]
      %v330 = vld [vmem:[%s175 + $0x258] sm:$0xf]
      %v331 = vld [vmem:[%s175 + $0x25c] sm:$0xf]
      %v332 = vld [vmem:[%s175 + $0x260] sm:$0xf]
      %v333 = vld [vmem:[%s175 + $0x264] sm:$0xf]
      %v334 = vld [vmem:[%s175 + $0x268] sm:$0xf]
      %v335 = vld [vmem:[%s175 + $0x26c] sm:$0xf]
      %v336 = vld [vmem:[%s175 + $0x270] sm:$0xf]
      %v337 = vld [vmem:[%s175 + $0x274] sm:$0xf]
      %v338 = vld [vmem:[%s175 + $0x278] sm:$0xf]
      %v339 = vld [vmem:[%s175 + $0x27c] sm:$0xf]
      %v340 = vld [vmem:[%s175 + $0x280] sm:$0xf]
      %v341 = vld [vmem:[%s175 + $0x284] sm:$0xf]
      %v342 = vld [vmem:[%s175 + $0x288] sm:$0xf]
      %v343 = vld [vmem:[%s175 + $0x28c] sm:$0xf]
      %v344 = vld [vmem:[%s175 + $0x290] sm:$0xf]
      %v345 = vld [vmem:[%s175 + $0x294] sm:$0xf]
      %v346 = vld [vmem:[%s175 + $0x298] sm:$0xf]
      %v347 = vld [vmem:[%s175 + $0x29c] sm:$0xf]
      %v348 = vld [vmem:[%s175 + $0x2a0] sm:$0xf]
      %v349 = vld [vmem:[%s175 + $0x2a4] sm:$0xf]
      %v350 = vld [vmem:[%s175 + $0x2a8] sm:$0xf]
      %v351 = vld [vmem:[%s175 + $0x2ac] sm:$0xf]
      %v352 = vld [vmem:[%s175 + $0x2b0] sm:$0xf]
      %v353 = vld [vmem:[%s175 + $0x2b4] sm:$0xf]
      %v354 = vld [vmem:[%s175 + $0x2b8] sm:$0xf]
      %v355 = vld [vmem:[%s175 + $0x2bc] sm:$0xf]
      %v356 = vld [vmem:[%s175 + $0x2c0] sm:$0xf]
      %v357 = vld [vmem:[%s175 + $0x2c4] sm:$0xf]
      %v358 = vld [vmem:[%s175 + $0x2c8] sm:$0xf]
      %v359 = vld [vmem:[%s175 + $0x2cc] sm:$0xf]
      %v360 = vld [vmem:[%s175 + $0x2d0] sm:$0xf]
      %v361 = vld [vmem:[%s175 + $0x2d4] sm:$0xf]
      %v362 = vld [vmem:[%s175 + $0x2d8] sm:$0xf]
      %v363 = vld [vmem:[%s175 + $0x2dc] sm:$0xf]
      %v364 = vld [vmem:[%s175 + $0x2e0] sm:$0xf]
      %v365 = vld [vmem:[%s175 + $0x2e4] sm:$0xf]
      %v366 = vld [vmem:[%s175 + $0x2e8] sm:$0xf]
      %v367 = vld [vmem:[%s175 + $0x2ec] sm:$0xf]
      %v368 = vld [vmem:[%s175 + $0x2f0] sm:$0xf]
      %v369 = vld [vmem:[%s175 + $0x2f4] sm:$0xf]
      %v370 = vld [vmem:[%s175 + $0x2f8] sm:$0xf]
      %v371 = vld [vmem:[%s175 + $0x2fc] sm:$0xf]
      %v372 = vld [vmem:[%s175 + $0x300] sm:$0xf]
      %v373 = vld [vmem:[%s175 + $0x304] sm:$0xf]
      %v374 = vld [vmem:[%s175 + $0x308] sm:$0xf]
      %v375 = vld [vmem:[%s175 + $0x30c] sm:$0xf]
      %v376 = vld [vmem:[%s175 + $0x310] sm:$0xf]
      %v377 = vld [vmem:[%s175 + $0x314] sm:$0xf]
      %v378 = vld [vmem:[%s175 + $0x318] sm:$0xf]
      %v379 = vld [vmem:[%s175 + $0x31c] sm:$0xf]
      %v380 = vld [vmem:[%s175 + $0x320] sm:$0xf]
      %v381 = vld [vmem:[%s175 + $0x324] sm:$0xf]
      %v382 = vld [vmem:[%s175 + $0x328] sm:$0xf]
      %v383 = vld [vmem:[%s175 + $0x32c] sm:$0xf]
      %v384 = vld [vmem:[%s175 + $0x330] sm:$0xf]
      %v385 = vld [vmem:[%s175 + $0x334] sm:$0xf]
      %v386 = vld [vmem:[%s175 + $0x338] sm:$0xf]
      %v387 = vld [vmem:[%s175 + $0x33c] sm:$0xf]
      %v388 = vld [vmem:[%s175 + $0x340] sm:$0xf]
      %v389 = vld [vmem:[%s175 + $0x344] sm:$0xf]
      %v390 = vld [vmem:[%s175 + $0x348] sm:$0xf]
      %v391 = vld [vmem:[%s175 + $0x34c] sm:$0xf]
      %v392 = vld [vmem:[%s175 + $0x350] sm:$0xf]
      %v393 = vld [vmem:[%s175 + $0x354] sm:$0xf]
      %v394 = vld [vmem:[%s175 + $0x358] sm:$0xf]
      %v395 = vld [vmem:[%s175 + $0x35c] sm:$0xf]
      %v396 = vld [vmem:[%s175 + $0x360] sm:$0xf]
      %v397 = vld [vmem:[%s175 + $0x364] sm:$0xf]
      %v398 = vld [vmem:[%s175 + $0x368] sm:$0xf]
      %v399 = vld [vmem:[%s175 + $0x36c] sm:$0xf]
      %v400 = vld [vmem:[%s175 + $0x370] sm:$0xf]
      %v401 = vld [vmem:[%s175 + $0x374] sm:$0xf]
      %v402 = vld [vmem:[%s175 + $0x378] sm:$0xf]
      %v403 = vld [vmem:[%s175 + $0x37c] sm:$0xf]
      %v406 = vcombine.high %v178, %v178
      %v408 = vunpack.c.l.s4 1966171168
      %v409 = vunpack.c.0.s8 %v408
      %v410 = vlaneseq
      %v411 = vshrl.u32 %v410, 7
      %v412 = vsub.s32 %v409, %v411
      %v413 = vrot.slane %v178, %v412
      %v415 = vunpack.c.l.s4 1966171168
      %v416 = vunpack.c.0.s8 %v415
      %v417 = vlaneseq
      %v418 = vshrl.u32 %v417, 7
      %v419 = vsub.s32 %v416, %v418
      %v420 = vrot.slane %v406, %v419
      %v421 = vcombine.high %v413, %v413
      %v422 = vcombine.high %v420, %v420
      %v424 = vunpack.c.l.s4 1966171168
      %v425 = vunpack.c.0.s8 %v424
      %v426 = vlaneseq
      %v427 = vshrl.u32 %v426, 7
      %v428 = vsub.s32 %v425, %v427
      %v429 = vrot.slane %v413, %v428
      %v431 = vunpack.c.l.s4 1966171168
      %v432 = vunpack.c.0.s8 %v431
      %v433 = vlaneseq
      %v434 = vshrl.u32 %v433, 7
      %v435 = vsub.s32 %v432, %v434
      %v436 = vrot.slane %v420, %v435
      %v438 = vunpack.c.l.s4 1966171168
      %v439 = vunpack.c.0.s8 %v438
      %v440 = vlaneseq
      %v441 = vshrl.u32 %v440, 7
      %v442 = vsub.s32 %v439, %v441
      %v443 = vrot.slane %v421, %v442
      %v445 = vunpack.c.l.s4 1966171168
      %v446 = vunpack.c.0.s8 %v445
      %v447 = vlaneseq
      %v448 = vshrl.u32 %v447, 7
      %v449 = vsub.s32 %v446, %v448
      %v450 = vrot.slane %v422, %v449
      %v451 = vcombine.high %v429, %v429
      %v452 = vcombine.high %v436, %v436
      %v453 = vcombine.high %v443, %v443
      %v454 = vcombine.high %v450, %v450
      %v455 = vcombine.high %v179, %v179
      %v457 = vunpack.c.l.s4 1966171168
      %v458 = vunpack.c.0.s8 %v457
      %v459 = vlaneseq
      %v460 = vshrl.u32 %v459, 7
      %v461 = vsub.s32 %v458, %v460
      %v462 = vrot.slane %v179, %v461
      %v464 = vunpack.c.l.s4 1966171168
      %v465 = vunpack.c.0.s8 %v464
      %v466 = vlaneseq
      %v467 = vshrl.u32 %v466, 7
      %v468 = vsub.s32 %v465, %v467
      %v469 = vrot.slane %v455, %v468
      %v470 = vcombine.high %v462, %v462
      %v471 = vcombine.high %v469, %v469
      %v473 = vunpack.c.l.s4 1966171168
      %v474 = vunpack.c.0.s8 %v473
      %v475 = vlaneseq
      %v476 = vshrl.u32 %v475, 7
      %v477 = vsub.s32 %v474, %v476
      %v478 = vrot.slane %v462, %v477
      %v480 = vunpack.c.l.s4 1966171168
      %v481 = vunpack.c.0.s8 %v480
      %v482 = vlaneseq
      %v483 = vshrl.u32 %v482, 7
      %v484 = vsub.s32 %v481, %v483
      %v485 = vrot.slane %v469, %v484
      %v487 = vunpack.c.l.s4 1966171168
      %v488 = vunpack.c.0.s8 %v487
      %v489 = vlaneseq
      %v490 = vshrl.u32 %v489, 7
      %v491 = vsub.s32 %v488, %v490
      %v492 = vrot.slane %v470, %v491
      %v494 = vunpack.c.l.s4 1966171168
      %v495 = vunpack.c.0.s8 %v494
      %v496 = vlaneseq
      %v497 = vshrl.u32 %v496, 7
      %v498 = vsub.s32 %v495, %v497
      %v499 = vrot.slane %v471, %v498
      %v500 = vcombine.high %v478, %v478
      %v501 = vcombine.high %v492, %v492
      %v740 = vunpack.c.l.b16 %v180
      %v741 = vunpack.c.l.b16 %v181
      %v742 = vunpack.c.l.b16 %v182
      %v743 = vunpack.c.l.b16 %v183
      %v744 = vunpack.c.l.b16 %v184
      %v745 = vunpack.c.l.b16 %v185
      %v746 = vunpack.c.l.b16 %v186
      %v747 = vunpack.c.l.b16 %v187
      %v748 = vunpack.c.l.b16 %v188
      %v749 = vunpack.c.l.b16 %v189
      %v750 = vunpack.c.l.b16 %v190
      %v751 = vunpack.c.l.b16 %v191
      %v752 = vunpack.c.l.b16 %v192
      %v753 = vunpack.c.l.b16 %v193
      %v754 = vunpack.c.l.b16 %v194
      %v755 = vunpack.c.l.b16 %v195
      %v756 = vunpack.c.l.b16 %v196
      %v757 = vunpack.c.l.b16 %v197
      %v758 = vunpack.c.l.b16 %v198
      %v759 = vunpack.c.l.b16 %v199
      %v760 = vunpack.c.l.b16 %v200
      %v761 = vunpack.c.l.b16 %v201
      %v762 = vunpack.c.l.b16 %v202
      %v763 = vunpack.c.l.b16 %v203
      %v764 = vunpack.c.l.b16 %v204
      %v765 = vunpack.c.l.b16 %v205
      %v766 = vunpack.c.l.b16 %v206
      %v767 = vunpack.c.l.b16 %v207
      %v768 = vunpack.c.l.b16 %v208
      %v769 = vunpack.c.l.b16 %v209
      %v770 = vunpack.c.l.b16 %v210
      %v771 = vunpack.c.l.b16 %v211
      %v772 = vunpack.c.l.b16 %v212
      %v773 = vunpack.c.l.b16 %v213
      %v774 = vunpack.c.l.b16 %v214
      %v775 = vunpack.c.l.b16 %v215
      %v776 = vunpack.c.l.b16 %v216
      %v777 = vunpack.c.l.b16 %v217
      %v778 = vunpack.c.l.b16 %v218
      %v779 = vunpack.c.l.b16 %v219
      %v780 = vunpack.c.l.b16 %v220
      %v781 = vunpack.c.l.b16 %v221
      %v782 = vunpack.c.l.b16 %v222
      %v783 = vunpack.c.l.b16 %v223
      %v784 = vunpack.c.l.b16 %v224
      %v785 = vunpack.c.l.b16 %v225
      %v786 = vunpack.c.l.b16 %v226
      %v787 = vunpack.c.l.b16 %v227
      %v788 = vunpack.c.l.b16 %v228
      %v789 = vunpack.c.l.b16 %v229
      %v790 = vunpack.c.l.b16 %v230
      %v791 = vunpack.c.l.b16 %v231
      %v792 = vunpack.c.l.b16 %v232
      %v793 = vunpack.c.l.b16 %v233
      %v794 = vunpack.c.l.b16 %v234
      %v795 = vunpack.c.l.b16 %v235
      %v796 = vunpack.c.l.b16 %v236
      %v797 = vunpack.c.l.b16 %v237
      %v798 = vunpack.c.l.b16 %v238
      %v799 = vunpack.c.l.b16 %v239
      %v800 = vunpack.c.l.b16 %v240
      %v801 = vunpack.c.l.b16 %v241
      %v802 = vunpack.c.l.b16 %v242
      %v803 = vunpack.c.l.b16 %v243
      %v804 = vunpack.c.l.b16 %v244
      %v805 = vunpack.c.l.b16 %v245
      %v806 = vunpack.c.l.b16 %v246
      %v807 = vunpack.c.l.b16 %v247
      %v808 = vunpack.c.l.b16 %v248
      %v809 = vunpack.c.l.b16 %v249
      %v810 = vunpack.c.l.b16 %v250
      %v811 = vunpack.c.l.b16 %v251
      %v812 = vunpack.c.l.b16 %v252
      %v813 = vunpack.c.l.b16 %v253
      %v814 = vunpack.c.l.b16 %v254
      %v815 = vunpack.c.l.b16 %v255
      %v816 = vunpack.c.l.b16 %v256
      %v817 = vunpack.c.l.b16 %v257
      %v818 = vunpack.c.l.b16 %v258
      %v819 = vunpack.c.l.b16 %v259
      %v820 = vunpack.c.l.b16 %v260
      %v821 = vunpack.c.l.b16 %v261
      %v822 = vunpack.c.l.b16 %v262
      %v823 = vunpack.c.l.b16 %v263
      %v824 = vunpack.c.l.b16 %v264
      %v825 = vunpack.c.l.b16 %v265
      %v826 = vunpack.c.l.b16 %v266
      %v827 = vunpack.c.l.b16 %v267
      %v828 = vunpack.c.l.b16 %v268
      %v829 = vunpack.c.l.b16 %v269
      %v830 = vunpack.c.l.b16 %v270
      %v831 = vunpack.c.l.b16 %v271
      %v832 = vunpack.c.l.b16 %v272
      %v833 = vunpack.c.l.b16 %v273
      %v834 = vunpack.c.l.b16 %v274
      %v835 = vunpack.c.l.b16 %v275
      %v836 = vunpack.c.l.b16 %v276
      %v837 = vunpack.c.l.b16 %v277
      %v838 = vunpack.c.l.b16 %v278
      %v839 = vunpack.c.l.b16 %v279
      %v840 = vunpack.c.l.b16 %v280
      %v841 = vunpack.c.l.b16 %v281
      %v842 = vunpack.c.l.b16 %v282
      %v843 = vunpack.c.l.b16 %v283
      %v844 = vunpack.c.l.b16 %v284
      %v845 = vunpack.c.l.b16 %v285
      %v846 = vunpack.c.l.b16 %v286
      %v847 = vunpack.c.l.b16 %v287
      %v848 = vunpack.c.l.b16 %v288
      %v849 = vunpack.c.l.b16 %v289
      %v850 = vunpack.c.l.b16 %v290
      %v851 = vunpack.c.l.b16 %v291
      %v852 = vunpack.c.l.b16 %v292
      %v853 = vunpack.c.l.b16 %v293
      %v854 = vunpack.c.l.b16 %v294
      %v855 = vunpack.c.l.b16 %v295
      %v856 = vunpack.c.l.b16 %v296
      %v857 = vunpack.c.l.b16 %v297
      %v858 = vunpack.c.l.b16 %v298
      %v859 = vunpack.c.l.b16 %v299
      %v860 = vunpack.c.l.b16 %v300
      %v861 = vunpack.c.l.b16 %v301
      %v862 = vunpack.c.l.b16 %v302
      %v863 = vunpack.c.l.b16 %v303
      %v864 = vunpack.c.l.b16 %v304
      %v865 = vunpack.c.l.b16 %v305
      %v866 = vunpack.c.l.b16 %v306
      %v867 = vunpack.c.l.b16 %v307
      %v868 = vunpack.c.l.b16 %v308
      %v869 = vunpack.c.l.b16 %v309
      %v870 = vunpack.c.l.b16 %v310
      %v871 = vunpack.c.l.b16 %v311
      %v872 = vunpack.c.l.b16 %v312
      %v873 = vunpack.c.l.b16 %v313
      %v874 = vunpack.c.l.b16 %v314
      %v875 = vunpack.c.l.b16 %v315
      %v876 = vunpack.c.l.b16 %v316
      %v877 = vunpack.c.l.b16 %v317
      %v878 = vunpack.c.l.b16 %v318
      %v879 = vunpack.c.l.b16 %v319
      %v880 = vunpack.c.l.b16 %v320
      %v881 = vunpack.c.l.b16 %v321
      %v882 = vunpack.c.l.b16 %v322
      %v883 = vunpack.c.l.b16 %v323
      %v884 = vunpack.c.l.b16 %v324
      %v885 = vunpack.c.l.b16 %v325
      %v886 = vunpack.c.l.b16 %v326
      %v887 = vunpack.c.l.b16 %v327
      %v888 = vunpack.c.l.b16 %v328
      %v889 = vunpack.c.l.b16 %v329
      %v890 = vunpack.c.l.b16 %v330
      %v891 = vunpack.c.l.b16 %v331
      %v892 = vunpack.c.l.b16 %v332
      %v893 = vunpack.c.l.b16 %v333
      %v894 = vunpack.c.l.b16 %v334
      %v895 = vunpack.c.l.b16 %v335
      %v896 = vunpack.c.l.b16 %v336
      %v897 = vunpack.c.l.b16 %v337
      %v898 = vunpack.c.l.b16 %v338
      %v899 = vunpack.c.l.b16 %v339
      %v900 = vunpack.c.l.b16 %v340
      %v901 = vunpack.c.l.b16 %v341
      %v902 = vunpack.c.l.b16 %v342
      %v903 = vunpack.c.l.b16 %v343
      %v904 = vunpack.c.l.b16 %v344
      %v905 = vunpack.c.l.b16 %v345
      %v906 = vunpack.c.l.b16 %v346
      %v907 = vunpack.c.l.b16 %v347
      %v908 = vunpack.c.l.b16 %v348
      %v909 = vunpack.c.l.b16 %v349
      %v910 = vunpack.c.l.b16 %v350
      %v911 = vunpack.c.l.b16 %v351
      %v912 = vunpack.c.l.b16 %v352
      %v913 = vunpack.c.l.b16 %v353
      %v914 = vunpack.c.l.b16 %v354
      %v915 = vunpack.c.l.b16 %v355
      %v916 = vunpack.c.l.b16 %v356
      %v917 = vunpack.c.l.b16 %v357
      %v918 = vunpack.c.l.b16 %v358
      %v919 = vunpack.c.l.b16 %v359
      %v920 = vunpack.c.l.b16 %v360
      %v921 = vunpack.c.l.b16 %v361
      %v922 = vunpack.c.l.b16 %v362
      %v923 = vunpack.c.l.b16 %v363
      %v924 = vunpack.c.l.b16 %v364
      %v925 = vunpack.c.l.b16 %v365
      %v926 = vunpack.c.l.b16 %v366
      %v927 = vunpack.c.l.b16 %v367
      %v928 = vunpack.c.l.b16 %v368
      %v929 = vunpack.c.l.b16 %v369
      %v930 = vunpack.c.l.b16 %v370
      %v931 = vunpack.c.l.b16 %v371
      %v932 = vunpack.c.l.b16 %v372
      %v933 = vunpack.c.l.b16 %v373
      %v934 = vunpack.c.l.b16 %v374
      %v935 = vunpack.c.l.b16 %v375
      %v936 = vunpack.c.l.b16 %v376
      %v937 = vunpack.c.l.b16 %v377
      %v938 = vunpack.c.l.b16 %v378
      %v939 = vunpack.c.l.b16 %v379
      %v940 = vunpack.c.l.b16 %v380
      %v941 = vunpack.c.l.b16 %v381
      %v942 = vunpack.c.l.b16 %v382
      %v943 = vunpack.c.l.b16 %v383
      %v944 = vunpack.c.l.b16 %v384
      %v945 = vunpack.c.l.b16 %v385
      %v946 = vunpack.c.l.b16 %v386
      %v947 = vunpack.c.l.b16 %v387
      %v948 = vunpack.c.l.b16 %v388
      %v949 = vunpack.c.l.b16 %v389
      %v950 = vunpack.c.l.b16 %v390
      %v951 = vunpack.c.l.b16 %v391
      %v952 = vunpack.c.l.b16 %v392
      %v953 = vunpack.c.l.b16 %v393
      %v954 = vunpack.c.l.b16 %v394
      %v955 = vunpack.c.l.b16 %v395
      %v956 = vunpack.c.l.b16 %v396
      %v957 = vunpack.c.l.b16 %v397
      %v958 = vunpack.c.l.b16 %v398
      %v959 = vunpack.c.l.b16 %v399
      %v960 = vunpack.c.l.b16 %v400
      %v961 = vunpack.c.l.b16 %v401
      %v962 = vunpack.c.l.b16 %v402
      %v963 = vunpack.c.l.b16 %v403
      %v964 = vpack.c.b16 %v741, %v740
      %v965 = vpack.c.b16 %v743, %v742
      %v966 = vpack.c.b16 %v745, %v744
      %v967 = vpack.c.b16 %v747, %v746
      %v968 = vpack.c.b16 %v749, %v748
      %v969 = vpack.c.b16 %v751, %v750
      %v970 = vpack.c.b16 %v753, %v752
      %v971 = vpack.c.b16 %v755, %v754
      %v972 = vpack.c.b16 %v757, %v756
      %v973 = vpack.c.b16 %v759, %v758
      %v974 = vpack.c.b16 %v761, %v760
      %v975 = vpack.c.b16 %v763, %v762
      %v976 = vpack.c.b16 %v765, %v764
      %v977 = vpack.c.b16 %v767, %v766
      %v978 = vpack.c.b16 %v769, %v768
      %v979 = vpack.c.b16 %v771, %v770
      %v980 = vpack.c.b16 %v773, %v772
      %v981 = vpack.c.b16 %v775, %v774
      %v982 = vpack.c.b16 %v777, %v776
      %v983 = vpack.c.b16 %v779, %v778
      %v984 = vpack.c.b16 %v781, %v780
      %v985 = vpack.c.b16 %v783, %v782
      %v986 = vpack.c.b16 %v785, %v784
      %v987 = vpack.c.b16 %v787, %v786
      %v988 = vpack.c.b16 %v789, %v788
      %v989 = vpack.c.b16 %v791, %v790
      %v990 = vpack.c.b16 %v793, %v792
      %v991 = vpack.c.b16 %v795, %v794
      %v992 = vpack.c.b16 %v797, %v796
      %v993 = vpack.c.b16 %v799, %v798
      %v994 = vpack.c.b16 %v801, %v800
      %v995 = vpack.c.b16 %v803, %v802
      %v996 = vpack.c.b16 %v805, %v804
      %v997 = vpack.c.b16 %v807, %v806
      %v998 = vpack.c.b16 %v809, %v808
      %v999 = vpack.c.b16 %v811, %v810
      %v1000 = vpack.c.b16 %v813, %v812
      %v1001 = vpack.c.b16 %v815, %v814
      %v1002 = vpack.c.b16 %v817, %v816
      %v1003 = vpack.c.b16 %v819, %v818
      %v1004 = vpack.c.b16 %v821, %v820
      %v1005 = vpack.c.b16 %v823, %v822
      %v1006 = vpack.c.b16 %v825, %v824
      %v1007 = vpack.c.b16 %v827, %v826
      %v1008 = vpack.c.b16 %v829, %v828
      %v1009 = vpack.c.b16 %v831, %v830
      %v1010 = vpack.c.b16 %v833, %v832
      %v1011 = vpack.c.b16 %v835, %v834
      %v1012 = vpack.c.b16 %v837, %v836
      %v1013 = vpack.c.b16 %v839, %v838
      %v1014 = vpack.c.b16 %v841, %v840
      %v1015 = vpack.c.b16 %v843, %v842
      %v1016 = vpack.c.b16 %v845, %v844
      %v1017 = vpack.c.b16 %v847, %v846
      %v1018 = vpack.c.b16 %v849, %v848
      %v1019 = vpack.c.b16 %v851, %v850
      %v1020 = vpack.c.b16 %v853, %v852
      %v1021 = vpack.c.b16 %v855, %v854
      %v1022 = vpack.c.b16 %v857, %v856
      %v1023 = vpack.c.b16 %v859, %v858
      %v1024 = vpack.c.b16 %v861, %v860
      %v1025 = vpack.c.b16 %v863, %v862
      %v1026 = vpack.c.b16 %v865, %v864
      %v1027 = vpack.c.b16 %v867, %v866
      %v1028 = vpack.c.b16 %v869, %v868
      %v1029 = vpack.c.b16 %v871, %v870
      %v1030 = vpack.c.b16 %v873, %v872
      %v1031 = vpack.c.b16 %v875, %v874
      %v1032 = vpack.c.b16 %v877, %v876
      %v1033 = vpack.c.b16 %v879, %v878
      %v1034 = vpack.c.b16 %v881, %v880
      %v1035 = vpack.c.b16 %v883, %v882
      %v1036 = vpack.c.b16 %v885, %v884
      %v1037 = vpack.c.b16 %v887, %v886
      %v1038 = vpack.c.b16 %v889, %v888
      %v1039 = vpack.c.b16 %v891, %v890
      %v1040 = vpack.c.b16 %v893, %v892
      %v1041 = vpack.c.b16 %v895, %v894
      %v1042 = vpack.c.b16 %v897, %v896
      %v1043 = vpack.c.b16 %v899, %v898
      %v1044 = vpack.c.b16 %v901, %v900
      %v1045 = vpack.c.b16 %v903, %v902
      %v1046 = vpack.c.b16 %v905, %v904
      %v1047 = vpack.c.b16 %v907, %v906
      %v1048 = vpack.c.b16 %v909, %v908
      %v1049 = vpack.c.b16 %v911, %v910
      %v1050 = vpack.c.b16 %v913, %v912
      %v1051 = vpack.c.b16 %v915, %v914
      %v1052 = vpack.c.b16 %v917, %v916
      %v1053 = vpack.c.b16 %v919, %v918
      %v1054 = vpack.c.b16 %v921, %v920
      %v1055 = vpack.c.b16 %v923, %v922
      %v1056 = vpack.c.b16 %v925, %v924
      %v1057 = vpack.c.b16 %v927, %v926
      %v1058 = vpack.c.b16 %v929, %v928
      %v1059 = vpack.c.b16 %v931, %v930
      %v1060 = vpack.c.b16 %v933, %v932
      %v1061 = vpack.c.b16 %v935, %v934
      %v1062 = vpack.c.b16 %v937, %v936
      %v1063 = vpack.c.b16 %v939, %v938
      %v1064 = vpack.c.b16 %v941, %v940
      %v1065 = vpack.c.b16 %v943, %v942
      %v1066 = vpack.c.b16 %v945, %v944
      %v1067 = vpack.c.b16 %v947, %v946
      %v1068 = vpack.c.b16 %v949, %v948
      %v1069 = vpack.c.b16 %v951, %v950
      %v1070 = vpack.c.b16 %v953, %v952
      %v1071 = vpack.c.b16 %v955, %v954
      %v1072 = vpack.c.b16 %v957, %v956
      %v1073 = vpack.c.b16 %v959, %v958
      %v1074 = vpack.c.b16 %v961, %v960
      %v1075 = vpack.c.b16 %v963, %v962
      %1188 = vmatprep.subr.bf16.mxu0 0
      %1189 = vmatpush1.bf16.msra.mxu0 %v971
      %1190 = vmatprep.subr.bf16.mxu0 0
      %1191 = vmatpush1.bf16.msra.mxu0 %v970
      %1192 = vmatprep.subr.bf16.mxu0 0
      %1193 = vmatpush1.bf16.msra.mxu0 %v969
      %1194 = vmatprep.subr.bf16.mxu0 0
      %1195 = vmatpush1.bf16.msra.mxu0 %v968
      %1196 = vmatprep.subr.bf16.mxu0 0
      %1197 = vmatpush1.bf16.msra.mxu0 %v967
      %1198 = vmatprep.subr.bf16.mxu0 0
      %1199 = vmatpush1.bf16.msra.mxu0 %v966
      %1200 = vmatprep.subr.bf16.mxu0 0
      %1201 = vmatpush1.bf16.msra.mxu0 %v965
      %1202 = vmatprep.subr.bf16.mxu0 0
      %1203 = vmatpush1.bf16.msra.mxu0 %v964
      %1204 = vmatprep.subr.bf16.mxu0 0
      %1205 = vmatpush2.bf16.msra.mxu0 %v979
      %1206 = vmatprep.subr.bf16.mxu0 0
      %1207 = vmatpush2.bf16.msra.mxu0 %v978
      %1208 = vmatprep.subr.bf16.mxu0 0
      %1209 = vmatpush2.bf16.msra.mxu0 %v977
      %1210 = vmatprep.subr.bf16.mxu0 0
      %1211 = vmatpush2.bf16.msra.mxu0 %v976
      %1212 = vmatprep.subr.bf16.mxu0 0
      %1213 = vmatpush2.bf16.msra.mxu0 %v975
      %1214 = vmatprep.subr.bf16.mxu0 0
      %1215 = vmatpush2.bf16.msra.mxu0 %v974
      %1216 = vmatprep.subr.bf16.mxu0 0
      %1217 = vmatpush2.bf16.msra.mxu0 %v973
      %1218 = vmatprep.subr.bf16.mxu0 0
      %1219 = vmatpush2.bf16.msra.mxu0 %v972
      %1220 = vmatprep.mubr.bf16.mxu0 %v443
      %1221 = vmatmul.mubr.bf16.gmra.mxu0 %v429
      %v1222 = vpop.f32.mrf.mxu0
      %v1223 = vadd.f32 0.0, %v1222
      %v1224 = vpop.f32.mrf.mxu0
      %v1225 = vpop.f32.mrf.mxu0
      %v1226 = vpop.f32.mrf.mxu0
      %1227 = vdwg.mxu0
      %1228 = vmatprep.subr.bf16.mxu0 0
      %1229 = vmatpush1.bf16.msra.mxu0 %v987
      %1230 = vmatprep.subr.bf16.mxu0 0
      %1231 = vmatpush1.bf16.msra.mxu0 %v986
      %1232 = vmatprep.subr.bf16.mxu0 0
      %1233 = vmatpush1.bf16.msra.mxu0 %v985
      %1234 = vmatprep.subr.bf16.mxu0 0
      %1235 = vmatpush1.bf16.msra.mxu0 %v984
      %1236 = vmatprep.subr.bf16.mxu0 0
      %1237 = vmatpush1.bf16.msra.mxu0 %v983
      %1238 = vmatprep.subr.bf16.mxu0 0
      %1239 = vmatpush1.bf16.msra.mxu0 %v982
      %1240 = vmatprep.subr.bf16.mxu0 0
      %1241 = vmatpush1.bf16.msra.mxu0 %v981
      %1242 = vmatprep.subr.bf16.mxu0 0
      %1243 = vmatpush1.bf16.msra.mxu0 %v980
      %1244 = vmatprep.subr.bf16.mxu0 0
      %1245 = vmatpush2.bf16.msra.mxu0 %v995
      %1246 = vmatprep.subr.bf16.mxu0 0
      %1247 = vmatpush2.bf16.msra.mxu0 %v994
      %1248 = vmatprep.subr.bf16.mxu0 0
      %1249 = vmatpush2.bf16.msra.mxu0 %v993
      %1250 = vmatprep.subr.bf16.mxu0 0
      %1251 = vmatpush2.bf16.msra.mxu0 %v992
      %1252 = vmatprep.subr.bf16.mxu0 0
      %1253 = vmatpush2.bf16.msra.mxu0 %v991
      %1254 = vmatprep.subr.bf16.mxu0 0
      %1255 = vmatpush2.bf16.msra.mxu0 %v990
      %1256 = vmatprep.subr.bf16.mxu0 0
      %1257 = vmatpush2.bf16.msra.mxu0 %v989
      %1258 = vmatprep.subr.bf16.mxu0 0
      %1259 = vmatpush2.bf16.msra.mxu0 %v988
      %1260 = vmatprep.mubr.bf16.mxu0 %v453
      %1261 = vmatmul.mubr.bf16.gmra.mxu0 %v451
      %v1262 = vpop.f32.mrf.mxu0
      %v1263 = vadd.f32 %v1223, %v1262
      %v1264 = vpop.f32.mrf.mxu0
      %v1265 = vpop.f32.mrf.mxu0
      %v1266 = vpop.f32.mrf.mxu0
      %1267 = vdwg.mxu0
      %1268 = vmatprep.subr.bf16.mxu0 0
      %1269 = vmatpush1.bf16.msra.mxu0 %v1003
      %1270 = vmatprep.subr.bf16.mxu0 0
      %1271 = vmatpush1.bf16.msra.mxu0 %v1002
      %1272 = vmatprep.subr.bf16.mxu0 0
      %1273 = vmatpush1.bf16.msra.mxu0 %v1001
      %1274 = vmatprep.subr.bf16.mxu0 0
      %1275 = vmatpush1.bf16.msra.mxu0 %v1000
      %1276 = vmatprep.subr.bf16.mxu0 0
      %1277 = vmatpush1.bf16.msra.mxu0 %v999
      %1278 = vmatprep.subr.bf16.mxu0 0
      %1279 = vmatpush1.bf16.msra.mxu0 %v998
      %1280 = vmatprep.subr.bf16.mxu0 0
      %1281 = vmatpush1.bf16.msra.mxu0 %v997
      %1282 = vmatprep.subr.bf16.mxu0 0
      %1283 = vmatpush1.bf16.msra.mxu0 %v996
      %1284 = vmatprep.subr.bf16.mxu0 0
      %1285 = vmatpush2.bf16.msra.mxu0 %v1011
      %1286 = vmatprep.subr.bf16.mxu0 0
      %1287 = vmatpush2.bf16.msra.mxu0 %v1010
      %1288 = vmatprep.subr.bf16.mxu0 0
      %1289 = vmatpush2.bf16.msra.mxu0 %v1009
      %1290 = vmatprep.subr.bf16.mxu0 0
      %1291 = vmatpush2.bf16.msra.mxu0 %v1008
      %1292 = vmatprep.subr.bf16.mxu0 0
      %1293 = vmatpush2.bf16.msra.mxu0 %v1007
      %1294 = vmatprep.subr.bf16.mxu0 0
      %1295 = vmatpush2.bf16.msra.mxu0 %v1006
      %1296 = vmatprep.subr.bf16.mxu0 0
      %1297 = vmatpush2.bf16.msra.mxu0 %v1005
      %1298 = vmatprep.subr.bf16.mxu0 0
      %1299 = vmatpush2.bf16.msra.mxu0 %v1004
      %1300 = vmatprep.mubr.bf16.mxu0 %v450
      %1301 = vmatmul.mubr.bf16.gmra.mxu0 %v436
      %v1302 = vpop.f32.mrf.mxu0
      %v1303 = vadd.f32 %v1263, %v1302
      %v1304 = vpop.f32.mrf.mxu0
      %v1305 = vpop.f32.mrf.mxu0
      %v1306 = vpop.f32.mrf.mxu0
      %1307 = vdwg.mxu0
      %1308 = vmatprep.subr.bf16.mxu0 0
      %1309 = vmatpush1.bf16.msra.mxu0 %v1019
      %1310 = vmatprep.subr.bf16.mxu0 0
      %1311 = vmatpush1.bf16.msra.mxu0 %v1018
      %1312 = vmatprep.subr.bf16.mxu0 0
      %1313 = vmatpush1.bf16.msra.mxu0 %v1017
      %1314 = vmatprep.subr.bf16.mxu0 0
      %1315 = vmatpush1.bf16.msra.mxu0 %v1016
      %1316 = vmatprep.subr.bf16.mxu0 0
      %1317 = vmatpush1.bf16.msra.mxu0 %v1015
      %1318 = vmatprep.subr.bf16.mxu0 0
      %1319 = vmatpush1.bf16.msra.mxu0 %v1014
      %1320 = vmatprep.subr.bf16.mxu0 0
      %1321 = vmatpush1.bf16.msra.mxu0 %v1013
      %1322 = vmatprep.subr.bf16.mxu0 0
      %1323 = vmatpush1.bf16.msra.mxu0 %v1012
      %1324 = vmatprep.subr.bf16.mxu0 0
      %1325 = vmatpush2.bf16.msra.mxu0 %v1027
      %1326 = vmatprep.subr.bf16.mxu0 0
      %1327 = vmatpush2.bf16.msra.mxu0 %v1026
      %1328 = vmatprep.subr.bf16.mxu0 0
      %1329 = vmatpush2.bf16.msra.mxu0 %v1025
      %1330 = vmatprep.subr.bf16.mxu0 0
      %1331 = vmatpush2.bf16.msra.mxu0 %v1024
      %1332 = vmatprep.subr.bf16.mxu0 0
      %1333 = vmatpush2.bf16.msra.mxu0 %v1023
      %1334 = vmatprep.subr.bf16.mxu0 0
      %1335 = vmatpush2.bf16.msra.mxu0 %v1022
      %1336 = vmatprep.subr.bf16.mxu0 0
      %1337 = vmatpush2.bf16.msra.mxu0 %v1021
      %1338 = vmatprep.subr.bf16.mxu0 0
      %1339 = vmatpush2.bf16.msra.mxu0 %v1020
      %1340 = vmatprep.mubr.bf16.mxu0 %v454
      %1341 = vmatmul.mubr.bf16.gmra.mxu0 %v452
      %v1342 = vpop.f32.mrf.mxu0
      %v1343 = vadd.f32 %v1303, %v1342
      %v1344 = vpop.f32.mrf.mxu0
      %v1345 = vpop.f32.mrf.mxu0
      %v1346 = vpop.f32.mrf.mxu0
      %1347 = vdwg.mxu0
      %1348 = vmatprep.subr.bf16.mxu0 0
      %1349 = vmatpush1.bf16.msra.mxu0 %v1035
      %1350 = vmatprep.subr.bf16.mxu0 0
      %1351 = vmatpush1.bf16.msra.mxu0 %v1034
      %1352 = vmatprep.subr.bf16.mxu0 0
      %1353 = vmatpush1.bf16.msra.mxu0 %v1033
      %1354 = vmatprep.subr.bf16.mxu0 0
      %1355 = vmatpush1.bf16.msra.mxu0 %v1032
      %1356 = vmatprep.subr.bf16.mxu0 0
      %1357 = vmatpush1.bf16.msra.mxu0 %v1031
      %1358 = vmatprep.subr.bf16.mxu0 0
      %1359 = vmatpush1.bf16.msra.mxu0 %v1030
      %1360 = vmatprep.subr.bf16.mxu0 0
      %1361 = vmatpush1.bf16.msra.mxu0 %v1029
      %1362 = vmatprep.subr.bf16.mxu0 0
      %1363 = vmatpush1.bf16.msra.mxu0 %v1028
      %1364 = vmatprep.subr.bf16.mxu0 0
      %1365 = vmatpush2.bf16.msra.mxu0 %v1043
      %1366 = vmatprep.subr.bf16.mxu0 0
      %1367 = vmatpush2.bf16.msra.mxu0 %v1042
      %1368 = vmatprep.subr.bf16.mxu0 0
      %1369 = vmatpush2.bf16.msra.mxu0 %v1041
      %1370 = vmatprep.subr.bf16.mxu0 0
      %1371 = vmatpush2.bf16.msra.mxu0 %v1040
      %1372 = vmatprep.subr.bf16.mxu0 0
      %1373 = vmatpush2.bf16.msra.mxu0 %v1039
      %1374 = vmatprep.subr.bf16.mxu0 0
      %1375 = vmatpush2.bf16.msra.mxu0 %v1038
      %1376 = vmatprep.subr.bf16.mxu0 0
      %1377 = vmatpush2.bf16.msra.mxu0 %v1037
      %1378 = vmatprep.subr.bf16.mxu0 0
      %1379 = vmatpush2.bf16.msra.mxu0 %v1036
      %1380 = vmatprep.mubr.bf16.mxu0 %v492
      %1381 = vmatmul.mubr.bf16.gmra.mxu0 %v478
      %v1382 = vpop.f32.mrf.mxu0
      %v1383 = vadd.f32 %v1343, %v1382
      %v1384 = vpop.f32.mrf.mxu0
      %v1385 = vpop.f32.mrf.mxu0
      %v1386 = vpop.f32.mrf.mxu0
      %1387 = vdwg.mxu0
      %1388 = vmatprep.subr.bf16.mxu0 0
      %1389 = vmatpush1.bf16.msra.mxu0 %v1051
      %1390 = vmatprep.subr.bf16.mxu0 0
      %1391 = vmatpush1.bf16.msra.mxu0 %v1050
      %1392 = vmatprep.subr.bf16.mxu0 0
      %1393 = vmatpush1.bf16.msra.mxu0 %v1049
      %1394 = vmatprep.subr.bf16.mxu0 0
      %1395 = vmatpush1.bf16.msra.mxu0 %v1048
      %1396 = vmatprep.subr.bf16.mxu0 0
      %1397 = vmatpush1.bf16.msra.mxu0 %v1047
      %1398 = vmatprep.subr.bf16.mxu0 0
      %1399 = vmatpush1.bf16.msra.mxu0 %v1046
      %1400 = vmatprep.subr.bf16.mxu0 0
      %1401 = vmatpush1.bf16.msra.mxu0 %v1045
      %1402 = vmatprep.subr.bf16.mxu0 0
      %1403 = vmatpush1.bf16.msra.mxu0 %v1044
      %1404 = vmatprep.subr.bf16.mxu0 0
      %1405 = vmatpush2.bf16.msra.mxu0 %v1059
      %1406 = vmatprep.subr.bf16.mxu0 0
      %1407 = vmatpush2.bf16.msra.mxu0 %v1058
      %1408 = vmatprep.subr.bf16.mxu0 0
      %1409 = vmatpush2.bf16.msra.mxu0 %v1057
      %1410 = vmatprep.subr.bf16.mxu0 0
      %1411 = vmatpush2.bf16.msra.mxu0 %v1056
      %1412 = vmatprep.subr.bf16.mxu0 0
      %1413 = vmatpush2.bf16.msra.mxu0 %v1055
      %1414 = vmatprep.subr.bf16.mxu0 0
      %1415 = vmatpush2.bf16.msra.mxu0 %v1054
      %1416 = vmatprep.subr.bf16.mxu0 0
      %1417 = vmatpush2.bf16.msra.mxu0 %v1053
      %1418 = vmatprep.subr.bf16.mxu0 0
      %1419 = vmatpush2.bf16.msra.mxu0 %v1052
      %1420 = vmatprep.mubr.bf16.mxu0 %v501
      %1421 = vmatmul.mubr.bf16.gmra.mxu0 %v500
      %v1422 = vpop.f32.mrf.mxu0
      %v1423 = vadd.f32 %v1383, %v1422
      %v1424 = vpop.f32.mrf.mxu0
      %v1425 = vpop.f32.mrf.mxu0
      %v1426 = vpop.f32.mrf.mxu0
      %1427 = vdwg.mxu0
      %1428 = vmatprep.subr.bf16.mxu0 0
      %1429 = vmatpush1.bf16.msra.mxu0 %v1067
      %1430 = vmatprep.subr.bf16.mxu0 0
      %1431 = vmatpush1.bf16.msra.mxu0 %v1066
      %1432 = vmatprep.subr.bf16.mxu0 0
      %1433 = vmatpush1.bf16.msra.mxu0 %v1065
      %1434 = vmatprep.subr.bf16.mxu0 0
      %1435 = vmatpush1.bf16.msra.mxu0 %v1064
      %1436 = vmatprep.subr.bf16.mxu0 0
      %1437 = vmatpush1.bf16.msra.mxu0 %v1063
      %1438 = vmatprep.subr.bf16.mxu0 0
      %1439 = vmatpush1.bf16.msra.mxu0 %v1062
      %1440 = vmatprep.subr.bf16.mxu0 0
      %1441 = vmatpush1.bf16.msra.mxu0 %v1061
      %1442 = vmatprep.subr.bf16.mxu0 0
      %1443 = vmatpush1.bf16.msra.mxu0 %v1060
      %1444 = vmatprep.subr.bf16.mxu0 0
      %1445 = vmatpush2.bf16.msra.mxu0 %v1075
      %1446 = vmatprep.subr.bf16.mxu0 0
      %1447 = vmatpush2.bf16.msra.mxu0 %v1074
      %1448 = vmatprep.subr.bf16.mxu0 0
      %1449 = vmatpush2.bf16.msra.mxu0 %v1073
      %1450 = vmatprep.subr.bf16.mxu0 0
      %1451 = vmatpush2.bf16.msra.mxu0 %v1072
      %1452 = vmatprep.subr.bf16.mxu0 0
      %1453 = vmatpush2.bf16.msra.mxu0 %v1071
      %1454 = vmatprep.subr.bf16.mxu0 0
      %1455 = vmatpush2.bf16.msra.mxu0 %v1070
      %1456 = vmatprep.subr.bf16.mxu0 0
      %1457 = vmatpush2.bf16.msra.mxu0 %v1069
      %1458 = vmatprep.subr.bf16.mxu0 0
      %1459 = vmatpush2.bf16.msra.mxu0 %v1068
      %1460 = vmatprep.mubr.bf16.mxu0 %v499
      %1461 = vmatmul.mubr.bf16.gmra.mxu0 %v485
      %v1462 = vpop.f32.mrf.mxu0
      %v1463 = vadd.f32 %v1423, %v1462
      %v1464 = vpop.f32.mrf.mxu0
      %v1465 = vpop.f32.mrf.mxu0
      %v1466 = vpop.f32.mrf.mxu0
      %1467 = vdwg.mxu0
      %p1468 = scmp.eq.s32.totalorder %s14, 0
      // Predicated region
      $region33: #{simple_cnn_forward.6} parent=31 // pred_check
        %p1469 = pneg %p1468
      $region34: #{simple_cnn_forward.6} parent=31 // pred_check_branch
        %1471 = sbr.rel (%p1469) target = $region36
      $region35: #{simple_cnn_forward.6} parent=31 // pred_region
        %1472 = vst [vmem:[%s3] sm:$0x3] 0.0
      $region36: #{simple_cnn_forward.6} parent=31 // pred_fallthru
        _
      %v1473 = vld [vmem:[%s3] sm:$0x3]
      %v1474 = vadd.f32 %v1473, %v1463
      %1475 = vst [vmem:[%s3] sm:$0x3] %v1474
      %p1476 = scmp.eq.s32.totalorder %s14, 6
      // Predicated region
      $region37: #{simple_cnn_forward.6} parent=31 // pred_check
        %p1477 = pneg %p1476
      $region38: #{simple_cnn_forward.6} parent=31 // pred_check_branch
        %1479 = sbr.rel (%p1477) target = $region40
      $region39: #{simple_cnn_forward.6} parent=31 // pred_region
        %v1480 = vld [vmem:[%s3] sm:$0x3]
        %v1481 = vld [vmem:[%s2] sm:$0x1]
        %v1483 = vlaneseq
        %v1484 = vshrl.u32 %v1483, 7
        %v1485 = vsub.s32 0, %v1484
        %v1486 = vrot.slane %v1481, %v1485
        %v1488 = vadd.f32 %v1480, %v1486
        %v1489 = vmax.f32 %v1488, 0.0
        %1490 = vst [vmem:[%s3] sm:$0x3] %v1489
      $region40: #{simple_cnn_forward.6} parent=31 // pred_fallthru
        _
      // Predicated region
      $region41: #{simple_cnn_forward.6} parent=31 // pred_check
        %p1491 = pneg %p100
      $region42: #{simple_cnn_forward.6} parent=31 // pred_check_branch
        %1493 = sbr.rel (%p1491) target = $region44
      $region43: #{simple_cnn_forward.6} parent=31 // pred_region
        _
      $region44: #{simple_cnn_forward.6} parent=31 // pred_fallthru
        _
      // Predicated region
      $region45: #{simple_cnn_forward.6} parent=31 // pred_check
        %p1494 = pneg %p100
      $region46: #{simple_cnn_forward.6} parent=31 // pred_check_branch
        %1496 = sbr.rel (%p1494) target = $region48
      $region47: #{simple_cnn_forward.6} parent=31 // pred_region
        _
      $region48: #{simple_cnn_forward.6} parent=31 // pred_fallthru
        _
    $region32: #{simple_cnn_forward.6} parent=5 // pred_fallthru
      _
    %p1497 = scmp.le.s32.totalorder 2, %s9
    // Predicated region
    $region49: #{simple_cnn_forward.6} parent=5 // pred_check
      %p1498 = pneg %p1497
    $region50: #{simple_cnn_forward.6} parent=5 // pred_check_branch
      %1500 = sbr.rel (%p1498) target = $region52
    $region51: #{simple_cnn_forward.6} parent=5 // pred_region
      %s1501 = ssub.s32 %s9, 2
    $region52: #{simple_cnn_forward.6} parent=5 // pred_fallthru
      _
  $region6: #{simple_cnn_forward.6} parent=0 // loop_footer
    %s13 = sadd.s32 1, %s9
  $region7: #{simple_cnn_forward.6} parent=0 // loop_footer_branch
    %8 = sbr.rel target = $region3
  $region8: #{simple_cnn_forward.6} parent=0 // loop_exit
    _

// kernel: simple_cnn_forward.7
$region0: #{simple_cnn_forward.7}
  #allocation0 [shape = 'u32[]', space=smem, size = 0x4, offset = 0x4, fixed_abs, tag = 'smem constant byte address 0x4 - core index']
  #allocation1 [shape = 'u32[144,128]{1,0:T(1,128)}', space=vmem, size = 0x12000, scoped, tag = 'internal scratch']
  %s0 = inlined_call_operand.vmem [shape: f32[2,128], index: 0, kind: input, shape index: {}]
  %s1 = inlined_call_operand.vmem [shape: f32[128,10], index: 1, kind: input, shape index: {}]
  %s2 = inlined_call_operand.vmem [shape: f32[1,10], index: 2, kind: input, shape index: {}]
  %s3 = inlined_call_operand.hbm [shape: f32[2,10], index: 3, kind: output, shape index: {}]
  %s4 = sld [smem:[#allocation0]]
  $region22: #{simple_cnn_forward.7} parent=0
    _
  %s6 = ssub.s32 1, %s4
  %s7 = scalar_select 0, %s6, %s4
  $region1: #{simple_cnn_forward.7} parent=0
    #allocation2 [shape = 'u8[1024]{0}', space=vmem, size = 0x400, scoped, tag = 'output window, operand 0, single buffered']
    #allocation3 [shape = 's32[1]{0}', space=sflag, size = 0x4, scoped, tag = 'scoped memory for simple_cnn_forward.7']
    %8 = vsyncpa [#allocation3], 0
    // Predicated region
    $region2: #{simple_cnn_forward.7} parent=1 // pred_check
      _
    $region3: #{simple_cnn_forward.7} parent=1 // pred_check_branch
      %10 = sbr.rel (0) target = $region5
    $region4: #{simple_cnn_forward.7} parent=1 // pred_region
      _
    $region5: #{simple_cnn_forward.7} parent=1 // pred_fallthru
      _
    // Predicated region
    $region6: #{simple_cnn_forward.7} parent=1 // pred_check
      _
    $region7: #{simple_cnn_forward.7} parent=1 // pred_check_branch
      %12 = sbr.rel (0) target = $region9
    $region8: #{simple_cnn_forward.7} parent=1 // pred_region
      _
    $region9: #{simple_cnn_forward.7} parent=1 // pred_fallthru
      _
    // Predicated region
    $region10: #{simple_cnn_forward.7} parent=1 // pred_check
      _
    $region11: #{simple_cnn_forward.7} parent=1 // pred_check_branch
      %14 = sbr.rel (0) target = $region13
    $region12: #{simple_cnn_forward.7} parent=1 // pred_region
      _
    $region13: #{simple_cnn_forward.7} parent=1 // pred_fallthru
      _
    %v15 = vld [vmem:[%s0] sm:$0x3]
    %v16 = vld [vmem:[%s1] sm:$0xff]
    %v17 = vld [vmem:[%s1 + $0x8] sm:$0xff]
    %v18 = vld [vmem:[%s1 + $0x10] sm:$0xff]
    %v19 = vld [vmem:[%s1 + $0x18] sm:$0xff]
    %v20 = vld [vmem:[%s1 + $0x20] sm:$0xff]
    %v21 = vld [vmem:[%s1 + $0x28] sm:$0xff]
    %v22 = vld [vmem:[%s1 + $0x30] sm:$0xff]
    %v23 = vld [vmem:[%s1 + $0x38] sm:$0xff]
    %v24 = vld [vmem:[%s1 + $0x40] sm:$0xff]
    %v25 = vld [vmem:[%s1 + $0x48] sm:$0xff]
    %v26 = vld [vmem:[%s1 + $0x50] sm:$0xff]
    %v27 = vld [vmem:[%s1 + $0x58] sm:$0xff]
    %v28 = vld [vmem:[%s1 + $0x60] sm:$0xff]
    %v29 = vld [vmem:[%s1 + $0x68] sm:$0xff]
    %v30 = vld [vmem:[%s1 + $0x70] sm:$0xff]
    %v31 = vld [vmem:[%s1 + $0x78] sm:$0xff]
    %v32 = vld [vmem:[%s2] sm:$0x1]
    %v34 = vlaneseq
    %v35 = vshrl.u32 %v34, 7
    %v36 = vsub.s32 0, %v35
    %v37 = vrot.slane %v32, %v36
    %39 = vmatprep.subr.mxu0 0.0
    %40 = vmatpush1.msra.mxu0 %v31
    %41 = vmatprep.subr.mxu0 0.0
    %42 = vmatpush1.msra.mxu0 %v30
    %43 = vmatprep.subr.mxu0 0.0
    %44 = vmatpush1.msra.mxu0 %v29
    %45 = vmatprep.subr.mxu0 0.0
    %46 = vmatpush1.msra.mxu0 %v28
    %47 = vmatprep.subr.mxu0 0.0
    %48 = vmatpush1.msra.mxu0 %v27
    %49 = vmatprep.subr.mxu0 0.0
    %50 = vmatpush1.msra.mxu0 %v26
    %51 = vmatprep.subr.mxu0 0.0
    %52 = vmatpush1.msra.mxu0 %v25
    %53 = vmatprep.subr.mxu0 0.0
    %54 = vmatpush1.msra.mxu0 %v24
    %55 = vmatprep.subr.mxu0 0.0
    %56 = vmatpush1.msra.mxu0 %v23
    %57 = vmatprep.subr.mxu0 0.0
    %58 = vmatpush1.msra.mxu0 %v22
    %59 = vmatprep.subr.mxu0 0.0
    %60 = vmatpush1.msra.mxu0 %v21
    %61 = vmatprep.subr.mxu0 0.0
    %62 = vmatpush1.msra.mxu0 %v20
    %63 = vmatprep.subr.mxu0 0.0
    %64 = vmatpush1.msra.mxu0 %v19
    %65 = vmatprep.subr.mxu0 0.0
    %66 = vmatpush1.msra.mxu0 %v18
    %67 = vmatprep.subr.mxu0 0.0
    %68 = vmatpush1.msra.mxu0 %v17
    %69 = vmatprep.subr.mxu0 0.0
    %70 = vmatpush1.msra.mxu0 %v16
    %71 = vmatprep.subr.mxu0 0.0
    %72 = vmatpush2.msra.mxu0 0.0
    %73 = vmatprep.subr.mxu0 0.0
    %74 = vmatpush2.msra.mxu0 0.0
    %75 = vmatprep.subr.mxu0 0.0
    %76 = vmatpush2.msra.mxu0 0.0
    %77 = vmatprep.subr.mxu0 0.0
    %78 = vmatpush2.msra.mxu0 0.0
    %79 = vmatprep.subr.mxu0 0.0
    %80 = vmatpush2.msra.mxu0 0.0
    %81 = vmatprep.subr.mxu0 0.0
    %82 = vmatpush2.msra.mxu0 0.0
    %83 = vmatprep.subr.mxu0 0.0
    %84 = vmatpush2.msra.mxu0 0.0
    %85 = vmatprep.subr.mxu0 0.0
    %86 = vmatpush2.msra.mxu0 0.0
    %87 = vmatprep.subr.mxu0 0.0
    %88 = vmatpush2.msra.mxu0 0.0
    %89 = vmatprep.subr.mxu0 0.0
    %90 = vmatpush2.msra.mxu0 0.0
    %91 = vmatprep.subr.mxu0 0.0
    %92 = vmatpush2.msra.mxu0 0.0
    %93 = vmatprep.subr.mxu0 0.0
    %94 = vmatpush2.msra.mxu0 0.0
    %95 = vmatprep.subr.mxu0 0.0
    %96 = vmatpush2.msra.mxu0 0.0
    %97 = vmatprep.subr.mxu0 0.0
    %98 = vmatpush2.msra.mxu0 0.0
    %99 = vmatprep.subr.mxu0 0.0
    %100 = vmatpush2.msra.mxu0 0.0
    %101 = vmatprep.subr.mxu0 0.0
    %102 = vmatpush2.msra.mxu0 0.0
    %103 = vmatprep.mubr.f32.mxu0 0.0
    %104 = vmatmul.mubr.f32.gmra.mxu0 %v15
    %v105 = vpop.f32.mrf.mxu0
    %v106 = vadd.f32 %v37, %v105
    %v107 = vpop.f32.mrf.mxu0
    %108 = vdwg.mxu0
    %vm109 = vcmask 74752
    %110 = vst.msk [vmem:[#allocation2] sm:$0x3] %vm109, %v106
    // Predicated region
    $region14: #{simple_cnn_forward.7} parent=1 // pred_check
      _
    $region15: #{simple_cnn_forward.7} parent=1 // pred_check_branch
      %112 = sbr.rel (0) target = $region17
    $region16: #{simple_cnn_forward.7} parent=1 // pred_region
      %s114 = ssub.s32 32, 32
      %115 = vsyncadd [#allocation3], %s114
      %s117 = sshll.u32 [#allocation2], 4
      %s118 = int_to_ptr.vmem [resolvable:$true] %s117
      %120 = dma.vmem_to_hbm [thread:$0]  %s118, 32, %s3, [#allocation3]
    $region17: #{simple_cnn_forward.7} parent=1 // pred_fallthru
      _
    // Predicated region
    $region18: #{simple_cnn_forward.7} parent=1 // pred_check
      _
    $region19: #{simple_cnn_forward.7} parent=1 // pred_check_branch
      %122 = sbr.rel (0) target = $region21
    $region20: #{simple_cnn_forward.7} parent=1 // pred_region
      %123 = dma.done [#allocation3], 32
    $region21: #{simple_cnn_forward.7} parent=1 // pred_fallthru
      _
    %124 = vsyncpa [#allocation3], 1

</llo_original>
